<compile_context>
chip_gen: v6e
topology: v6e:2x2x1
jax: 0.10.0
libtpu: 0.0.40
codegen_flags: <defaults>
</compile_context>

<pallas_src>
import functools

import jax
import jax.numpy as jnp
from jax.experimental import pallas as pl
from jax.experimental.pallas import tpu as pltpu


# ------------------------------ fused kernel --------------------------------

def _lenet5_kernel(lhs1_ref, m1_ref, b1_ref, m2_ref, b2_ref,
                   wfc1_ref, bfc1_ref, wfc2_ref, bfc2_ref, wfc3_ref, bfc3_ref,
                   out_ref, act_ref, feat_ref, *, batch):
    """Whole LeNet-5 forward, entirely VMEM / vreg resident.

    lhs1_ref : (B*14, 6*C*W)  conv1 lhs (row-im2col over the 6 rows covering a
                              pool row pair), built once in glue.
    m1_ref   : (6*C*W, 512)   conv1 Toeplitz+pool weights, N = 4 parities x 128
    m2_ref   : (6, 128, 512)  conv2 Toeplitz+pool weights per row offset r
    b*_ref   : bias rows, zero-padded to the lane-aligned widths
    wfc1_ref : (5, 128, 120)  fc1 weights split by pooled row (input-permuted)
    act_ref  : (B*14, 128)    scratch: pool1 output (rows = (b, row))
    feat_ref : (B*5, 128)     scratch: pool2 output (rows = (b, row))
    """
    B = batch
    npad = act_ref.shape[1]             # 128 (lane-aligned feature width)
    P1 = act_ref.shape[0] // B          # 14 pooled rows after conv1/pool1
    P2 = feat_ref.shape[0] // B         # 5  pooled rows after conv2/pool2
    R = m2_ref.shape[0]                 # 6 row offsets (pool row parity + kh)

    def mm(a, b):
        # f32 MXU path; cast to bf16 here only for large, MXU-bound batches.
        return jnp.dot(a, b, preferred_element_type=jnp.float32)

    def pool_max4(z):
        # max over the 4 lane-aligned parity blocks of a 2x2 pool window
        a = jnp.maximum(z[:, 0 * npad:1 * npad], z[:, 1 * npad:2 * npad])
        b = jnp.maximum(z[:, 2 * npad:3 * npad], z[:, 3 * npad:4 * npad])
        return jnp.maximum(a, b)

    # ---- conv1 + tanh + pool1: ONE matmul, then one bulk store -------------
    z1 = mm(lhs1_ref[...], m1_ref[...])                      # (B*14, 512)
    act_ref[...] = jnp.tanh(pool_max4(z1) + b1_ref[...])     # (B*14, 128)

    # ---- conv2 + tanh + pool2: 6 accumulated matmuls ------------------------
    # lhs rows for row offset r: pool1 rows r, r+2, ..., r+8 of each sample
    # (stride-2 pl.ds reads replace the old per-row parity scatter).
    acc2 = jnp.zeros((B * P2, 4 * npad), jnp.float32)
    for r in range(R):
        lhs = jnp.concatenate(
            [act_ref[pl.ds(b * P1 + r, P2, stride=2), :] for b in range(B)],
            axis=0)                                          # (B*5, 128)
        acc2 = acc2 + mm(lhs, m2_ref[r])                     # (B*5, 512)
    feat_ref[...] = jnp.tanh(pool_max4(acc2) + b2_ref[...])  # (B*5, 128)

    # ---- classifier: fc1 (accumulate over pooled rows) -> fc2 -> fc3 --------
    acc = jnp.zeros((B, wfc1_ref.shape[2]), jnp.float32)
    for h in range(P2):
        acc = acc + mm(feat_ref[pl.ds(h, B, stride=P2), :], wfc1_ref[h])
    h1 = jnp.tanh(acc + bfc1_ref[...])
    h2 = jnp.tanh(mm(h1, wfc2_ref[...]) + bfc2_ref[...])
    out_ref[...] = mm(h2, wfc3_ref[...]) + bfc3_ref[...]


# ------------------------------ weight prep (glue) ---------------------------

def _toeplitz_pool_blocks(w, in_w, pooled_w):
    """Lowered-conv weights fused with a full 2x2 max-pool window.

    Returns (6, ic*in_w, 4, oc*pooled_w) where
      out[r, ic*in_w + xw, 2*p + q, oc*pooled_w + pw]
        = w[oc, ic, r - p, xw - 2*pw - q]   (0 where the kernel index is OOB)
    so that, for pooled output row ph, contracting input rows 2*ph + r
    (r = 0..5) against these blocks yields conv[oc, 2*ph+p, 2*pw+q] in the
    (p, q) parity block of the output lanes."""
    oc, ic, KH, KW = w.shape
    r = jnp.arange(KH + 1)[:, None, None, None, None]
    xw = jnp.arange(in_w)[None, :, None, None, None]
    p = jnp.arange(2)[None, None, :, None, None]
    q = jnp.arange(2)[None, None, None, :, None]
    pw = jnp.arange(pooled_w)[None, None, None, None, :]
    kh = r - p
    kw = xw - 2 * pw - q
    valid = (kh >= 0) & (kh < KH) & (kw >= 0) & (kw < KW)
    g = w[:, :, jnp.clip(kh, 0, KH - 1), jnp.clip(kw, 0, KW - 1)]
    g = g * valid[None, None].astype(w.dtype)        # (oc, ic, 6, in_w, 2, 2, pw)
    g = g.transpose(2, 1, 3, 4, 5, 0, 6)              # (r, ic, xw, p, q, oc, pw)
    return g.reshape(KH + 1, ic * in_w, 4, oc * pooled_w)


def lenet5_forward(x, params):
    """LeNet-5 forward (matches PyTorchLeNet5) via one fused Pallas kernel.

    x: (B, C, 32, 32) float32 NCHW -> (B, num_classes) float32."""
    B, C, H, W = x.shape
    assert (H, W) == (32, 32) and C == params["conv1_w"].shape[1], \
        "PyTorchLeNet5 requires 32x32 inputs with matching channel count"
    KH = params["conv1_w"].shape[2]         # 5
    R = KH + 1                              # 6 row offsets per pool row pair
    PW1 = (W - KH + 1) // 2                 # 14
    PW2 = (PW1 - KH + 1) // 2               # 5
    OC1 = params["conv1_w"].shape[0]        # 6
    OC2 = params["conv2_w"].shape[0]        # 16
    num_classes = params["fc3_b"].shape[0]
    NPAD = 128                              # lane-aligned feature width
    f32 = jnp.float32

    x = x.astype(f32)

    # conv1 lhs: row (b, ph) holds input rows 2*ph .. 2*ph+5 (channel-major).
    rows = 2 * jnp.arange(PW1)[:, None] + jnp.arange(R)[None, :]      # (14, 6)
    lhs1 = x[:, :, rows, :]                                           # (B,C,14,6,W)
    lhs1 = lhs1.transpose(0, 2, 3, 1, 4).reshape(B * PW1, R * C * W)  # (B*14, 576)

    # Toeplitz+pool weight blocks, zero-padded to lane-aligned 128 boundaries.
    t1 = _toeplitz_pool_blocks(params["conv1_w"], in_w=W, pooled_w=PW1)
    m1 = jnp.pad(t1, ((0, 0), (0, 0), (0, 0), (0, NPAD - OC1 * PW1)))
    m1 = m1.reshape(R * C * W, 4 * NPAD)                              # (576, 512)

    t2 = _toeplitz_pool_blocks(params["conv2_w"], in_w=PW1, pooled_w=PW2)
    m2 = jnp.pad(t2, ((0, 0), (0, NPAD - OC1 * PW1), (0, 0), (0, NPAD - OC2 * PW2)))
    m2 = m2.reshape(R, NPAD, 4 * NPAD)                                # (6, 128, 512)

    b1 = jnp.zeros((1, NPAD), f32).at[0, :OC1 * PW1].set(
        jnp.repeat(params["conv1_b"].astype(f32), PW1))
    b2 = jnp.zeros((1, NPAD), f32).at[0, :OC2 * PW2].set(
        jnp.repeat(params["conv2_b"].astype(f32), PW2))

    # torch.flatten order is (C=16, H=5, W=5); kernel feature layout per pooled
    # row h is (oc*5 + w) -> split fc1's input dim by h and permute/pad.
    wf1 = params["fc1_w"].reshape(120, OC2, PW2, PW2).transpose(2, 1, 3, 0)
    wf1 = jnp.pad(wf1.reshape(PW2, OC2 * PW2, 120),
                  ((0, 0), (0, NPAD - OC2 * PW2), (0, 0)))            # (5, 128, 120)
    bf1 = params["fc1_b"].reshape(1, -1)
    wf2 = params["fc2_w"].T
    bf2 = params["fc2_b"].reshape(1, -1)
    wf3 = params["fc3_w"].T
    bf3 = params["fc3_b"].reshape(1, -1)

    kernel = functools.partial(_lenet5_kernel, batch=B)
    vmem = pl.BlockSpec(memory_space=pltpu.MemorySpace.VMEM)
    # NOTE(v7x): at large batch, add a batch grid axis with
    # dimension_semantics=("parallel",) (and re-size per-step blocks against
    # the 32 MiB scoped VMEM limit) to engage the second TensorCore.
    return pl.pallas_call(
        kernel,
        out_shape=jax.ShapeDtypeStruct((B, num_classes), f32),
        in_specs=[vmem] * 11,
        out_specs=vmem,
        scratch_shapes=[
            pltpu.VMEM((B * PW1, NPAD), f32),   # pool1 output
            pltpu.VMEM((B * PW2, NPAD), f32),   # pool2 output (features)
        ],
    )(lhs1, m1, b1, m2, b2, wf1, bf1, wf2, bf2, wf3, bf3)


# ------------------------------ reference & init -----------------------------

def init_params(key, num_classes=10, in_channels=3):
    shapes = {
        "conv1_w": (6, in_channels, 5, 5), "conv1_b": (6,),
        "conv2_w": (16, 6, 5, 5),          "conv2_b": (16,),
        "fc1_w": (120, 16 * 5 * 5),        "fc1_b": (120,),
        "fc2_w": (84, 120),                "fc2_b": (84,),
        "fc3_w": (num_classes, 84),        "fc3_b": (num_classes,),
    }
    params = {}
    keys = jax.random.split(key, len(shapes))
    for k_rng, (name, shp) in zip(keys, sorted(shapes.items())):
        params[name] = (0.1 * jax.random.normal(k_rng, shp)).astype(jnp.float32)
    return params


def lenet5_reference(x, params):
    """Pure-JAX (non-Pallas) reference of the PyTorch module, f32 precision."""
    hi = jax.lax.Precision.HIGHEST
    dn = ("NCHW", "OIHW", "NCHW")

    def conv_tanh_pool(y, w, b):
        y = jax.lax.conv_general_dilated(y, w, (1, 1), "VALID",
                                         dimension_numbers=dn, precision=hi)
        y = jnp.tanh(y + b[None, :, None, None])
        n, c, h, ww = y.shape
        return y.reshape(n, c, h // 2, 2, ww // 2, 2).max(axis=(3, 5))

    y = conv_tanh_pool(x, params["conv1_w"], params["conv1_b"])
    y = conv_tanh_pool(y, params["conv2_w"], params["conv2_b"])
    f = y.reshape(y.shape[0], -1)
    h = jnp.tanh(jnp.dot(f, params["fc1_w"].T, precision=hi) + params["fc1_b"])
    h = jnp.tanh(jnp.dot(h, params["fc2_w"].T, precision=hi) + params["fc2_b"])
    return jnp.dot(h, params["fc3_w"].T, precision=hi) + params["fc3_b"]


if __name__ == "__main__":
    num_classes = 10
    key = jax.random.PRNGKey(0)
    k_x, k_p = jax.random.split(key)
    # grayscale=False -> 3 input channels; 32x32 so the classifier sees 16*5*5.
    x = jax.random.normal(k_x, (2, 3, 32, 32), dtype=jnp.float32)
    params = init_params(k_p, num_classes=num_classes, in_channels=3)

    logits = jax.block_until_ready(jax.jit(lenet5_forward)(x, params))
    assert logits.shape == (2, num_classes)

    ref = jax.block_until_ready(lenet5_reference(x, params))
    assert jnp.allclose(logits, ref, rtol=2e-3, atol=2e-3), \
        f"max abs err {float(jnp.max(jnp.abs(logits - ref)))}"
    print("KERNEL_OK")
</pallas_src>

<mosaic_0001>
module attributes {stable_mosaic.version = 11 : i64} {
  func.func @_lenet5_kernel(%arg0: memref<28x576xf32, #tpu.memory_space<vmem>>, %arg1: memref<576x512xf32, #tpu.memory_space<vmem>>, %arg2: memref<1x128xf32, #tpu.memory_space<vmem>>, %arg3: memref<6x128x512xf32, #tpu.memory_space<vmem>>, %arg4: memref<1x128xf32, #tpu.memory_space<vmem>>, %arg5: memref<5x128x120xf32, #tpu.memory_space<vmem>>, %arg6: memref<1x120xf32, #tpu.memory_space<vmem>>, %arg7: memref<120x84xf32, #tpu.memory_space<vmem>>, %arg8: memref<1x84xf32, #tpu.memory_space<vmem>>, %arg9: memref<84x10xf32, #tpu.memory_space<vmem>>, %arg10: memref<1x10xf32, #tpu.memory_space<vmem>>, %arg11: memref<2x10xf32, #tpu.memory_space<vmem>>, %arg12: memref<28x128xf32, #tpu.memory_space<vmem>>, %arg13: memref<10x128xf32, #tpu.memory_space<vmem>>) attributes {dimension_semantics = [], scalar_prefetch = 0 : i64, scratch_operands = 2 : i64, tpu.core_type = #tpu.core_type<tc>} {
    %c0 = arith.constant 0 : index
    %c0_0 = arith.constant 0 : index
    %0 = vector.load %arg0[%c0, %c0_0] : memref<28x576xf32, #tpu.memory_space<vmem>>, vector<28x576xf32>
    %c0_1 = arith.constant 0 : index
    %c0_2 = arith.constant 0 : index
    %1 = vector.load %arg1[%c0_1, %c0_2] : memref<576x512xf32, #tpu.memory_space<vmem>>, vector<576x512xf32>
    %cst = arith.constant dense<0.000000e+00> : vector<28x512xf32>
    %2 = tpu.matmul %0, %1, %cst {dimension_numbers = #tpu.dot_dimension_numbers<[1], [0], [0], [1], [0, 0, 1, 1], [], []>} : vector<28x576xf32>, vector<576x512xf32>, vector<28x512xf32> -> vector<28x512xf32>
    %3 = vector.extract_strided_slice %2 {offsets = [0, 0], sizes = [28, 128], strides = [1, 1]} : vector<28x512xf32> to vector<28x128xf32>
    %4 = vector.extract_strided_slice %2 {offsets = [0, 128], sizes = [28, 128], strides = [1, 1]} : vector<28x512xf32> to vector<28x128xf32>
    %5 = arith.maximumf %3, %4 : vector<28x128xf32>
    %6 = vector.extract_strided_slice %2 {offsets = [0, 256], sizes = [28, 128], strides = [1, 1]} : vector<28x512xf32> to vector<28x128xf32>
    %7 = vector.extract_strided_slice %2 {offsets = [0, 384], sizes = [28, 128], strides = [1, 1]} : vector<28x512xf32> to vector<28x128xf32>
    %8 = arith.maximumf %6, %7 : vector<28x128xf32>
    %9 = arith.maximumf %5, %8 : vector<28x128xf32>
    %c0_3 = arith.constant 0 : index
    %c0_4 = arith.constant 0 : index
    %10 = vector.load %arg2[%c0_3, %c0_4] : memref<1x128xf32, #tpu.memory_space<vmem>>, vector<1x128xf32>
    %11 = vector.broadcast %10 : vector<1x128xf32> to vector<28x128xf32>
    %12 = arith.addf %9, %11 : vector<28x128xf32>
    %13 = math.tanh %12 : vector<28x128xf32>
    %c0_5 = arith.constant 0 : index
    %c0_6 = arith.constant 0 : index
    %14 = vector.load %arg12[%c0_5, %c0_6] : memref<28x128xf32, #tpu.memory_space<vmem>>, vector<28x128xf32>
    tpu.vector_store %arg12[%c0_5, %c0_6], %13 {strides = array<i32>} : memref<28x128xf32, #tpu.memory_space<vmem>>, vector<28x128xf32>,
    %cst_7 = arith.constant 0.000000e+00 : f32
    %15 = vector.broadcast %cst_7 : f32 to vector<10x512xf32>
    %c0_8 = arith.constant 0 : index
    %c0_9 = arith.constant 0 : index
    %16 = tpu.strided_load %arg12[%c0_8, %c0_9] {strides = array<i32: 2, 1>} : memref<28x128xf32, #tpu.memory_space<vmem>>, vector<5x128xf32>
    %c14 = arith.constant 14 : index
    %c0_10 = arith.constant 0 : index
    %17 = tpu.strided_load %arg12[%c14, %c0_10] {strides = array<i32: 2, 1>} : memref<28x128xf32, #tpu.memory_space<vmem>>, vector<5x128xf32>
    %18 = tpu.concatenate %16, %17 in 0 : vector<5x128xf32>, vector<5x128xf32> -> vector<10x128xf32>
    %c0_11 = arith.constant 0 : index
    %c0_12 = arith.constant 0 : index
    %c0_13 = arith.constant 0 : index
    %19 = vector.load %arg3[%c0_11, %c0_12, %c0_13] : memref<6x128x512xf32, #tpu.memory_space<vmem>>, vector<1x128x512xf32>
    %20 = vector.shape_cast %19 : vector<1x128x512xf32> to vector<128x512xf32>
    %cst_14 = arith.constant dense<0.000000e+00> : vector<10x512xf32>
    %21 = tpu.matmul %18, %20, %cst_14 {dimension_numbers = #tpu.dot_dimension_numbers<[1], [0], [0], [1], [0, 0, 1, 1], [], []>} : vector<10x128xf32>, vector<128x512xf32>, vector<10x512xf32> -> vector<10x512xf32>
    %22 = arith.addf %15, %21 : vector<10x512xf32>
    %c1 = arith.constant 1 : index
    %c0_15 = arith.constant 0 : index
    %23 = tpu.strided_load %arg12[%c1, %c0_15] {strides = array<i32: 2, 1>} : memref<28x128xf32, #tpu.memory_space<vmem>>, vector<5x128xf32>
    %c15 = arith.constant 15 : index
    %c0_16 = arith.constant 0 : index
    %24 = tpu.strided_load %arg12[%c15, %c0_16] {strides = array<i32: 2, 1>} : memref<28x128xf32, #tpu.memory_space<vmem>>, vector<5x128xf32>
    %25 = tpu.concatenate %23, %24 in 0 : vector<5x128xf32>, vector<5x128xf32> -> vector<10x128xf32>
    %c1_17 = arith.constant 1 : index
    %c0_18 = arith.constant 0 : index
    %c0_19 = arith.constant 0 : index
    %26 = vector.load %arg3[%c1_17, %c0_18, %c0_19] : memref<6x128x512xf32, #tpu.memory_space<vmem>>, vector<1x128x512xf32>
    %27 = vector.shape_cast %26 : vector<1x128x512xf32> to vector<128x512xf32>
    %cst_20 = arith.constant dense<0.000000e+00> : vector<10x512xf32>
    %28 = tpu.matmul %25, %27, %cst_20 {dimension_numbers = #tpu.dot_dimension_numbers<[1], [0], [0], [1], [0, 0, 1, 1], [], []>} : vector<10x128xf32>, vector<128x512xf32>, vector<10x512xf32> -> vector<10x512xf32>
    %29 = arith.addf %22, %28 : vector<10x512xf32>
    %c2 = arith.constant 2 : index
    %c0_21 = arith.constant 0 : index
    %30 = tpu.strided_load %arg12[%c2, %c0_21] {strides = array<i32: 2, 1>} : memref<28x128xf32, #tpu.memory_space<vmem>>, vector<5x128xf32>
    %c16 = arith.constant 16 : index
    %c0_22 = arith.constant 0 : index
    %31 = tpu.strided_load %arg12[%c16, %c0_22] {strides = array<i32: 2, 1>} : memref<28x128xf32, #tpu.memory_space<vmem>>, vector<5x128xf32>
    %32 = tpu.concatenate %30, %31 in 0 : vector<5x128xf32>, vector<5x128xf32> -> vector<10x128xf32>
    %c2_23 = arith.constant 2 : index
    %c0_24 = arith.constant 0 : index
    %c0_25 = arith.constant 0 : index
    %33 = vector.load %arg3[%c2_23, %c0_24, %c0_25] : memref<6x128x512xf32, #tpu.memory_space<vmem>>, vector<1x128x512xf32>
    %34 = vector.shape_cast %33 : vector<1x128x512xf32> to vector<128x512xf32>
    %cst_26 = arith.constant dense<0.000000e+00> : vector<10x512xf32>
    %35 = tpu.matmul %32, %34, %cst_26 {dimension_numbers = #tpu.dot_dimension_numbers<[1], [0], [0], [1], [0, 0, 1, 1], [], []>} : vector<10x128xf32>, vector<128x512xf32>, vector<10x512xf32> -> vector<10x512xf32>
    %36 = arith.addf %29, %35 : vector<10x512xf32>
    %c3 = arith.constant 3 : index
    %c0_27 = arith.constant 0 : index
    %37 = tpu.strided_load %arg12[%c3, %c0_27] {strides = array<i32: 2, 1>} : memref<28x128xf32, #tpu.memory_space<vmem>>, vector<5x128xf32>
    %c17 = arith.constant 17 : index
    %c0_28 = arith.constant 0 : index
    %38 = tpu.strided_load %arg12[%c17, %c0_28] {strides = array<i32: 2, 1>} : memref<28x128xf32, #tpu.memory_space<vmem>>, vector<5x128xf32>
    %39 = tpu.concatenate %37, %38 in 0 : vector<5x128xf32>, vector<5x128xf32> -> vector<10x128xf32>
    %c3_29 = arith.constant 3 : index
    %c0_30 = arith.constant 0 : index
    %c0_31 = arith.constant 0 : index
    %40 = vector.load %arg3[%c3_29, %c0_30, %c0_31] : memref<6x128x512xf32, #tpu.memory_space<vmem>>, vector<1x128x512xf32>
    %41 = vector.shape_cast %40 : vector<1x128x512xf32> to vector<128x512xf32>
    %cst_32 = arith.constant dense<0.000000e+00> : vector<10x512xf32>
    %42 = tpu.matmul %39, %41, %cst_32 {dimension_numbers = #tpu.dot_dimension_numbers<[1], [0], [0], [1], [0, 0, 1, 1], [], []>} : vector<10x128xf32>, vector<128x512xf32>, vector<10x512xf32> -> vector<10x512xf32>
    %43 = arith.addf %36, %42 : vector<10x512xf32>
    %c4 = arith.constant 4 : index
    %c0_33 = arith.constant 0 : index
    %44 = tpu.strided_load %arg12[%c4, %c0_33] {strides = array<i32: 2, 1>} : memref<28x128xf32, #tpu.memory_space<vmem>>, vector<5x128xf32>
    %c18 = arith.constant 18 : index
    %c0_34 = arith.constant 0 : index
    %45 = tpu.strided_load %arg12[%c18, %c0_34] {strides = array<i32: 2, 1>} : memref<28x128xf32, #tpu.memory_space<vmem>>, vector<5x128xf32>
    %46 = tpu.concatenate %44, %45 in 0 : vector<5x128xf32>, vector<5x128xf32> -> vector<10x128xf32>
    %c4_35 = arith.constant 4 : index
    %c0_36 = arith.constant 0 : index
    %c0_37 = arith.constant 0 : index
    %47 = vector.load %arg3[%c4_35, %c0_36, %c0_37] : memref<6x128x512xf32, #tpu.memory_space<vmem>>, vector<1x128x512xf32>
    %48 = vector.shape_cast %47 : vector<1x128x512xf32> to vector<128x512xf32>
    %cst_38 = arith.constant dense<0.000000e+00> : vector<10x512xf32>
    %49 = tpu.matmul %46, %48, %cst_38 {dimension_numbers = #tpu.dot_dimension_numbers<[1], [0], [0], [1], [0, 0, 1, 1], [], []>} : vector<10x128xf32>, vector<128x512xf32>, vector<10x512xf32> -> vector<10x512xf32>
    %50 = arith.addf %43, %49 : vector<10x512xf32>
    %c5 = arith.constant 5 : index
    %c0_39 = arith.constant 0 : index
    %51 = tpu.strided_load %arg12[%c5, %c0_39] {strides = array<i32: 2, 1>} : memref<28x128xf32, #tpu.memory_space<vmem>>, vector<5x128xf32>
    %c19 = arith.constant 19 : index
    %c0_40 = arith.constant 0 : index
    %52 = tpu.strided_load %arg12[%c19, %c0_40] {strides = array<i32: 2, 1>} : memref<28x128xf32, #tpu.memory_space<vmem>>, vector<5x128xf32>
    %53 = tpu.concatenate %51, %52 in 0 : vector<5x128xf32>, vector<5x128xf32> -> vector<10x128xf32>
    %c5_41 = arith.constant 5 : index
    %c0_42 = arith.constant 0 : index
    %c0_43 = arith.constant 0 : index
    %54 = vector.load %arg3[%c5_41, %c0_42, %c0_43] : memref<6x128x512xf32, #tpu.memory_space<vmem>>, vector<1x128x512xf32>
    %55 = vector.shape_cast %54 : vector<1x128x512xf32> to vector<128x512xf32>
    %cst_44 = arith.constant dense<0.000000e+00> : vector<10x512xf32>
    %56 = tpu.matmul %53, %55, %cst_44 {dimension_numbers = #tpu.dot_dimension_numbers<[1], [0], [0], [1], [0, 0, 1, 1], [], []>} : vector<10x128xf32>, vector<128x512xf32>, vector<10x512xf32> -> vector<10x512xf32>
    %57 = arith.addf %50, %56 : vector<10x512xf32>
    %58 = vector.extract_strided_slice %57 {offsets = [0, 0], sizes = [10, 128], strides = [1, 1]} : vector<10x512xf32> to vector<10x128xf32>
    %59 = vector.extract_strided_slice %57 {offsets = [0, 128], sizes = [10, 128], strides = [1, 1]} : vector<10x512xf32> to vector<10x128xf32>
    %60 = arith.maximumf %58, %59 : vector<10x128xf32>
    %61 = vector.extract_strided_slice %57 {offsets = [0, 256], sizes = [10, 128], strides = [1, 1]} : vector<10x512xf32> to vector<10x128xf32>
    %62 = vector.extract_strided_slice %57 {offsets = [0, 384], sizes = [10, 128], strides = [1, 1]} : vector<10x512xf32> to vector<10x128xf32>
    %63 = arith.maximumf %61, %62 : vector<10x128xf32>
    %64 = arith.maximumf %60, %63 : vector<10x128xf32>
    %c0_45 = arith.constant 0 : index
    %c0_46 = arith.constant 0 : index
    %65 = vector.load %arg4[%c0_45, %c0_46] : memref<1x128xf32, #tpu.memory_space<vmem>>, vector<1x128xf32>
    %66 = vector.broadcast %65 : vector<1x128xf32> to vector<10x128xf32>
    %67 = arith.addf %64, %66 : vector<10x128xf32>
    %68 = math.tanh %67 : vector<10x128xf32>
    %c0_47 = arith.constant 0 : index
    %c0_48 = arith.constant 0 : index
    %69 = vector.load %arg13[%c0_47, %c0_48] : memref<10x128xf32, #tpu.memory_space<vmem>>, vector<10x128xf32>
    tpu.vector_store %arg13[%c0_47, %c0_48], %68 {strides = array<i32>} : memref<10x128xf32, #tpu.memory_space<vmem>>, vector<10x128xf32>,
    %cst_49 = arith.constant 0.000000e+00 : f32
    %70 = vector.broadcast %cst_49 : f32 to vector<2x120xf32>
    %c0_50 = arith.constant 0 : index
    %c0_51 = arith.constant 0 : index
    %71 = tpu.strided_load %arg13[%c0_50, %c0_51] {strides = array<i32: 5, 1>} : memref<10x128xf32, #tpu.memory_space<vmem>>, vector<2x128xf32>
    %c0_52 = arith.constant 0 : index
    %c0_53 = arith.constant 0 : index
    %c0_54 = arith.constant 0 : index
    %72 = vector.load %arg5[%c0_52, %c0_53, %c0_54] : memref<5x128x120xf32, #tpu.memory_space<vmem>>, vector<1x128x120xf32>
    %73 = vector.shape_cast %72 : vector<1x128x120xf32> to vector<128x120xf32>
    %cst_55 = arith.constant dense<0.000000e+00> : vector<2x120xf32>
    %74 = tpu.matmul %71, %73, %cst_55 {dimension_numbers = #tpu.dot_dimension_numbers<[1], [0], [0], [1], [0, 0, 1, 1], [], []>} : vector<2x128xf32>, vector<128x120xf32>, vector<2x120xf32> -> vector<2x120xf32>
    %75 = arith.addf %70, %74 : vector<2x120xf32>
    %c1_56 = arith.constant 1 : index
    %c0_57 = arith.constant 0 : index
    %76 = tpu.strided_load %arg13[%c1_56, %c0_57] {strides = array<i32: 5, 1>} : memref<10x128xf32, #tpu.memory_space<vmem>>, vector<2x128xf32>
    %c1_58 = arith.constant 1 : index
    %c0_59 = arith.constant 0 : index
    %c0_60 = arith.constant 0 : index
    %77 = vector.load %arg5[%c1_58, %c0_59, %c0_60] : memref<5x128x120xf32, #tpu.memory_space<vmem>>, vector<1x128x120xf32>
    %78 = vector.shape_cast %77 : vector<1x128x120xf32> to vector<128x120xf32>
    %cst_61 = arith.constant dense<0.000000e+00> : vector<2x120xf32>
    %79 = tpu.matmul %76, %78, %cst_61 {dimension_numbers = #tpu.dot_dimension_numbers<[1], [0], [0], [1], [0, 0, 1, 1], [], []>} : vector<2x128xf32>, vector<128x120xf32>, vector<2x120xf32> -> vector<2x120xf32>
    %80 = arith.addf %75, %79 : vector<2x120xf32>
    %c2_62 = arith.constant 2 : index
    %c0_63 = arith.constant 0 : index
    %81 = tpu.strided_load %arg13[%c2_62, %c0_63] {strides = array<i32: 5, 1>} : memref<10x128xf32, #tpu.memory_space<vmem>>, vector<2x128xf32>
    %c2_64 = arith.constant 2 : index
    %c0_65 = arith.constant 0 : index
    %c0_66 = arith.constant 0 : index
    %82 = vector.load %arg5[%c2_64, %c0_65, %c0_66] : memref<5x128x120xf32, #tpu.memory_space<vmem>>, vector<1x128x120xf32>
    %83 = vector.shape_cast %82 : vector<1x128x120xf32> to vector<128x120xf32>
    %cst_67 = arith.constant dense<0.000000e+00> : vector<2x120xf32>
    %84 = tpu.matmul %81, %83, %cst_67 {dimension_numbers = #tpu.dot_dimension_numbers<[1], [0], [0], [1], [0, 0, 1, 1], [], []>} : vector<2x128xf32>, vector<128x120xf32>, vector<2x120xf32> -> vector<2x120xf32>
    %85 = arith.addf %80, %84 : vector<2x120xf32>
    %c3_68 = arith.constant 3 : index
    %c0_69 = arith.constant 0 : index
    %86 = tpu.strided_load %arg13[%c3_68, %c0_69] {strides = array<i32: 5, 1>} : memref<10x128xf32, #tpu.memory_space<vmem>>, vector<2x128xf32>
    %c3_70 = arith.constant 3 : index
    %c0_71 = arith.constant 0 : index
    %c0_72 = arith.constant 0 : index
    %87 = vector.load %arg5[%c3_70, %c0_71, %c0_72] : memref<5x128x120xf32, #tpu.memory_space<vmem>>, vector<1x128x120xf32>
    %88 = vector.shape_cast %87 : vector<1x128x120xf32> to vector<128x120xf32>
    %cst_73 = arith.constant dense<0.000000e+00> : vector<2x120xf32>
    %89 = tpu.matmul %86, %88, %cst_73 {dimension_numbers = #tpu.dot_dimension_numbers<[1], [0], [0], [1], [0, 0, 1, 1], [], []>} : vector<2x128xf32>, vector<128x120xf32>, vector<2x120xf32> -> vector<2x120xf32>
    %90 = arith.addf %85, %89 : vector<2x120xf32>
    %c4_74 = arith.constant 4 : index
    %c0_75 = arith.constant 0 : index
    %91 = tpu.strided_load %arg13[%c4_74, %c0_75] {strides = array<i32: 5, 1>} : memref<10x128xf32, #tpu.memory_space<vmem>>, vector<2x128xf32>
    %c4_76 = arith.constant 4 : index
    %c0_77 = arith.constant 0 : index
    %c0_78 = arith.constant 0 : index
    %92 = vector.load %arg5[%c4_76, %c0_77, %c0_78] : memref<5x128x120xf32, #tpu.memory_space<vmem>>, vector<1x128x120xf32>
    %93 = vector.shape_cast %92 : vector<1x128x120xf32> to vector<128x120xf32>
    %cst_79 = arith.constant dense<0.000000e+00> : vector<2x120xf32>
    %94 = tpu.matmul %91, %93, %cst_79 {dimension_numbers = #tpu.dot_dimension_numbers<[1], [0], [0], [1], [0, 0, 1, 1], [], []>} : vector<2x128xf32>, vector<128x120xf32>, vector<2x120xf32> -> vector<2x120xf32>
    %95 = arith.addf %90, %94 : vector<2x120xf32>
    %c0_80 = arith.constant 0 : index
    %c0_81 = arith.constant 0 : index
    %96 = vector.load %arg6[%c0_80, %c0_81] : memref<1x120xf32, #tpu.memory_space<vmem>>, vector<1x120xf32>
    %97 = vector.broadcast %96 : vector<1x120xf32> to vector<2x120xf32>
    %98 = arith.addf %95, %97 : vector<2x120xf32>
    %99 = math.tanh %98 : vector<2x120xf32>
    %c0_82 = arith.constant 0 : index
    %c0_83 = arith.constant 0 : index
    %100 = vector.load %arg7[%c0_82, %c0_83] : memref<120x84xf32, #tpu.memory_space<vmem>>, vector<120x84xf32>
    %cst_84 = arith.constant dense<0.000000e+00> : vector<2x84xf32>
    %101 = tpu.matmul %99, %100, %cst_84 {dimension_numbers = #tpu.dot_dimension_numbers<[1], [0], [0], [1], [0, 0, 1, 1], [], []>} : vector<2x120xf32>, vector<120x84xf32>, vector<2x84xf32> -> vector<2x84xf32>
    %c0_85 = arith.constant 0 : index
    %c0_86 = arith.constant 0 : index
    %102 = vector.load %arg8[%c0_85, %c0_86] : memref<1x84xf32, #tpu.memory_space<vmem>>, vector<1x84xf32>
    %103 = vector.broadcast %102 : vector<1x84xf32> to vector<2x84xf32>
    %104 = arith.addf %101, %103 : vector<2x84xf32>
    %105 = math.tanh %104 : vector<2x84xf32>
    %c0_87 = arith.constant 0 : index
    %c0_88 = arith.constant 0 : index
    %106 = vector.load %arg9[%c0_87, %c0_88] : memref<84x10xf32, #tpu.memory_space<vmem>>, vector<84x10xf32>
    %cst_89 = arith.constant dense<0.000000e+00> : vector<2x10xf32>
    %107 = tpu.matmul %105, %106, %cst_89 {dimension_numbers = #tpu.dot_dimension_numbers<[1], [0], [0], [1], [0, 0, 1, 1], [], []>} : vector<2x84xf32>, vector<84x10xf32>, vector<2x10xf32> -> vector<2x10xf32>
    %c0_90 = arith.constant 0 : index
    %c0_91 = arith.constant 0 : index
    %108 = vector.load %arg10[%c0_90, %c0_91] : memref<1x10xf32, #tpu.memory_space<vmem>>, vector<1x10xf32>
    %109 = vector.broadcast %108 : vector<1x10xf32> to vector<2x10xf32>
    %110 = arith.addf %107, %109 : vector<2x10xf32>
    %c0_92 = arith.constant 0 : index
    %c0_93 = arith.constant 0 : index
    %111 = vector.load %arg11[%c0_92, %c0_93] : memref<2x10xf32, #tpu.memory_space<vmem>>, vector<2x10xf32>
    tpu.vector_store %arg11[%c0_92, %c0_93], %110 {strides = array<i32>} : memref<2x10xf32, #tpu.memory_space<vmem>>, vector<2x10xf32>,
    return
  }
}

</mosaic_0001>

<llo_original>
// kernel: lenet5_forward.1
$region0: #{lenet5_forward.1}
  #allocation0 [shape = 'u32[]', space=smem, size = 0x4, offset = 0x4, fixed_abs, tag = 'smem constant byte address 0x4 - core index']
  #allocation1 [shape = 'u32[144,128]{1,0:T(1,128)}', space=vmem, size = 0x12000, scoped, tag = 'internal scratch']
  #allocation2 [shape = 'f32[28,128]{1,0:T(8,128)}', space=vmem, size = 0x4000, scoped, tag = 'scratch operand']
  #allocation3 [shape = 'f32[10,128]{1,0:T(8,128)}', space=vmem, size = 0x2000, scoped, tag = 'scratch operand']
  %s0 = inlined_call_operand.vmem [shape: f32[28,576], index: 0, kind: input, shape index: {}]
  %s1 = inlined_call_operand.vmem [shape: f32[576,512], index: 1, kind: input, shape index: {}]
  %s2 = inlined_call_operand.vmem [shape: f32[1,128], index: 2, kind: input, shape index: {}]
  %s3 = inlined_call_operand.vmem [shape: f32[6,128,512], index: 3, kind: input, shape index: {}]
  %s4 = inlined_call_operand.vmem [shape: f32[1,128], index: 4, kind: input, shape index: {}]
  %s5 = inlined_call_operand.vmem [shape: f32[5,128,120], index: 5, kind: input, shape index: {}]
  %s6 = inlined_call_operand.vmem [shape: f32[1,120], index: 6, kind: input, shape index: {}]
  %s7 = inlined_call_operand.vmem [shape: f32[120,84], index: 7, kind: input, shape index: {}]
  %s8 = inlined_call_operand.vmem [shape: f32[1,84], index: 8, kind: input, shape index: {}]
  %s9 = inlined_call_operand.vmem [shape: f32[84,10], index: 9, kind: input, shape index: {}]
  %s10 = inlined_call_operand.vmem [shape: f32[1,10], index: 10, kind: input, shape index: {}]
  %s11 = inlined_call_operand.hbm [shape: f32[2,10], index: 11, kind: output, shape index: {}]
  %s12 = sld [smem:[#allocation0]]
  $region54: #{lenet5_forward.1} parent=0
    _
  %s14 = ssub.s32 1, %s12
  %s15 = scalar_select 0, %s14, %s12
  $region1: #{lenet5_forward.1} parent=0
    #allocation4 [shape = 'u8[1024]{0}', space=vmem, size = 0x400, scoped, tag = 'output window, operand 0, single buffered']
    #allocation5 [shape = 's32[1]{0}', space=sflag, size = 0x4, scoped, tag = 'scoped memory for lenet5_forward.1']
    %16 = vsyncpa [#allocation5], 0
    // Predicated region
    $region2: #{lenet5_forward.1} parent=1 // pred_check
      _
    $region3: #{lenet5_forward.1} parent=1 // pred_check_branch
      %18 = sbr.rel (0) target = $region5
    $region4: #{lenet5_forward.1} parent=1 // pred_region
      _
    $region5: #{lenet5_forward.1} parent=1 // pred_fallthru
      _
    // Predicated region
    $region6: #{lenet5_forward.1} parent=1 // pred_check
      _
    $region7: #{lenet5_forward.1} parent=1 // pred_check_branch
      %20 = sbr.rel (0) target = $region9
    $region8: #{lenet5_forward.1} parent=1 // pred_region
      _
    $region9: #{lenet5_forward.1} parent=1 // pred_fallthru
      _
    // Predicated region
    $region10: #{lenet5_forward.1} parent=1 // pred_check
      _
    $region11: #{lenet5_forward.1} parent=1 // pred_check_branch
      %22 = sbr.rel (0) target = $region13
    $region12: #{lenet5_forward.1} parent=1 // pred_region
      _
    $region13: #{lenet5_forward.1} parent=1 // pred_fallthru
      _
    // Predicated region
    $region14: #{lenet5_forward.1} parent=1 // pred_check
      _
    $region15: #{lenet5_forward.1} parent=1 // pred_check_branch
      %24 = sbr.rel (0) target = $region17
    $region16: #{lenet5_forward.1} parent=1 // pred_region
      _
    $region17: #{lenet5_forward.1} parent=1 // pred_fallthru
      _
    // Predicated region
    $region18: #{lenet5_forward.1} parent=1 // pred_check
      _
    $region19: #{lenet5_forward.1} parent=1 // pred_check_branch
      %26 = sbr.rel (0) target = $region21
    $region20: #{lenet5_forward.1} parent=1 // pred_region
      _
    $region21: #{lenet5_forward.1} parent=1 // pred_fallthru
      _
    // Predicated region
    $region22: #{lenet5_forward.1} parent=1 // pred_check
      _
    $region23: #{lenet5_forward.1} parent=1 // pred_check_branch
      %28 = sbr.rel (0) target = $region25
    $region24: #{lenet5_forward.1} parent=1 // pred_region
      _
    $region25: #{lenet5_forward.1} parent=1 // pred_fallthru
      _
    // Predicated region
    $region26: #{lenet5_forward.1} parent=1 // pred_check
      _
    $region27: #{lenet5_forward.1} parent=1 // pred_check_branch
      %30 = sbr.rel (0) target = $region29
    $region28: #{lenet5_forward.1} parent=1 // pred_region
      _
    $region29: #{lenet5_forward.1} parent=1 // pred_fallthru
      _
    // Predicated region
    $region30: #{lenet5_forward.1} parent=1 // pred_check
      _
    $region31: #{lenet5_forward.1} parent=1 // pred_check_branch
      %32 = sbr.rel (0) target = $region33
    $region32: #{lenet5_forward.1} parent=1 // pred_region
      _
    $region33: #{lenet5_forward.1} parent=1 // pred_fallthru
      _
    // Predicated region
    $region34: #{lenet5_forward.1} parent=1 // pred_check
      _
    $region35: #{lenet5_forward.1} parent=1 // pred_check_branch
      %34 = sbr.rel (0) target = $region37
    $region36: #{lenet5_forward.1} parent=1 // pred_region
      _
    $region37: #{lenet5_forward.1} parent=1 // pred_fallthru
      _
    // Predicated region
    $region38: #{lenet5_forward.1} parent=1 // pred_check
      _
    $region39: #{lenet5_forward.1} parent=1 // pred_check_branch
      %36 = sbr.rel (0) target = $region41
    $region40: #{lenet5_forward.1} parent=1 // pred_region
      _
    $region41: #{lenet5_forward.1} parent=1 // pred_fallthru
      _
    // Predicated region
    $region42: #{lenet5_forward.1} parent=1 // pred_check
      _
    $region43: #{lenet5_forward.1} parent=1 // pred_check_branch
      %38 = sbr.rel (0) target = $region45
    $region44: #{lenet5_forward.1} parent=1 // pred_region
      _
    $region45: #{lenet5_forward.1} parent=1 // pred_fallthru
      _
    %v39 = vld [vmem:[%s0] sm:$0xff]
    %v40 = vld [vmem:[%s0 + $0x8] sm:$0xff]
    %v41 = vld [vmem:[%s0 + $0x10] sm:$0xff]
    %v42 = vld [vmem:[%s0 + $0x18] sm:$0xff]
    %v43 = vld [vmem:[%s0 + $0x20] sm:$0xff]
    %v44 = vld [vmem:[%s0 + $0x28] sm:$0xff]
    %v45 = vld [vmem:[%s0 + $0x30] sm:$0xff]
    %v46 = vld [vmem:[%s0 + $0x38] sm:$0xff]
    %v47 = vld [vmem:[%s0 + $0x40] sm:$0xff]
    %v48 = vld [vmem:[%s0 + $0x48] sm:$0xff]
    %v49 = vld [vmem:[%s0 + $0x50] sm:$0xff]
    %v50 = vld [vmem:[%s0 + $0x58] sm:$0xff]
    %v51 = vld [vmem:[%s0 + $0x60] sm:$0xff]
    %v52 = vld [vmem:[%s0 + $0x68] sm:$0xff]
    %v53 = vld [vmem:[%s0 + $0x70] sm:$0xff]
    %v54 = vld [vmem:[%s0 + $0x78] sm:$0xf]
    %v55 = vld [vmem:[%s0 + $0x80] sm:$0xf]
    %v56 = vld [vmem:[%s0 + $0x88] sm:$0xf]
    %v57 = vld [vmem:[%s0 + $0x90] sm:$0xf]
    %v58 = vld [vmem:[%s0 + $0x98] sm:$0xf]
    %v59 = vld [vmem:[%s1] sm:$0xff]
    %v60 = vld [vmem:[%s1 + $0x8] sm:$0xff]
    %v61 = vld [vmem:[%s1 + $0x10] sm:$0xff]
    %v62 = vld [vmem:[%s1 + $0x18] sm:$0xff]
    %v63 = vld [vmem:[%s1 + $0x20] sm:$0xff]
    %v64 = vld [vmem:[%s1 + $0x28] sm:$0xff]
    %v65 = vld [vmem:[%s1 + $0x30] sm:$0xff]
    %v66 = vld [vmem:[%s1 + $0x38] sm:$0xff]
    %v67 = vld [vmem:[%s1 + $0x40] sm:$0xff]
    %v68 = vld [vmem:[%s1 + $0x48] sm:$0xff]
    %v69 = vld [vmem:[%s1 + $0x50] sm:$0xff]
    %v70 = vld [vmem:[%s1 + $0x58] sm:$0xff]
    %v71 = vld [vmem:[%s1 + $0x60] sm:$0xff]
    %v72 = vld [vmem:[%s1 + $0x68] sm:$0xff]
    %v73 = vld [vmem:[%s1 + $0x70] sm:$0xff]
    %v74 = vld [vmem:[%s1 + $0x78] sm:$0xff]
    %v75 = vld [vmem:[%s1 + $0x80] sm:$0xff]
    %v76 = vld [vmem:[%s1 + $0x88] sm:$0xff]
    %v77 = vld [vmem:[%s1 + $0x90] sm:$0xff]
    %v78 = vld [vmem:[%s1 + $0x98] sm:$0xff]
    %v79 = vld [vmem:[%s1 + $0xa0] sm:$0xff]
    %v80 = vld [vmem:[%s1 + $0xa8] sm:$0xff]
    %v81 = vld [vmem:[%s1 + $0xb0] sm:$0xff]
    %v82 = vld [vmem:[%s1 + $0xb8] sm:$0xff]
    %v83 = vld [vmem:[%s1 + $0xc0] sm:$0xff]
    %v84 = vld [vmem:[%s1 + $0xc8] sm:$0xff]
    %v85 = vld [vmem:[%s1 + $0xd0] sm:$0xff]
    %v86 = vld [vmem:[%s1 + $0xd8] sm:$0xff]
    %v87 = vld [vmem:[%s1 + $0xe0] sm:$0xff]
    %v88 = vld [vmem:[%s1 + $0xe8] sm:$0xff]
    %v89 = vld [vmem:[%s1 + $0xf0] sm:$0xff]
    %v90 = vld [vmem:[%s1 + $0xf8] sm:$0xff]
    %v91 = vld [vmem:[%s1 + $0x100] sm:$0xff]
    %v92 = vld [vmem:[%s1 + $0x108] sm:$0xff]
    %v93 = vld [vmem:[%s1 + $0x110] sm:$0xff]
    %v94 = vld [vmem:[%s1 + $0x118] sm:$0xff]
    %v95 = vld [vmem:[%s1 + $0x120] sm:$0xff]
    %v96 = vld [vmem:[%s1 + $0x128] sm:$0xff]
    %v97 = vld [vmem:[%s1 + $0x130] sm:$0xff]
    %v98 = vld [vmem:[%s1 + $0x138] sm:$0xff]
    %v99 = vld [vmem:[%s1 + $0x140] sm:$0xff]
    %v100 = vld [vmem:[%s1 + $0x148] sm:$0xff]
    %v101 = vld [vmem:[%s1 + $0x150] sm:$0xff]
    %v102 = vld [vmem:[%s1 + $0x158] sm:$0xff]
    %v103 = vld [vmem:[%s1 + $0x160] sm:$0xff]
    %v104 = vld [vmem:[%s1 + $0x168] sm:$0xff]
    %v105 = vld [vmem:[%s1 + $0x170] sm:$0xff]
    %v106 = vld [vmem:[%s1 + $0x178] sm:$0xff]
    %v107 = vld [vmem:[%s1 + $0x180] sm:$0xff]
    %v108 = vld [vmem:[%s1 + $0x188] sm:$0xff]
    %v109 = vld [vmem:[%s1 + $0x190] sm:$0xff]
    %v110 = vld [vmem:[%s1 + $0x198] sm:$0xff]
    %v111 = vld [vmem:[%s1 + $0x1a0] sm:$0xff]
    %v112 = vld [vmem:[%s1 + $0x1a8] sm:$0xff]
    %v113 = vld [vmem:[%s1 + $0x1b0] sm:$0xff]
    %v114 = vld [vmem:[%s1 + $0x1b8] sm:$0xff]
    %v115 = vld [vmem:[%s1 + $0x1c0] sm:$0xff]
    %v116 = vld [vmem:[%s1 + $0x1c8] sm:$0xff]
    %v117 = vld [vmem:[%s1 + $0x1d0] sm:$0xff]
    %v118 = vld [vmem:[%s1 + $0x1d8] sm:$0xff]
    %v119 = vld [vmem:[%s1 + $0x1e0] sm:$0xff]
    %v120 = vld [vmem:[%s1 + $0x1e8] sm:$0xff]
    %v121 = vld [vmem:[%s1 + $0x1f0] sm:$0xff]
    %v122 = vld [vmem:[%s1 + $0x1f8] sm:$0xff]
    %v123 = vld [vmem:[%s1 + $0x200] sm:$0xff]
    %v124 = vld [vmem:[%s1 + $0x208] sm:$0xff]
    %v125 = vld [vmem:[%s1 + $0x210] sm:$0xff]
    %v126 = vld [vmem:[%s1 + $0x218] sm:$0xff]
    %v127 = vld [vmem:[%s1 + $0x220] sm:$0xff]
    %v128 = vld [vmem:[%s1 + $0x228] sm:$0xff]
    %v129 = vld [vmem:[%s1 + $0x230] sm:$0xff]
    %v130 = vld [vmem:[%s1 + $0x238] sm:$0xff]
    %v131 = vld [vmem:[%s1 + $0x240] sm:$0xff]
    %v132 = vld [vmem:[%s1 + $0x248] sm:$0xff]
    %v133 = vld [vmem:[%s1 + $0x250] sm:$0xff]
    %v134 = vld [vmem:[%s1 + $0x258] sm:$0xff]
    %v135 = vld [vmem:[%s1 + $0x260] sm:$0xff]
    %v136 = vld [vmem:[%s1 + $0x268] sm:$0xff]
    %v137 = vld [vmem:[%s1 + $0x270] sm:$0xff]
    %v138 = vld [vmem:[%s1 + $0x278] sm:$0xff]
    %v139 = vld [vmem:[%s1 + $0x280] sm:$0xff]
    %v140 = vld [vmem:[%s1 + $0x288] sm:$0xff]
    %v141 = vld [vmem:[%s1 + $0x290] sm:$0xff]
    %v142 = vld [vmem:[%s1 + $0x298] sm:$0xff]
    %v143 = vld [vmem:[%s1 + $0x2a0] sm:$0xff]
    %v144 = vld [vmem:[%s1 + $0x2a8] sm:$0xff]
    %v145 = vld [vmem:[%s1 + $0x2b0] sm:$0xff]
    %v146 = vld [vmem:[%s1 + $0x2b8] sm:$0xff]
    %v147 = vld [vmem:[%s1 + $0x2c0] sm:$0xff]
    %v148 = vld [vmem:[%s1 + $0x2c8] sm:$0xff]
    %v149 = vld [vmem:[%s1 + $0x2d0] sm:$0xff]
    %v150 = vld [vmem:[%s1 + $0x2d8] sm:$0xff]
    %v151 = vld [vmem:[%s1 + $0x2e0] sm:$0xff]
    %v152 = vld [vmem:[%s1 + $0x2e8] sm:$0xff]
    %v153 = vld [vmem:[%s1 + $0x2f0] sm:$0xff]
    %v154 = vld [vmem:[%s1 + $0x2f8] sm:$0xff]
    %v155 = vld [vmem:[%s1 + $0x300] sm:$0xff]
    %v156 = vld [vmem:[%s1 + $0x308] sm:$0xff]
    %v157 = vld [vmem:[%s1 + $0x310] sm:$0xff]
    %v158 = vld [vmem:[%s1 + $0x318] sm:$0xff]
    %v159 = vld [vmem:[%s1 + $0x320] sm:$0xff]
    %v160 = vld [vmem:[%s1 + $0x328] sm:$0xff]
    %v161 = vld [vmem:[%s1 + $0x330] sm:$0xff]
    %v162 = vld [vmem:[%s1 + $0x338] sm:$0xff]
    %v163 = vld [vmem:[%s1 + $0x340] sm:$0xff]
    %v164 = vld [vmem:[%s1 + $0x348] sm:$0xff]
    %v165 = vld [vmem:[%s1 + $0x350] sm:$0xff]
    %v166 = vld [vmem:[%s1 + $0x358] sm:$0xff]
    %v167 = vld [vmem:[%s1 + $0x360] sm:$0xff]
    %v168 = vld [vmem:[%s1 + $0x368] sm:$0xff]
    %v169 = vld [vmem:[%s1 + $0x370] sm:$0xff]
    %v170 = vld [vmem:[%s1 + $0x378] sm:$0xff]
    %v171 = vld [vmem:[%s1 + $0x380] sm:$0xff]
    %v172 = vld [vmem:[%s1 + $0x388] sm:$0xff]
    %v173 = vld [vmem:[%s1 + $0x390] sm:$0xff]
    %v174 = vld [vmem:[%s1 + $0x398] sm:$0xff]
    %v175 = vld [vmem:[%s1 + $0x3a0] sm:$0xff]
    %v176 = vld [vmem:[%s1 + $0x3a8] sm:$0xff]
    %v177 = vld [vmem:[%s1 + $0x3b0] sm:$0xff]
    %v178 = vld [vmem:[%s1 + $0x3b8] sm:$0xff]
    %v179 = vld [vmem:[%s1 + $0x3c0] sm:$0xff]
    %v180 = vld [vmem:[%s1 + $0x3c8] sm:$0xff]
    %v181 = vld [vmem:[%s1 + $0x3d0] sm:$0xff]
    %v182 = vld [vmem:[%s1 + $0x3d8] sm:$0xff]
    %v183 = vld [vmem:[%s1 + $0x3e0] sm:$0xff]
    %v184 = vld [vmem:[%s1 + $0x3e8] sm:$0xff]
    %v185 = vld [vmem:[%s1 + $0x3f0] sm:$0xff]
    %v186 = vld [vmem:[%s1 + $0x3f8] sm:$0xff]
    %v187 = vld [vmem:[%s1 + $0x400] sm:$0xff]
    %v188 = vld [vmem:[%s1 + $0x408] sm:$0xff]
    %v189 = vld [vmem:[%s1 + $0x410] sm:$0xff]
    %v190 = vld [vmem:[%s1 + $0x418] sm:$0xff]
    %v191 = vld [vmem:[%s1 + $0x420] sm:$0xff]
    %v192 = vld [vmem:[%s1 + $0x428] sm:$0xff]
    %v193 = vld [vmem:[%s1 + $0x430] sm:$0xff]
    %v194 = vld [vmem:[%s1 + $0x438] sm:$0xff]
    %v195 = vld [vmem:[%s1 + $0x440] sm:$0xff]
    %v196 = vld [vmem:[%s1 + $0x448] sm:$0xff]
    %v197 = vld [vmem:[%s1 + $0x450] sm:$0xff]
    %v198 = vld [vmem:[%s1 + $0x458] sm:$0xff]
    %v199 = vld [vmem:[%s1 + $0x460] sm:$0xff]
    %v200 = vld [vmem:[%s1 + $0x468] sm:$0xff]
    %v201 = vld [vmem:[%s1 + $0x470] sm:$0xff]
    %v202 = vld [vmem:[%s1 + $0x478] sm:$0xff]
    %v203 = vld [vmem:[%s1 + $0x480] sm:$0xff]
    %v204 = vld [vmem:[%s1 + $0x488] sm:$0xff]
    %v205 = vld [vmem:[%s1 + $0x490] sm:$0xff]
    %v206 = vld [vmem:[%s1 + $0x498] sm:$0xff]
    %v207 = vld [vmem:[%s1 + $0x4a0] sm:$0xff]
    %v208 = vld [vmem:[%s1 + $0x4a8] sm:$0xff]
    %v209 = vld [vmem:[%s1 + $0x4b0] sm:$0xff]
    %v210 = vld [vmem:[%s1 + $0x4b8] sm:$0xff]
    %v211 = vld [vmem:[%s1 + $0x4c0] sm:$0xff]
    %v212 = vld [vmem:[%s1 + $0x4c8] sm:$0xff]
    %v213 = vld [vmem:[%s1 + $0x4d0] sm:$0xff]
    %v214 = vld [vmem:[%s1 + $0x4d8] sm:$0xff]
    %v215 = vld [vmem:[%s1 + $0x4e0] sm:$0xff]
    %v216 = vld [vmem:[%s1 + $0x4e8] sm:$0xff]
    %v217 = vld [vmem:[%s1 + $0x4f0] sm:$0xff]
    %v218 = vld [vmem:[%s1 + $0x4f8] sm:$0xff]
    %v219 = vld [vmem:[%s1 + $0x500] sm:$0xff]
    %v220 = vld [vmem:[%s1 + $0x508] sm:$0xff]
    %v221 = vld [vmem:[%s1 + $0x510] sm:$0xff]
    %v222 = vld [vmem:[%s1 + $0x518] sm:$0xff]
    %v223 = vld [vmem:[%s1 + $0x520] sm:$0xff]
    %v224 = vld [vmem:[%s1 + $0x528] sm:$0xff]
    %v225 = vld [vmem:[%s1 + $0x530] sm:$0xff]
    %v226 = vld [vmem:[%s1 + $0x538] sm:$0xff]
    %v227 = vld [vmem:[%s1 + $0x540] sm:$0xff]
    %v228 = vld [vmem:[%s1 + $0x548] sm:$0xff]
    %v229 = vld [vmem:[%s1 + $0x550] sm:$0xff]
    %v230 = vld [vmem:[%s1 + $0x558] sm:$0xff]
    %v231 = vld [vmem:[%s1 + $0x560] sm:$0xff]
    %v232 = vld [vmem:[%s1 + $0x568] sm:$0xff]
    %v233 = vld [vmem:[%s1 + $0x570] sm:$0xff]
    %v234 = vld [vmem:[%s1 + $0x578] sm:$0xff]
    %v235 = vld [vmem:[%s1 + $0x580] sm:$0xff]
    %v236 = vld [vmem:[%s1 + $0x588] sm:$0xff]
    %v237 = vld [vmem:[%s1 + $0x590] sm:$0xff]
    %v238 = vld [vmem:[%s1 + $0x598] sm:$0xff]
    %v239 = vld [vmem:[%s1 + $0x5a0] sm:$0xff]
    %v240 = vld [vmem:[%s1 + $0x5a8] sm:$0xff]
    %v241 = vld [vmem:[%s1 + $0x5b0] sm:$0xff]
    %v242 = vld [vmem:[%s1 + $0x5b8] sm:$0xff]
    %v243 = vld [vmem:[%s1 + $0x5c0] sm:$0xff]
    %v244 = vld [vmem:[%s1 + $0x5c8] sm:$0xff]
    %v245 = vld [vmem:[%s1 + $0x5d0] sm:$0xff]
    %v246 = vld [vmem:[%s1 + $0x5d8] sm:$0xff]
    %v247 = vld [vmem:[%s1 + $0x5e0] sm:$0xff]
    %v248 = vld [vmem:[%s1 + $0x5e8] sm:$0xff]
    %v249 = vld [vmem:[%s1 + $0x5f0] sm:$0xff]
    %v250 = vld [vmem:[%s1 + $0x5f8] sm:$0xff]
    %v251 = vld [vmem:[%s1 + $0x600] sm:$0xff]
    %v252 = vld [vmem:[%s1 + $0x608] sm:$0xff]
    %v253 = vld [vmem:[%s1 + $0x610] sm:$0xff]
    %v254 = vld [vmem:[%s1 + $0x618] sm:$0xff]
    %v255 = vld [vmem:[%s1 + $0x620] sm:$0xff]
    %v256 = vld [vmem:[%s1 + $0x628] sm:$0xff]
    %v257 = vld [vmem:[%s1 + $0x630] sm:$0xff]
    %v258 = vld [vmem:[%s1 + $0x638] sm:$0xff]
    %v259 = vld [vmem:[%s1 + $0x640] sm:$0xff]
    %v260 = vld [vmem:[%s1 + $0x648] sm:$0xff]
    %v261 = vld [vmem:[%s1 + $0x650] sm:$0xff]
    %v262 = vld [vmem:[%s1 + $0x658] sm:$0xff]
    %v263 = vld [vmem:[%s1 + $0x660] sm:$0xff]
    %v264 = vld [vmem:[%s1 + $0x668] sm:$0xff]
    %v265 = vld [vmem:[%s1 + $0x670] sm:$0xff]
    %v266 = vld [vmem:[%s1 + $0x678] sm:$0xff]
    %v267 = vld [vmem:[%s1 + $0x680] sm:$0xff]
    %v268 = vld [vmem:[%s1 + $0x688] sm:$0xff]
    %v269 = vld [vmem:[%s1 + $0x690] sm:$0xff]
    %v270 = vld [vmem:[%s1 + $0x698] sm:$0xff]
    %v271 = vld [vmem:[%s1 + $0x6a0] sm:$0xff]
    %v272 = vld [vmem:[%s1 + $0x6a8] sm:$0xff]
    %v273 = vld [vmem:[%s1 + $0x6b0] sm:$0xff]
    %v274 = vld [vmem:[%s1 + $0x6b8] sm:$0xff]
    %v275 = vld [vmem:[%s1 + $0x6c0] sm:$0xff]
    %v276 = vld [vmem:[%s1 + $0x6c8] sm:$0xff]
    %v277 = vld [vmem:[%s1 + $0x6d0] sm:$0xff]
    %v278 = vld [vmem:[%s1 + $0x6d8] sm:$0xff]
    %v279 = vld [vmem:[%s1 + $0x6e0] sm:$0xff]
    %v280 = vld [vmem:[%s1 + $0x6e8] sm:$0xff]
    %v281 = vld [vmem:[%s1 + $0x6f0] sm:$0xff]
    %v282 = vld [vmem:[%s1 + $0x6f8] sm:$0xff]
    %v283 = vld [vmem:[%s1 + $0x700] sm:$0xff]
    %v284 = vld [vmem:[%s1 + $0x708] sm:$0xff]
    %v285 = vld [vmem:[%s1 + $0x710] sm:$0xff]
    %v286 = vld [vmem:[%s1 + $0x718] sm:$0xff]
    %v287 = vld [vmem:[%s1 + $0x720] sm:$0xff]
    %v288 = vld [vmem:[%s1 + $0x728] sm:$0xff]
    %v289 = vld [vmem:[%s1 + $0x730] sm:$0xff]
    %v290 = vld [vmem:[%s1 + $0x738] sm:$0xff]
    %v291 = vld [vmem:[%s1 + $0x740] sm:$0xff]
    %v292 = vld [vmem:[%s1 + $0x748] sm:$0xff]
    %v293 = vld [vmem:[%s1 + $0x750] sm:$0xff]
    %v294 = vld [vmem:[%s1 + $0x758] sm:$0xff]
    %v295 = vld [vmem:[%s1 + $0x760] sm:$0xff]
    %v296 = vld [vmem:[%s1 + $0x768] sm:$0xff]
    %v297 = vld [vmem:[%s1 + $0x770] sm:$0xff]
    %v298 = vld [vmem:[%s1 + $0x778] sm:$0xff]
    %v299 = vld [vmem:[%s1 + $0x780] sm:$0xff]
    %v300 = vld [vmem:[%s1 + $0x788] sm:$0xff]
    %v301 = vld [vmem:[%s1 + $0x790] sm:$0xff]
    %v302 = vld [vmem:[%s1 + $0x798] sm:$0xff]
    %v303 = vld [vmem:[%s1 + $0x7a0] sm:$0xff]
    %v304 = vld [vmem:[%s1 + $0x7a8] sm:$0xff]
    %v305 = vld [vmem:[%s1 + $0x7b0] sm:$0xff]
    %v306 = vld [vmem:[%s1 + $0x7b8] sm:$0xff]
    %v307 = vld [vmem:[%s1 + $0x7c0] sm:$0xff]
    %v308 = vld [vmem:[%s1 + $0x7c8] sm:$0xff]
    %v309 = vld [vmem:[%s1 + $0x7d0] sm:$0xff]
    %v310 = vld [vmem:[%s1 + $0x7d8] sm:$0xff]
    %v311 = vld [vmem:[%s1 + $0x7e0] sm:$0xff]
    %v312 = vld [vmem:[%s1 + $0x7e8] sm:$0xff]
    %v313 = vld [vmem:[%s1 + $0x7f0] sm:$0xff]
    %v314 = vld [vmem:[%s1 + $0x7f8] sm:$0xff]
    %v315 = vld [vmem:[%s1 + $0x800] sm:$0xff]
    %v316 = vld [vmem:[%s1 + $0x808] sm:$0xff]
    %v317 = vld [vmem:[%s1 + $0x810] sm:$0xff]
    %v318 = vld [vmem:[%s1 + $0x818] sm:$0xff]
    %v319 = vld [vmem:[%s1 + $0x820] sm:$0xff]
    %v320 = vld [vmem:[%s1 + $0x828] sm:$0xff]
    %v321 = vld [vmem:[%s1 + $0x830] sm:$0xff]
    %v322 = vld [vmem:[%s1 + $0x838] sm:$0xff]
    %v323 = vld [vmem:[%s1 + $0x840] sm:$0xff]
    %v324 = vld [vmem:[%s1 + $0x848] sm:$0xff]
    %v325 = vld [vmem:[%s1 + $0x850] sm:$0xff]
    %v326 = vld [vmem:[%s1 + $0x858] sm:$0xff]
    %v327 = vld [vmem:[%s1 + $0x860] sm:$0xff]
    %v328 = vld [vmem:[%s1 + $0x868] sm:$0xff]
    %v329 = vld [vmem:[%s1 + $0x870] sm:$0xff]
    %v330 = vld [vmem:[%s1 + $0x878] sm:$0xff]
    %v331 = vld [vmem:[%s1 + $0x880] sm:$0xff]
    %v332 = vld [vmem:[%s1 + $0x888] sm:$0xff]
    %v333 = vld [vmem:[%s1 + $0x890] sm:$0xff]
    %v334 = vld [vmem:[%s1 + $0x898] sm:$0xff]
    %v335 = vld [vmem:[%s1 + $0x8a0] sm:$0xff]
    %v336 = vld [vmem:[%s1 + $0x8a8] sm:$0xff]
    %v337 = vld [vmem:[%s1 + $0x8b0] sm:$0xff]
    %v338 = vld [vmem:[%s1 + $0x8b8] sm:$0xff]
    %v339 = vld [vmem:[%s1 + $0x8c0] sm:$0xff]
    %v340 = vld [vmem:[%s1 + $0x8c8] sm:$0xff]
    %v341 = vld [vmem:[%s1 + $0x8d0] sm:$0xff]
    %v342 = vld [vmem:[%s1 + $0x8d8] sm:$0xff]
    %v343 = vld [vmem:[%s1 + $0x8e0] sm:$0xff]
    %v344 = vld [vmem:[%s1 + $0x8e8] sm:$0xff]
    %v345 = vld [vmem:[%s1 + $0x8f0] sm:$0xff]
    %v346 = vld [vmem:[%s1 + $0x8f8] sm:$0xff]
    %vm347 = vcmask 523264
    %v349 = vsel %vm347, %v43, 0
    %v352 = vsel %vm347, %v48, 0
    %v355 = vsel %vm347, %v53, 0
    %v358 = vsel %vm347, %v58, 0
    %360 = vmatprep.subr.mxu0 %v120
    %361 = vmatpush1.msra.mxu0 %v119
    %362 = vmatprep.subr.mxu0 %v116
    %363 = vmatpush1.msra.mxu0 %v115
    %364 = vmatprep.subr.mxu0 %v112
    %365 = vmatpush1.msra.mxu0 %v111
    %366 = vmatprep.subr.mxu0 %v108
    %367 = vmatpush1.msra.mxu0 %v107
    %368 = vmatprep.subr.mxu0 %v104
    %369 = vmatpush1.msra.mxu0 %v103
    %370 = vmatprep.subr.mxu0 %v100
    %371 = vmatpush1.msra.mxu0 %v99
    %372 = vmatprep.subr.mxu0 %v96
    %373 = vmatpush1.msra.mxu0 %v95
    %374 = vmatprep.subr.mxu0 %v92
    %375 = vmatpush1.msra.mxu0 %v91
    %376 = vmatprep.subr.mxu0 %v88
    %377 = vmatpush1.msra.mxu0 %v87
    %378 = vmatprep.subr.mxu0 %v84
    %379 = vmatpush1.msra.mxu0 %v83
    %380 = vmatprep.subr.mxu0 %v80
    %381 = vmatpush1.msra.mxu0 %v79
    %382 = vmatprep.subr.mxu0 %v76
    %383 = vmatpush1.msra.mxu0 %v75
    %384 = vmatprep.subr.mxu0 %v72
    %385 = vmatpush1.msra.mxu0 %v71
    %386 = vmatprep.subr.mxu0 %v68
    %387 = vmatpush1.msra.mxu0 %v67
    %388 = vmatprep.subr.mxu0 %v64
    %389 = vmatpush1.msra.mxu0 %v63
    %390 = vmatprep.subr.mxu0 %v60
    %391 = vmatpush1.msra.mxu0 %v59
    %392 = vmatprep.subr.mxu0 %v184
    %393 = vmatpush2.msra.mxu0 %v183
    %394 = vmatprep.subr.mxu0 %v180
    %395 = vmatpush2.msra.mxu0 %v179
    %396 = vmatprep.subr.mxu0 %v176
    %397 = vmatpush2.msra.mxu0 %v175
    %398 = vmatprep.subr.mxu0 %v172
    %399 = vmatpush2.msra.mxu0 %v171
    %400 = vmatprep.subr.mxu0 %v168
    %401 = vmatpush2.msra.mxu0 %v167
    %402 = vmatprep.subr.mxu0 %v164
    %403 = vmatpush2.msra.mxu0 %v163
    %404 = vmatprep.subr.mxu0 %v160
    %405 = vmatpush2.msra.mxu0 %v159
    %406 = vmatprep.subr.mxu0 %v156
    %407 = vmatpush2.msra.mxu0 %v155
    %408 = vmatprep.subr.mxu0 %v152
    %409 = vmatpush2.msra.mxu0 %v151
    %410 = vmatprep.subr.mxu0 %v148
    %411 = vmatpush2.msra.mxu0 %v147
    %412 = vmatprep.subr.mxu0 %v144
    %413 = vmatpush2.msra.mxu0 %v143
    %414 = vmatprep.subr.mxu0 %v140
    %415 = vmatpush2.msra.mxu0 %v139
    %416 = vmatprep.subr.mxu0 %v136
    %417 = vmatpush2.msra.mxu0 %v135
    %418 = vmatprep.subr.mxu0 %v132
    %419 = vmatpush2.msra.mxu0 %v131
    %420 = vmatprep.subr.mxu0 %v128
    %421 = vmatpush2.msra.mxu0 %v127
    %422 = vmatprep.subr.mxu0 %v124
    %423 = vmatpush2.msra.mxu0 %v123
    %424 = vmatprep.mubr.f32.mxu0 %v40
    %425 = vmatmul.mubr.f32.gmra.mxu0 %v39
    %v426 = vpop.f32.mrf.mxu0
    %v427 = vadd.f32 0.0, %v426
    %v428 = vpop.f32.mrf.mxu0
    %v429 = vadd.f32 0.0, %v428
    %430 = vmatprep.mubr.f32.mxu0 %v45
    %431 = vmatmul.mubr.f32.gmra.mxu0 %v44
    %v432 = vpop.f32.mrf.mxu0
    %v433 = vadd.f32 0.0, %v432
    %v434 = vpop.f32.mrf.mxu0
    %v435 = vadd.f32 0.0, %v434
    %436 = vmatprep.mubr.f32.mxu0 %v50
    %437 = vmatmul.mubr.f32.gmra.mxu0 %v49
    %v438 = vpop.f32.mrf.mxu0
    %v439 = vadd.f32 0.0, %v438
    %v440 = vpop.f32.mrf.mxu0
    %v441 = vadd.f32 0.0, %v440
    %442 = vmatprep.mubr.f32.mxu0 %v55
    %443 = vmatmul.mubr.f32.gmra.mxu0 %v54
    %v444 = vpop.f32.mrf.mxu0
    %v445 = vadd.f32 0.0, %v444
    %v446 = vpop.f32.mrf.mxu0
    %v447 = vadd.f32 0.0, %v446
    %448 = vdwg.mxu0
    %449 = vmatprep.subr.mxu0 %v248
    %450 = vmatpush1.msra.mxu0 %v247
    %451 = vmatprep.subr.mxu0 %v244
    %452 = vmatpush1.msra.mxu0 %v243
    %453 = vmatprep.subr.mxu0 %v240
    %454 = vmatpush1.msra.mxu0 %v239
    %455 = vmatprep.subr.mxu0 %v236
    %456 = vmatpush1.msra.mxu0 %v235
    %457 = vmatprep.subr.mxu0 %v232
    %458 = vmatpush1.msra.mxu0 %v231
    %459 = vmatprep.subr.mxu0 %v228
    %460 = vmatpush1.msra.mxu0 %v227
    %461 = vmatprep.subr.mxu0 %v224
    %462 = vmatpush1.msra.mxu0 %v223
    %463 = vmatprep.subr.mxu0 %v220
    %464 = vmatpush1.msra.mxu0 %v219
    %465 = vmatprep.subr.mxu0 %v216
    %466 = vmatpush1.msra.mxu0 %v215
    %467 = vmatprep.subr.mxu0 %v212
    %468 = vmatpush1.msra.mxu0 %v211
    %469 = vmatprep.subr.mxu0 %v208
    %470 = vmatpush1.msra.mxu0 %v207
    %471 = vmatprep.subr.mxu0 %v204
    %472 = vmatpush1.msra.mxu0 %v203
    %473 = vmatprep.subr.mxu0 %v200
    %474 = vmatpush1.msra.mxu0 %v199
    %475 = vmatprep.subr.mxu0 %v196
    %476 = vmatpush1.msra.mxu0 %v195
    %477 = vmatprep.subr.mxu0 %v192
    %478 = vmatpush1.msra.mxu0 %v191
    %479 = vmatprep.subr.mxu0 %v188
    %480 = vmatpush1.msra.mxu0 %v187
    %481 = vmatprep.subr.mxu0 %v312
    %482 = vmatpush2.msra.mxu0 %v311
    %483 = vmatprep.subr.mxu0 %v308
    %484 = vmatpush2.msra.mxu0 %v307
    %485 = vmatprep.subr.mxu0 %v304
    %486 = vmatpush2.msra.mxu0 %v303
    %487 = vmatprep.subr.mxu0 %v300
    %488 = vmatpush2.msra.mxu0 %v299
    %489 = vmatprep.subr.mxu0 %v296
    %490 = vmatpush2.msra.mxu0 %v295
    %491 = vmatprep.subr.mxu0 %v292
    %492 = vmatpush2.msra.mxu0 %v291
    %493 = vmatprep.subr.mxu0 %v288
    %494 = vmatpush2.msra.mxu0 %v287
    %495 = vmatprep.subr.mxu0 %v284
    %496 = vmatpush2.msra.mxu0 %v283
    %497 = vmatprep.subr.mxu0 %v280
    %498 = vmatpush2.msra.mxu0 %v279
    %499 = vmatprep.subr.mxu0 %v276
    %500 = vmatpush2.msra.mxu0 %v275
    %501 = vmatprep.subr.mxu0 %v272
    %502 = vmatpush2.msra.mxu0 %v271
    %503 = vmatprep.subr.mxu0 %v268
    %504 = vmatpush2.msra.mxu0 %v267
    %505 = vmatprep.subr.mxu0 %v264
    %506 = vmatpush2.msra.mxu0 %v263
    %507 = vmatprep.subr.mxu0 %v260
    %508 = vmatpush2.msra.mxu0 %v259
    %509 = vmatprep.subr.mxu0 %v256
    %510 = vmatpush2.msra.mxu0 %v255
    %511 = vmatprep.subr.mxu0 %v252
    %512 = vmatpush2.msra.mxu0 %v251
    %513 = vmatprep.mubr.f32.mxu0 %v42
    %514 = vmatmul.mubr.f32.gmra.mxu0 %v41
    %v515 = vpop.f32.mrf.mxu0
    %v516 = vadd.f32 %v427, %v515
    %v517 = vpop.f32.mrf.mxu0
    %v518 = vadd.f32 %v429, %v517
    %519 = vmatprep.mubr.f32.mxu0 %v47
    %520 = vmatmul.mubr.f32.gmra.mxu0 %v46
    %v521 = vpop.f32.mrf.mxu0
    %v522 = vadd.f32 %v433, %v521
    %v523 = vpop.f32.mrf.mxu0
    %v524 = vadd.f32 %v435, %v523
    %525 = vmatprep.mubr.f32.mxu0 %v52
    %526 = vmatmul.mubr.f32.gmra.mxu0 %v51
    %v527 = vpop.f32.mrf.mxu0
    %v528 = vadd.f32 %v439, %v527
    %v529 = vpop.f32.mrf.mxu0
    %v530 = vadd.f32 %v441, %v529
    %531 = vmatprep.mubr.f32.mxu0 %v57
    %532 = vmatmul.mubr.f32.gmra.mxu0 %v56
    %v533 = vpop.f32.mrf.mxu0
    %v534 = vadd.f32 %v445, %v533
    %v535 = vpop.f32.mrf.mxu0
    %v536 = vadd.f32 %v447, %v535
    %537 = vdwg.mxu0
    %538 = vmatprep.subr.mxu0 0.0
    %539 = vmatpush1.msra.mxu0 0.0
    %540 = vmatprep.subr.mxu0 0.0
    %541 = vmatpush1.msra.mxu0 0.0
    %542 = vmatprep.subr.mxu0 0.0
    %543 = vmatpush1.msra.mxu0 0.0
    %544 = vmatprep.subr.mxu0 0.0
    %545 = vmatpush1.msra.mxu0 0.0
    %546 = vmatprep.subr.mxu0 0.0
    %547 = vmatpush1.msra.mxu0 0.0
    %548 = vmatprep.subr.mxu0 0.0
    %549 = vmatpush1.msra.mxu0 0.0
    %550 = vmatprep.subr.mxu0 0.0
    %551 = vmatpush1.msra.mxu0 0.0
    %552 = vmatprep.subr.mxu0 0.0
    %553 = vmatpush1.msra.mxu0 0.0
    %554 = vmatprep.subr.mxu0 %v344
    %555 = vmatpush1.msra.mxu0 %v343
    %556 = vmatprep.subr.mxu0 %v340
    %557 = vmatpush1.msra.mxu0 %v339
    %558 = vmatprep.subr.mxu0 %v336
    %559 = vmatpush1.msra.mxu0 %v335
    %560 = vmatprep.subr.mxu0 %v332
    %561 = vmatpush1.msra.mxu0 %v331
    %562 = vmatprep.subr.mxu0 %v328
    %563 = vmatpush1.msra.mxu0 %v327
    %564 = vmatprep.subr.mxu0 %v324
    %565 = vmatpush1.msra.mxu0 %v323
    %566 = vmatprep.subr.mxu0 %v320
    %567 = vmatpush1.msra.mxu0 %v319
    %568 = vmatprep.subr.mxu0 %v316
    %569 = vmatpush1.msra.mxu0 %v315
    %570 = vmatprep.subr.mxu0 0.0
    %571 = vmatpush2.msra.mxu0 0.0
    %572 = vmatprep.subr.mxu0 0.0
    %573 = vmatpush2.msra.mxu0 0.0
    %574 = vmatprep.subr.mxu0 0.0
    %575 = vmatpush2.msra.mxu0 0.0
    %576 = vmatprep.subr.mxu0 0.0
    %577 = vmatpush2.msra.mxu0 0.0
    %578 = vmatprep.subr.mxu0 0.0
    %579 = vmatpush2.msra.mxu0 0.0
    %580 = vmatprep.subr.mxu0 0.0
    %581 = vmatpush2.msra.mxu0 0.0
    %582 = vmatprep.subr.mxu0 0.0
    %583 = vmatpush2.msra.mxu0 0.0
    %584 = vmatprep.subr.mxu0 0.0
    %585 = vmatpush2.msra.mxu0 0.0
    %586 = vmatprep.subr.mxu0 0.0
    %587 = vmatpush2.msra.mxu0 0.0
    %588 = vmatprep.subr.mxu0 0.0
    %589 = vmatpush2.msra.mxu0 0.0
    %590 = vmatprep.subr.mxu0 0.0
    %591 = vmatpush2.msra.mxu0 0.0
    %592 = vmatprep.subr.mxu0 0.0
    %593 = vmatpush2.msra.mxu0 0.0
    %594 = vmatprep.subr.mxu0 0.0
    %595 = vmatpush2.msra.mxu0 0.0
    %596 = vmatprep.subr.mxu0 0.0
    %597 = vmatpush2.msra.mxu0 0.0
    %598 = vmatprep.subr.mxu0 0.0
    %599 = vmatpush2.msra.mxu0 0.0
    %600 = vmatprep.subr.mxu0 0.0
    %601 = vmatpush2.msra.mxu0 0.0
    %602 = vmatprep.mubr.f32.mxu0 0.0
    %603 = vmatmul.mubr.f32.gmra.mxu0 %v349
    %v604 = vpop.f32.mrf.mxu0
    %v605 = vadd.f32 %v516, %v604
    %v606 = vpop.f32.mrf.mxu0
    %v607 = vadd.f32 %v518, %v606
    %608 = vmatprep.mubr.f32.mxu0 0.0
    %609 = vmatmul.mubr.f32.gmra.mxu0 %v352
    %v610 = vpop.f32.mrf.mxu0
    %v611 = vadd.f32 %v522, %v610
    %v612 = vpop.f32.mrf.mxu0
    %v613 = vadd.f32 %v524, %v612
    %614 = vmatprep.mubr.f32.mxu0 0.0
    %615 = vmatmul.mubr.f32.gmra.mxu0 %v355
    %v616 = vpop.f32.mrf.mxu0
    %v617 = vadd.f32 %v528, %v616
    %v618 = vpop.f32.mrf.mxu0
    %v619 = vadd.f32 %v530, %v618
    %620 = vmatprep.mubr.f32.mxu0 0.0
    %621 = vmatmul.mubr.f32.gmra.mxu0 %v358
    %v622 = vpop.f32.mrf.mxu0
    %v623 = vadd.f32 %v534, %v622
    %v624 = vpop.f32.mrf.mxu0
    %v625 = vadd.f32 %v536, %v624
    %626 = vdwg.mxu0
    %627 = vmatprep.subr.mxu0 %v122
    %628 = vmatpush1.msra.mxu0 %v121
    %629 = vmatprep.subr.mxu0 %v118
    %630 = vmatpush1.msra.mxu0 %v117
    %631 = vmatprep.subr.mxu0 %v114
    %632 = vmatpush1.msra.mxu0 %v113
    %633 = vmatprep.subr.mxu0 %v110
    %634 = vmatpush1.msra.mxu0 %v109
    %635 = vmatprep.subr.mxu0 %v106
    %636 = vmatpush1.msra.mxu0 %v105
    %637 = vmatprep.subr.mxu0 %v102
    %638 = vmatpush1.msra.mxu0 %v101
    %639 = vmatprep.subr.mxu0 %v98
    %640 = vmatpush1.msra.mxu0 %v97
    %641 = vmatprep.subr.mxu0 %v94
    %642 = vmatpush1.msra.mxu0 %v93
    %643 = vmatprep.subr.mxu0 %v90
    %644 = vmatpush1.msra.mxu0 %v89
    %645 = vmatprep.subr.mxu0 %v86
    %646 = vmatpush1.msra.mxu0 %v85
    %647 = vmatprep.subr.mxu0 %v82
    %648 = vmatpush1.msra.mxu0 %v81
    %649 = vmatprep.subr.mxu0 %v78
    %650 = vmatpush1.msra.mxu0 %v77
    %651 = vmatprep.subr.mxu0 %v74
    %652 = vmatpush1.msra.mxu0 %v73
    %653 = vmatprep.subr.mxu0 %v70
    %654 = vmatpush1.msra.mxu0 %v69
    %655 = vmatprep.subr.mxu0 %v66
    %656 = vmatpush1.msra.mxu0 %v65
    %657 = vmatprep.subr.mxu0 %v62
    %658 = vmatpush1.msra.mxu0 %v61
    %659 = vmatprep.subr.mxu0 %v186
    %660 = vmatpush2.msra.mxu0 %v185
    %661 = vmatprep.subr.mxu0 %v182
    %662 = vmatpush2.msra.mxu0 %v181
    %663 = vmatprep.subr.mxu0 %v178
    %664 = vmatpush2.msra.mxu0 %v177
    %665 = vmatprep.subr.mxu0 %v174
    %666 = vmatpush2.msra.mxu0 %v173
    %667 = vmatprep.subr.mxu0 %v170
    %668 = vmatpush2.msra.mxu0 %v169
    %669 = vmatprep.subr.mxu0 %v166
    %670 = vmatpush2.msra.mxu0 %v165
    %671 = vmatprep.subr.mxu0 %v162
    %672 = vmatpush2.msra.mxu0 %v161
    %673 = vmatprep.subr.mxu0 %v158
    %674 = vmatpush2.msra.mxu0 %v157
    %675 = vmatprep.subr.mxu0 %v154
    %676 = vmatpush2.msra.mxu0 %v153
    %677 = vmatprep.subr.mxu0 %v150
    %678 = vmatpush2.msra.mxu0 %v149
    %679 = vmatprep.subr.mxu0 %v146
    %680 = vmatpush2.msra.mxu0 %v145
    %681 = vmatprep.subr.mxu0 %v142
    %682 = vmatpush2.msra.mxu0 %v141
    %683 = vmatprep.subr.mxu0 %v138
    %684 = vmatpush2.msra.mxu0 %v137
    %685 = vmatprep.subr.mxu0 %v134
    %686 = vmatpush2.msra.mxu0 %v133
    %687 = vmatprep.subr.mxu0 %v130
    %688 = vmatpush2.msra.mxu0 %v129
    %689 = vmatprep.subr.mxu0 %v126
    %690 = vmatpush2.msra.mxu0 %v125
    %691 = vmatprep.mubr.f32.mxu0 %v40
    %692 = vmatmul.mubr.f32.gmra.mxu0 %v39
    %v693 = vpop.f32.mrf.mxu0
    %v694 = vadd.f32 0.0, %v693
    %v695 = vpop.f32.mrf.mxu0
    %v696 = vadd.f32 0.0, %v695
    %697 = vmatprep.mubr.f32.mxu0 %v45
    %698 = vmatmul.mubr.f32.gmra.mxu0 %v44
    %v699 = vpop.f32.mrf.mxu0
    %v700 = vadd.f32 0.0, %v699
    %v701 = vpop.f32.mrf.mxu0
    %v702 = vadd.f32 0.0, %v701
    %703 = vmatprep.mubr.f32.mxu0 %v50
    %704 = vmatmul.mubr.f32.gmra.mxu0 %v49
    %v705 = vpop.f32.mrf.mxu0
    %v706 = vadd.f32 0.0, %v705
    %v707 = vpop.f32.mrf.mxu0
    %v708 = vadd.f32 0.0, %v707
    %709 = vmatprep.mubr.f32.mxu0 %v55
    %710 = vmatmul.mubr.f32.gmra.mxu0 %v54
    %v711 = vpop.f32.mrf.mxu0
    %v712 = vadd.f32 0.0, %v711
    %v713 = vpop.f32.mrf.mxu0
    %v714 = vadd.f32 0.0, %v713
    %715 = vdwg.mxu0
    %716 = vmatprep.subr.mxu0 %v250
    %717 = vmatpush1.msra.mxu0 %v249
    %718 = vmatprep.subr.mxu0 %v246
    %719 = vmatpush1.msra.mxu0 %v245
    %720 = vmatprep.subr.mxu0 %v242
    %721 = vmatpush1.msra.mxu0 %v241
    %722 = vmatprep.subr.mxu0 %v238
    %723 = vmatpush1.msra.mxu0 %v237
    %724 = vmatprep.subr.mxu0 %v234
    %725 = vmatpush1.msra.mxu0 %v233
    %726 = vmatprep.subr.mxu0 %v230
    %727 = vmatpush1.msra.mxu0 %v229
    %728 = vmatprep.subr.mxu0 %v226
    %729 = vmatpush1.msra.mxu0 %v225
    %730 = vmatprep.subr.mxu0 %v222
    %731 = vmatpush1.msra.mxu0 %v221
    %732 = vmatprep.subr.mxu0 %v218
    %733 = vmatpush1.msra.mxu0 %v217
    %734 = vmatprep.subr.mxu0 %v214
    %735 = vmatpush1.msra.mxu0 %v213
    %736 = vmatprep.subr.mxu0 %v210
    %737 = vmatpush1.msra.mxu0 %v209
    %738 = vmatprep.subr.mxu0 %v206
    %739 = vmatpush1.msra.mxu0 %v205
    %740 = vmatprep.subr.mxu0 %v202
    %741 = vmatpush1.msra.mxu0 %v201
    %742 = vmatprep.subr.mxu0 %v198
    %743 = vmatpush1.msra.mxu0 %v197
    %744 = vmatprep.subr.mxu0 %v194
    %745 = vmatpush1.msra.mxu0 %v193
    %746 = vmatprep.subr.mxu0 %v190
    %747 = vmatpush1.msra.mxu0 %v189
    %748 = vmatprep.subr.mxu0 %v314
    %749 = vmatpush2.msra.mxu0 %v313
    %750 = vmatprep.subr.mxu0 %v310
    %751 = vmatpush2.msra.mxu0 %v309
    %752 = vmatprep.subr.mxu0 %v306
    %753 = vmatpush2.msra.mxu0 %v305
    %754 = vmatprep.subr.mxu0 %v302
    %755 = vmatpush2.msra.mxu0 %v301
    %756 = vmatprep.subr.mxu0 %v298
    %757 = vmatpush2.msra.mxu0 %v297
    %758 = vmatprep.subr.mxu0 %v294
    %759 = vmatpush2.msra.mxu0 %v293
    %760 = vmatprep.subr.mxu0 %v290
    %761 = vmatpush2.msra.mxu0 %v289
    %762 = vmatprep.subr.mxu0 %v286
    %763 = vmatpush2.msra.mxu0 %v285
    %764 = vmatprep.subr.mxu0 %v282
    %765 = vmatpush2.msra.mxu0 %v281
    %766 = vmatprep.subr.mxu0 %v278
    %767 = vmatpush2.msra.mxu0 %v277
    %768 = vmatprep.subr.mxu0 %v274
    %769 = vmatpush2.msra.mxu0 %v273
    %770 = vmatprep.subr.mxu0 %v270
    %771 = vmatpush2.msra.mxu0 %v269
    %772 = vmatprep.subr.mxu0 %v266
    %773 = vmatpush2.msra.mxu0 %v265
    %774 = vmatprep.subr.mxu0 %v262
    %775 = vmatpush2.msra.mxu0 %v261
    %776 = vmatprep.subr.mxu0 %v258
    %777 = vmatpush2.msra.mxu0 %v257
    %778 = vmatprep.subr.mxu0 %v254
    %779 = vmatpush2.msra.mxu0 %v253
    %780 = vmatprep.mubr.f32.mxu0 %v42
    %781 = vmatmul.mubr.f32.gmra.mxu0 %v41
    %v782 = vpop.f32.mrf.mxu0
    %v783 = vadd.f32 %v694, %v782
    %v784 = vpop.f32.mrf.mxu0
    %v785 = vadd.f32 %v696, %v784
    %786 = vmatprep.mubr.f32.mxu0 %v47
    %787 = vmatmul.mubr.f32.gmra.mxu0 %v46
    %v788 = vpop.f32.mrf.mxu0
    %v789 = vadd.f32 %v700, %v788
    %v790 = vpop.f32.mrf.mxu0
    %v791 = vadd.f32 %v702, %v790
    %792 = vmatprep.mubr.f32.mxu0 %v52
    %793 = vmatmul.mubr.f32.gmra.mxu0 %v51
    %v794 = vpop.f32.mrf.mxu0
    %v795 = vadd.f32 %v706, %v794
    %v796 = vpop.f32.mrf.mxu0
    %v797 = vadd.f32 %v708, %v796
    %798 = vmatprep.mubr.f32.mxu0 %v57
    %799 = vmatmul.mubr.f32.gmra.mxu0 %v56
    %v800 = vpop.f32.mrf.mxu0
    %v801 = vadd.f32 %v712, %v800
    %v802 = vpop.f32.mrf.mxu0
    %v803 = vadd.f32 %v714, %v802
    %804 = vdwg.mxu0
    %805 = vmatprep.subr.mxu0 0.0
    %806 = vmatpush1.msra.mxu0 0.0
    %807 = vmatprep.subr.mxu0 0.0
    %808 = vmatpush1.msra.mxu0 0.0
    %809 = vmatprep.subr.mxu0 0.0
    %810 = vmatpush1.msra.mxu0 0.0
    %811 = vmatprep.subr.mxu0 0.0
    %812 = vmatpush1.msra.mxu0 0.0
    %813 = vmatprep.subr.mxu0 0.0
    %814 = vmatpush1.msra.mxu0 0.0
    %815 = vmatprep.subr.mxu0 0.0
    %816 = vmatpush1.msra.mxu0 0.0
    %817 = vmatprep.subr.mxu0 0.0
    %818 = vmatpush1.msra.mxu0 0.0
    %819 = vmatprep.subr.mxu0 0.0
    %820 = vmatpush1.msra.mxu0 0.0
    %821 = vmatprep.subr.mxu0 %v346
    %822 = vmatpush1.msra.mxu0 %v345
    %823 = vmatprep.subr.mxu0 %v342
    %824 = vmatpush1.msra.mxu0 %v341
    %825 = vmatprep.subr.mxu0 %v338
    %826 = vmatpush1.msra.mxu0 %v337
    %827 = vmatprep.subr.mxu0 %v334
    %828 = vmatpush1.msra.mxu0 %v333
    %829 = vmatprep.subr.mxu0 %v330
    %830 = vmatpush1.msra.mxu0 %v329
    %831 = vmatprep.subr.mxu0 %v326
    %832 = vmatpush1.msra.mxu0 %v325
    %833 = vmatprep.subr.mxu0 %v322
    %834 = vmatpush1.msra.mxu0 %v321
    %835 = vmatprep.subr.mxu0 %v318
    %836 = vmatpush1.msra.mxu0 %v317
    %837 = vmatprep.subr.mxu0 0.0
    %838 = vmatpush2.msra.mxu0 0.0
    %839 = vmatprep.subr.mxu0 0.0
    %840 = vmatpush2.msra.mxu0 0.0
    %841 = vmatprep.subr.mxu0 0.0
    %842 = vmatpush2.msra.mxu0 0.0
    %843 = vmatprep.subr.mxu0 0.0
    %844 = vmatpush2.msra.mxu0 0.0
    %845 = vmatprep.subr.mxu0 0.0
    %846 = vmatpush2.msra.mxu0 0.0
    %847 = vmatprep.subr.mxu0 0.0
    %848 = vmatpush2.msra.mxu0 0.0
    %849 = vmatprep.subr.mxu0 0.0
    %850 = vmatpush2.msra.mxu0 0.0
    %851 = vmatprep.subr.mxu0 0.0
    %852 = vmatpush2.msra.mxu0 0.0
    %853 = vmatprep.subr.mxu0 0.0
    %854 = vmatpush2.msra.mxu0 0.0
    %855 = vmatprep.subr.mxu0 0.0
    %856 = vmatpush2.msra.mxu0 0.0
    %857 = vmatprep.subr.mxu0 0.0
    %858 = vmatpush2.msra.mxu0 0.0
    %859 = vmatprep.subr.mxu0 0.0
    %860 = vmatpush2.msra.mxu0 0.0
    %861 = vmatprep.subr.mxu0 0.0
    %862 = vmatpush2.msra.mxu0 0.0
    %863 = vmatprep.subr.mxu0 0.0
    %864 = vmatpush2.msra.mxu0 0.0
    %865 = vmatprep.subr.mxu0 0.0
    %866 = vmatpush2.msra.mxu0 0.0
    %867 = vmatprep.subr.mxu0 0.0
    %868 = vmatpush2.msra.mxu0 0.0
    %869 = vmatprep.mubr.f32.mxu0 0.0
    %870 = vmatmul.mubr.f32.gmra.mxu0 %v349
    %v871 = vpop.f32.mrf.mxu0
    %v872 = vadd.f32 %v783, %v871
    %v873 = vpop.f32.mrf.mxu0
    %v874 = vadd.f32 %v785, %v873
    %875 = vmatprep.mubr.f32.mxu0 0.0
    %876 = vmatmul.mubr.f32.gmra.mxu0 %v352
    %v877 = vpop.f32.mrf.mxu0
    %v878 = vadd.f32 %v789, %v877
    %v879 = vpop.f32.mrf.mxu0
    %v880 = vadd.f32 %v791, %v879
    %881 = vmatprep.mubr.f32.mxu0 0.0
    %882 = vmatmul.mubr.f32.gmra.mxu0 %v355
    %v883 = vpop.f32.mrf.mxu0
    %v884 = vadd.f32 %v795, %v883
    %v885 = vpop.f32.mrf.mxu0
    %v886 = vadd.f32 %v797, %v885
    %887 = vmatprep.mubr.f32.mxu0 0.0
    %888 = vmatmul.mubr.f32.gmra.mxu0 %v358
    %v889 = vpop.f32.mrf.mxu0
    %v890 = vadd.f32 %v801, %v889
    %v891 = vpop.f32.mrf.mxu0
    %v892 = vadd.f32 %v803, %v891
    %893 = vdwg.mxu0
    %v894 = vmax.f32 %v605, %v607
    %v895 = vmax.f32 %v611, %v613
    %v896 = vmax.f32 %v617, %v619
    %v897 = vmax.f32 %v623, %v625
    %v898 = vmax.f32 %v872, %v874
    %v899 = vmax.f32 %v878, %v880
    %v900 = vmax.f32 %v884, %v886
    %v901 = vmax.f32 %v890, %v892
    %v902 = vmax.f32 %v894, %v898
    %v903 = vmax.f32 %v895, %v899
    %v904 = vmax.f32 %v896, %v900
    %v905 = vmax.f32 %v897, %v901
    %v906 = vld [vmem:[%s2] sm:$0x1]
    %v908 = vlaneseq
    %v909 = vshrl.u32 %v908, 7
    %v910 = vsub.s32 0, %v909
    %v911 = vrot.slane %v906, %v910
    %v913 = vadd.f32 %v902, %v911
    %v914 = vadd.f32 %v903, %v911
    %v915 = vadd.f32 %v904, %v911
    %v916 = vadd.f32 %v905, %v911
    %v917 = vtanh.pop %v913
    %v918 = vtanh.pop %v914
    %v919 = vtanh.pop %v915
    %v920 = vtanh.pop %v916
    %921 = vst [vmem:[#allocation2] sm:$0xff] %v917
    %922 = vst [vmem:[#allocation2 + $0x8] sm:$0xff] %v918
    %923 = vst [vmem:[#allocation2 + $0x10] sm:$0xff] %v919
    %924 = vst [vmem:[#allocation2 + $0x18] sm:$0xf] %v920
    %v925 = vld [vmem:[#allocation2] ss:$2 sm:$0x1f]
    %s926 = scalar_lea.vmem [#allocation2], 14
    %v927 = vld [vmem:[%s926] ss:$2 sm:$0x1f]
    %v929 = vrot.slane %v927, 3
    %vm931 = vcmask 1044480
    %v932 = vsel %vm931, %v925, %v929
    %v933 = vld [vmem:[%s3] sm:$0xff]
    %v934 = vld [vmem:[%s3 + $0x8] sm:$0xff]
    %v935 = vld [vmem:[%s3 + $0x10] sm:$0xff]
    %v936 = vld [vmem:[%s3 + $0x18] sm:$0xff]
    %v937 = vld [vmem:[%s3 + $0x20] sm:$0xff]
    %v938 = vld [vmem:[%s3 + $0x28] sm:$0xff]
    %v939 = vld [vmem:[%s3 + $0x30] sm:$0xff]
    %v940 = vld [vmem:[%s3 + $0x38] sm:$0xff]
    %v941 = vld [vmem:[%s3 + $0x40] sm:$0xff]
    %v942 = vld [vmem:[%s3 + $0x48] sm:$0xff]
    %v943 = vld [vmem:[%s3 + $0x50] sm:$0xff]
    %v944 = vld [vmem:[%s3 + $0x58] sm:$0xff]
    %v945 = vld [vmem:[%s3 + $0x60] sm:$0xff]
    %v946 = vld [vmem:[%s3 + $0x68] sm:$0xff]
    %v947 = vld [vmem:[%s3 + $0x70] sm:$0xff]
    %v948 = vld [vmem:[%s3 + $0x78] sm:$0xff]
    %v949 = vld [vmem:[%s3 + $0x80] sm:$0xff]
    %v950 = vld [vmem:[%s3 + $0x88] sm:$0xff]
    %v951 = vld [vmem:[%s3 + $0x90] sm:$0xff]
    %v952 = vld [vmem:[%s3 + $0x98] sm:$0xff]
    %v953 = vld [vmem:[%s3 + $0xa0] sm:$0xff]
    %v954 = vld [vmem:[%s3 + $0xa8] sm:$0xff]
    %v955 = vld [vmem:[%s3 + $0xb0] sm:$0xff]
    %v956 = vld [vmem:[%s3 + $0xb8] sm:$0xff]
    %v957 = vld [vmem:[%s3 + $0xc0] sm:$0xff]
    %v958 = vld [vmem:[%s3 + $0xc8] sm:$0xff]
    %v959 = vld [vmem:[%s3 + $0xd0] sm:$0xff]
    %v960 = vld [vmem:[%s3 + $0xd8] sm:$0xff]
    %v961 = vld [vmem:[%s3 + $0xe0] sm:$0xff]
    %v962 = vld [vmem:[%s3 + $0xe8] sm:$0xff]
    %v963 = vld [vmem:[%s3 + $0xf0] sm:$0xff]
    %v964 = vld [vmem:[%s3 + $0xf8] sm:$0xff]
    %v965 = vld [vmem:[%s3 + $0x100] sm:$0xff]
    %v966 = vld [vmem:[%s3 + $0x108] sm:$0xff]
    %v967 = vld [vmem:[%s3 + $0x110] sm:$0xff]
    %v968 = vld [vmem:[%s3 + $0x118] sm:$0xff]
    %v969 = vld [vmem:[%s3 + $0x120] sm:$0xff]
    %v970 = vld [vmem:[%s3 + $0x128] sm:$0xff]
    %v971 = vld [vmem:[%s3 + $0x130] sm:$0xff]
    %v972 = vld [vmem:[%s3 + $0x138] sm:$0xff]
    %v973 = vld [vmem:[%s3 + $0x140] sm:$0xff]
    %v974 = vld [vmem:[%s3 + $0x148] sm:$0xff]
    %v975 = vld [vmem:[%s3 + $0x150] sm:$0xff]
    %v976 = vld [vmem:[%s3 + $0x158] sm:$0xff]
    %v977 = vld [vmem:[%s3 + $0x160] sm:$0xff]
    %v978 = vld [vmem:[%s3 + $0x168] sm:$0xff]
    %v979 = vld [vmem:[%s3 + $0x170] sm:$0xff]
    %v980 = vld [vmem:[%s3 + $0x178] sm:$0xff]
    %v981 = vld [vmem:[%s3 + $0x180] sm:$0xff]
    %v982 = vld [vmem:[%s3 + $0x188] sm:$0xff]
    %v983 = vld [vmem:[%s3 + $0x190] sm:$0xff]
    %v984 = vld [vmem:[%s3 + $0x198] sm:$0xff]
    %v985 = vld [vmem:[%s3 + $0x1a0] sm:$0xff]
    %v986 = vld [vmem:[%s3 + $0x1a8] sm:$0xff]
    %v987 = vld [vmem:[%s3 + $0x1b0] sm:$0xff]
    %v988 = vld [vmem:[%s3 + $0x1b8] sm:$0xff]
    %v989 = vld [vmem:[%s3 + $0x1c0] sm:$0xff]
    %v990 = vld [vmem:[%s3 + $0x1c8] sm:$0xff]
    %v991 = vld [vmem:[%s3 + $0x1d0] sm:$0xff]
    %v992 = vld [vmem:[%s3 + $0x1d8] sm:$0xff]
    %v993 = vld [vmem:[%s3 + $0x1e0] sm:$0xff]
    %v994 = vld [vmem:[%s3 + $0x1e8] sm:$0xff]
    %v995 = vld [vmem:[%s3 + $0x1f0] sm:$0xff]
    %v996 = vld [vmem:[%s3 + $0x1f8] sm:$0xff]
    %s997 = scalar_lea.vmem [#allocation2], 1
    %v998 = vld [vmem:[%s997] ss:$2 sm:$0x1f]
    %s999 = scalar_lea.vmem [#allocation2], 15
    %v1000 = vld [vmem:[%s999] ss:$2 sm:$0x1f]
    %v1002 = vrot.slane %v1000, 3
    %v1004 = vsel %vm931, %v998, %v1002
    %s1005 = scalar_lea.vmem %s3, 512
    %v1006 = vld [vmem:[%s1005] sm:$0xff]
    %v1007 = vld [vmem:[%s1005 + $0x8] sm:$0xff]
    %v1008 = vld [vmem:[%s1005 + $0x10] sm:$0xff]
    %v1009 = vld [vmem:[%s1005 + $0x18] sm:$0xff]
    %v1010 = vld [vmem:[%s1005 + $0x20] sm:$0xff]
    %v1011 = vld [vmem:[%s1005 + $0x28] sm:$0xff]
    %v1012 = vld [vmem:[%s1005 + $0x30] sm:$0xff]
    %v1013 = vld [vmem:[%s1005 + $0x38] sm:$0xff]
    %v1014 = vld [vmem:[%s1005 + $0x40] sm:$0xff]
    %v1015 = vld [vmem:[%s1005 + $0x48] sm:$0xff]
    %v1016 = vld [vmem:[%s1005 + $0x50] sm:$0xff]
    %v1017 = vld [vmem:[%s1005 + $0x58] sm:$0xff]
    %v1018 = vld [vmem:[%s1005 + $0x60] sm:$0xff]
    %v1019 = vld [vmem:[%s1005 + $0x68] sm:$0xff]
    %v1020 = vld [vmem:[%s1005 + $0x70] sm:$0xff]
    %v1021 = vld [vmem:[%s1005 + $0x78] sm:$0xff]
    %v1022 = vld [vmem:[%s1005 + $0x80] sm:$0xff]
    %v1023 = vld [vmem:[%s1005 + $0x88] sm:$0xff]
    %v1024 = vld [vmem:[%s1005 + $0x90] sm:$0xff]
    %v1025 = vld [vmem:[%s1005 + $0x98] sm:$0xff]
    %v1026 = vld [vmem:[%s1005 + $0xa0] sm:$0xff]
    %v1027 = vld [vmem:[%s1005 + $0xa8] sm:$0xff]
    %v1028 = vld [vmem:[%s1005 + $0xb0] sm:$0xff]
    %v1029 = vld [vmem:[%s1005 + $0xb8] sm:$0xff]
    %v1030 = vld [vmem:[%s1005 + $0xc0] sm:$0xff]
    %v1031 = vld [vmem:[%s1005 + $0xc8] sm:$0xff]
    %v1032 = vld [vmem:[%s1005 + $0xd0] sm:$0xff]
    %v1033 = vld [vmem:[%s1005 + $0xd8] sm:$0xff]
    %v1034 = vld [vmem:[%s1005 + $0xe0] sm:$0xff]
    %v1035 = vld [vmem:[%s1005 + $0xe8] sm:$0xff]
    %v1036 = vld [vmem:[%s1005 + $0xf0] sm:$0xff]
    %v1037 = vld [vmem:[%s1005 + $0xf8] sm:$0xff]
    %v1038 = vld [vmem:[%s1005 + $0x100] sm:$0xff]
    %v1039 = vld [vmem:[%s1005 + $0x108] sm:$0xff]
    %v1040 = vld [vmem:[%s1005 + $0x110] sm:$0xff]
    %v1041 = vld [vmem:[%s1005 + $0x118] sm:$0xff]
    %v1042 = vld [vmem:[%s1005 + $0x120] sm:$0xff]
    %v1043 = vld [vmem:[%s1005 + $0x128] sm:$0xff]
    %v1044 = vld [vmem:[%s1005 + $0x130] sm:$0xff]
    %v1045 = vld [vmem:[%s1005 + $0x138] sm:$0xff]
    %v1046 = vld [vmem:[%s1005 + $0x140] sm:$0xff]
    %v1047 = vld [vmem:[%s1005 + $0x148] sm:$0xff]
    %v1048 = vld [vmem:[%s1005 + $0x150] sm:$0xff]
    %v1049 = vld [vmem:[%s1005 + $0x158] sm:$0xff]
    %v1050 = vld [vmem:[%s1005 + $0x160] sm:$0xff]
    %v1051 = vld [vmem:[%s1005 + $0x168] sm:$0xff]
    %v1052 = vld [vmem:[%s1005 + $0x170] sm:$0xff]
    %v1053 = vld [vmem:[%s1005 + $0x178] sm:$0xff]
    %v1054 = vld [vmem:[%s1005 + $0x180] sm:$0xff]
    %v1055 = vld [vmem:[%s1005 + $0x188] sm:$0xff]
    %v1056 = vld [vmem:[%s1005 + $0x190] sm:$0xff]
    %v1057 = vld [vmem:[%s1005 + $0x198] sm:$0xff]
    %v1058 = vld [vmem:[%s1005 + $0x1a0] sm:$0xff]
    %v1059 = vld [vmem:[%s1005 + $0x1a8] sm:$0xff]
    %v1060 = vld [vmem:[%s1005 + $0x1b0] sm:$0xff]
    %v1061 = vld [vmem:[%s1005 + $0x1b8] sm:$0xff]
    %v1062 = vld [vmem:[%s1005 + $0x1c0] sm:$0xff]
    %v1063 = vld [vmem:[%s1005 + $0x1c8] sm:$0xff]
    %v1064 = vld [vmem:[%s1005 + $0x1d0] sm:$0xff]
    %v1065 = vld [vmem:[%s1005 + $0x1d8] sm:$0xff]
    %v1066 = vld [vmem:[%s1005 + $0x1e0] sm:$0xff]
    %v1067 = vld [vmem:[%s1005 + $0x1e8] sm:$0xff]
    %v1068 = vld [vmem:[%s1005 + $0x1f0] sm:$0xff]
    %v1069 = vld [vmem:[%s1005 + $0x1f8] sm:$0xff]
    %1070 = vmatprep.subr.mxu0 %v1067
    %1071 = vmatpush1.msra.mxu0 %v1066
    %1072 = vmatprep.subr.mxu0 %v1063
    %1073 = vmatpush1.msra.mxu0 %v1062
    %1074 = vmatprep.subr.mxu0 %v1059
    %1075 = vmatpush1.msra.mxu0 %v1058
    %1076 = vmatprep.subr.mxu0 %v1055
    %1077 = vmatpush1.msra.mxu0 %v1054
    %1078 = vmatprep.subr.mxu0 %v1051
    %1079 = vmatpush1.msra.mxu0 %v1050
    %1080 = vmatprep.subr.mxu0 %v1047
    %1081 = vmatpush1.msra.mxu0 %v1046
    %1082 = vmatprep.subr.mxu0 %v1043
    %1083 = vmatpush1.msra.mxu0 %v1042
    %1084 = vmatprep.subr.mxu0 %v1039
    %1085 = vmatpush1.msra.mxu0 %v1038
    %1086 = vmatprep.subr.mxu0 %v1035
    %1087 = vmatpush1.msra.mxu0 %v1034
    %1088 = vmatprep.subr.mxu0 %v1031
    %1089 = vmatpush1.msra.mxu0 %v1030
    %1090 = vmatprep.subr.mxu0 %v1027
    %1091 = vmatpush1.msra.mxu0 %v1026
    %1092 = vmatprep.subr.mxu0 %v1023
    %1093 = vmatpush1.msra.mxu0 %v1022
    %1094 = vmatprep.subr.mxu0 %v1019
    %1095 = vmatpush1.msra.mxu0 %v1018
    %1096 = vmatprep.subr.mxu0 %v1015
    %1097 = vmatpush1.msra.mxu0 %v1014
    %1098 = vmatprep.subr.mxu0 %v1011
    %1099 = vmatpush1.msra.mxu0 %v1010
    %1100 = vmatprep.subr.mxu0 %v1007
    %1101 = vmatpush1.msra.mxu0 %v1006
    %1102 = vmatprep.subr.mxu0 0.0
    %1103 = vmatpush2.msra.mxu0 0.0
    %1104 = vmatprep.subr.mxu0 0.0
    %1105 = vmatpush2.msra.mxu0 0.0
    %1106 = vmatprep.subr.mxu0 0.0
    %1107 = vmatpush2.msra.mxu0 0.0
    %1108 = vmatprep.subr.mxu0 0.0
    %1109 = vmatpush2.msra.mxu0 0.0
    %1110 = vmatprep.subr.mxu0 0.0
    %1111 = vmatpush2.msra.mxu0 0.0
    %1112 = vmatprep.subr.mxu0 0.0
    %1113 = vmatpush2.msra.mxu0 0.0
    %1114 = vmatprep.subr.mxu0 0.0
    %1115 = vmatpush2.msra.mxu0 0.0
    %1116 = vmatprep.subr.mxu0 0.0
    %1117 = vmatpush2.msra.mxu0 0.0
    %1118 = vmatprep.subr.mxu0 0.0
    %1119 = vmatpush2.msra.mxu0 0.0
    %1120 = vmatprep.subr.mxu0 0.0
    %1121 = vmatpush2.msra.mxu0 0.0
    %1122 = vmatprep.subr.mxu0 0.0
    %1123 = vmatpush2.msra.mxu0 0.0
    %1124 = vmatprep.subr.mxu0 0.0
    %1125 = vmatpush2.msra.mxu0 0.0
    %1126 = vmatprep.subr.mxu0 0.0
    %1127 = vmatpush2.msra.mxu0 0.0
    %1128 = vmatprep.subr.mxu0 0.0
    %1129 = vmatpush2.msra.mxu0 0.0
    %1130 = vmatprep.subr.mxu0 0.0
    %1131 = vmatpush2.msra.mxu0 0.0
    %1132 = vmatprep.subr.mxu0 0.0
    %1133 = vmatpush2.msra.mxu0 0.0
    %1134 = vmatprep.mubr.f32.mxu0 0.0
    %1135 = vmatmul.mubr.f32.gmra.mxu0 %v1004
    %v1136 = vpop.f32.mrf.mxu0
    %v1137 = vadd.f32 0.0, %v1136
    %v1138 = vpop.f32.mrf.mxu0
    %v1139 = vadd.f32 0.0, %v1138
    %1140 = vmatprep.mubr.f32.mxu0 0.0
    %1141 = vmatmul.mubr.f32.gmra.mxu0 %v1002
    %v1142 = vpop.f32.mrf.mxu0
    %v1143 = vadd.f32 0.0, %v1142
    %v1144 = vpop.f32.mrf.mxu0
    %v1145 = vadd.f32 0.0, %v1144
    %1146 = vdwg.mxu0
    %1147 = vmatprep.subr.mxu0 %v1069
    %1148 = vmatpush1.msra.mxu0 %v1068
    %1149 = vmatprep.subr.mxu0 %v1065
    %1150 = vmatpush1.msra.mxu0 %v1064
    %1151 = vmatprep.subr.mxu0 %v1061
    %1152 = vmatpush1.msra.mxu0 %v1060
    %1153 = vmatprep.subr.mxu0 %v1057
    %1154 = vmatpush1.msra.mxu0 %v1056
    %1155 = vmatprep.subr.mxu0 %v1053
    %1156 = vmatpush1.msra.mxu0 %v1052
    %1157 = vmatprep.subr.mxu0 %v1049
    %1158 = vmatpush1.msra.mxu0 %v1048
    %1159 = vmatprep.subr.mxu0 %v1045
    %1160 = vmatpush1.msra.mxu0 %v1044
    %1161 = vmatprep.subr.mxu0 %v1041
    %1162 = vmatpush1.msra.mxu0 %v1040
    %1163 = vmatprep.subr.mxu0 %v1037
    %1164 = vmatpush1.msra.mxu0 %v1036
    %1165 = vmatprep.subr.mxu0 %v1033
    %1166 = vmatpush1.msra.mxu0 %v1032
    %1167 = vmatprep.subr.mxu0 %v1029
    %1168 = vmatpush1.msra.mxu0 %v1028
    %1169 = vmatprep.subr.mxu0 %v1025
    %1170 = vmatpush1.msra.mxu0 %v1024
    %1171 = vmatprep.subr.mxu0 %v1021
    %1172 = vmatpush1.msra.mxu0 %v1020
    %1173 = vmatprep.subr.mxu0 %v1017
    %1174 = vmatpush1.msra.mxu0 %v1016
    %1175 = vmatprep.subr.mxu0 %v1013
    %1176 = vmatpush1.msra.mxu0 %v1012
    %1177 = vmatprep.subr.mxu0 %v1009
    %1178 = vmatpush1.msra.mxu0 %v1008
    %1179 = vmatprep.subr.mxu0 0.0
    %1180 = vmatpush2.msra.mxu0 0.0
    %1181 = vmatprep.subr.mxu0 0.0
    %1182 = vmatpush2.msra.mxu0 0.0
    %1183 = vmatprep.subr.mxu0 0.0
    %1184 = vmatpush2.msra.mxu0 0.0
    %1185 = vmatprep.subr.mxu0 0.0
    %1186 = vmatpush2.msra.mxu0 0.0
    %1187 = vmatprep.subr.mxu0 0.0
    %1188 = vmatpush2.msra.mxu0 0.0
    %1189 = vmatprep.subr.mxu0 0.0
    %1190 = vmatpush2.msra.mxu0 0.0
    %1191 = vmatprep.subr.mxu0 0.0
    %1192 = vmatpush2.msra.mxu0 0.0
    %1193 = vmatprep.subr.mxu0 0.0
    %1194 = vmatpush2.msra.mxu0 0.0
    %1195 = vmatprep.subr.mxu0 0.0
    %1196 = vmatpush2.msra.mxu0 0.0
    %1197 = vmatprep.subr.mxu0 0.0
    %1198 = vmatpush2.msra.mxu0 0.0
    %1199 = vmatprep.subr.mxu0 0.0
    %1200 = vmatpush2.msra.mxu0 0.0
    %1201 = vmatprep.subr.mxu0 0.0
    %1202 = vmatpush2.msra.mxu0 0.0
    %1203 = vmatprep.subr.mxu0 0.0
    %1204 = vmatpush2.msra.mxu0 0.0
    %1205 = vmatprep.subr.mxu0 0.0
    %1206 = vmatpush2.msra.mxu0 0.0
    %1207 = vmatprep.subr.mxu0 0.0
    %1208 = vmatpush2.msra.mxu0 0.0
    %1209 = vmatprep.subr.mxu0 0.0
    %1210 = vmatpush2.msra.mxu0 0.0
    %1211 = vmatprep.mubr.f32.mxu0 0.0
    %1212 = vmatmul.mubr.f32.gmra.mxu0 %v1004
    %v1213 = vpop.f32.mrf.mxu0
    %v1214 = vadd.f32 0.0, %v1213
    %v1215 = vpop.f32.mrf.mxu0
    %v1216 = vadd.f32 0.0, %v1215
    %1217 = vmatprep.mubr.f32.mxu0 0.0
    %1218 = vmatmul.mubr.f32.gmra.mxu0 %v1002
    %v1219 = vpop.f32.mrf.mxu0
    %v1220 = vadd.f32 0.0, %v1219
    %v1221 = vpop.f32.mrf.mxu0
    %v1222 = vadd.f32 0.0, %v1221
    %1223 = vdwg.mxu0
    %1224 = vmatprep.subr.mxu0 %v994
    %1225 = vmatpush1.msra.mxu0 %v993
    %1226 = vmatprep.subr.mxu0 %v990
    %1227 = vmatpush1.msra.mxu0 %v989
    %1228 = vmatprep.subr.mxu0 %v986
    %1229 = vmatpush1.msra.mxu0 %v985
    %1230 = vmatprep.subr.mxu0 %v982
    %1231 = vmatpush1.msra.mxu0 %v981
    %1232 = vmatprep.subr.mxu0 %v978
    %1233 = vmatpush1.msra.mxu0 %v977
    %1234 = vmatprep.subr.mxu0 %v974
    %1235 = vmatpush1.msra.mxu0 %v973
    %1236 = vmatprep.subr.mxu0 %v970
    %1237 = vmatpush1.msra.mxu0 %v969
    %1238 = vmatprep.subr.mxu0 %v966
    %1239 = vmatpush1.msra.mxu0 %v965
    %1240 = vmatprep.subr.mxu0 %v962
    %1241 = vmatpush1.msra.mxu0 %v961
    %1242 = vmatprep.subr.mxu0 %v958
    %1243 = vmatpush1.msra.mxu0 %v957
    %1244 = vmatprep.subr.mxu0 %v954
    %1245 = vmatpush1.msra.mxu0 %v953
    %1246 = vmatprep.subr.mxu0 %v950
    %1247 = vmatpush1.msra.mxu0 %v949
    %1248 = vmatprep.subr.mxu0 %v946
    %1249 = vmatpush1.msra.mxu0 %v945
    %1250 = vmatprep.subr.mxu0 %v942
    %1251 = vmatpush1.msra.mxu0 %v941
    %1252 = vmatprep.subr.mxu0 %v938
    %1253 = vmatpush1.msra.mxu0 %v937
    %1254 = vmatprep.subr.mxu0 %v934
    %1255 = vmatpush1.msra.mxu0 %v933
    %1256 = vmatprep.subr.mxu0 0.0
    %1257 = vmatpush2.msra.mxu0 0.0
    %1258 = vmatprep.subr.mxu0 0.0
    %1259 = vmatpush2.msra.mxu0 0.0
    %1260 = vmatprep.subr.mxu0 0.0
    %1261 = vmatpush2.msra.mxu0 0.0
    %1262 = vmatprep.subr.mxu0 0.0
    %1263 = vmatpush2.msra.mxu0 0.0
    %1264 = vmatprep.subr.mxu0 0.0
    %1265 = vmatpush2.msra.mxu0 0.0
    %1266 = vmatprep.subr.mxu0 0.0
    %1267 = vmatpush2.msra.mxu0 0.0
    %1268 = vmatprep.subr.mxu0 0.0
    %1269 = vmatpush2.msra.mxu0 0.0
    %1270 = vmatprep.subr.mxu0 0.0
    %1271 = vmatpush2.msra.mxu0 0.0
    %1272 = vmatprep.subr.mxu0 0.0
    %1273 = vmatpush2.msra.mxu0 0.0
    %1274 = vmatprep.subr.mxu0 0.0
    %1275 = vmatpush2.msra.mxu0 0.0
    %1276 = vmatprep.subr.mxu0 0.0
    %1277 = vmatpush2.msra.mxu0 0.0
    %1278 = vmatprep.subr.mxu0 0.0
    %1279 = vmatpush2.msra.mxu0 0.0
    %1280 = vmatprep.subr.mxu0 0.0
    %1281 = vmatpush2.msra.mxu0 0.0
    %1282 = vmatprep.subr.mxu0 0.0
    %1283 = vmatpush2.msra.mxu0 0.0
    %1284 = vmatprep.subr.mxu0 0.0
    %1285 = vmatpush2.msra.mxu0 0.0
    %1286 = vmatprep.subr.mxu0 0.0
    %1287 = vmatpush2.msra.mxu0 0.0
    %1288 = vmatprep.mubr.f32.mxu0 0.0
    %1289 = vmatmul.mubr.f32.gmra.mxu0 %v932
    %v1290 = vpop.f32.mrf.mxu0
    %v1291 = vadd.f32 %v1137, %v1290
    %v1292 = vpop.f32.mrf.mxu0
    %v1293 = vadd.f32 %v1139, %v1292
    %1294 = vmatprep.mubr.f32.mxu0 0.0
    %1295 = vmatmul.mubr.f32.gmra.mxu0 %v929
    %v1296 = vpop.f32.mrf.mxu0
    %v1297 = vadd.f32 %v1143, %v1296
    %v1298 = vpop.f32.mrf.mxu0
    %v1299 = vadd.f32 %v1145, %v1298
    %1300 = vdwg.mxu0
    %1301 = vmatprep.subr.mxu0 %v996
    %1302 = vmatpush1.msra.mxu0 %v995
    %1303 = vmatprep.subr.mxu0 %v992
    %1304 = vmatpush1.msra.mxu0 %v991
    %1305 = vmatprep.subr.mxu0 %v988
    %1306 = vmatpush1.msra.mxu0 %v987
    %1307 = vmatprep.subr.mxu0 %v984
    %1308 = vmatpush1.msra.mxu0 %v983
    %1309 = vmatprep.subr.mxu0 %v980
    %1310 = vmatpush1.msra.mxu0 %v979
    %1311 = vmatprep.subr.mxu0 %v976
    %1312 = vmatpush1.msra.mxu0 %v975
    %1313 = vmatprep.subr.mxu0 %v972
    %1314 = vmatpush1.msra.mxu0 %v971
    %1315 = vmatprep.subr.mxu0 %v968
    %1316 = vmatpush1.msra.mxu0 %v967
    %1317 = vmatprep.subr.mxu0 %v964
    %1318 = vmatpush1.msra.mxu0 %v963
    %1319 = vmatprep.subr.mxu0 %v960
    %1320 = vmatpush1.msra.mxu0 %v959
    %1321 = vmatprep.subr.mxu0 %v956
    %1322 = vmatpush1.msra.mxu0 %v955
    %1323 = vmatprep.subr.mxu0 %v952
    %1324 = vmatpush1.msra.mxu0 %v951
    %1325 = vmatprep.subr.mxu0 %v948
    %1326 = vmatpush1.msra.mxu0 %v947
    %1327 = vmatprep.subr.mxu0 %v944
    %1328 = vmatpush1.msra.mxu0 %v943
    %1329 = vmatprep.subr.mxu0 %v940
    %1330 = vmatpush1.msra.mxu0 %v939
    %1331 = vmatprep.subr.mxu0 %v936
    %1332 = vmatpush1.msra.mxu0 %v935
    %1333 = vmatprep.subr.mxu0 0.0
    %1334 = vmatpush2.msra.mxu0 0.0
    %1335 = vmatprep.subr.mxu0 0.0
    %1336 = vmatpush2.msra.mxu0 0.0
    %1337 = vmatprep.subr.mxu0 0.0
    %1338 = vmatpush2.msra.mxu0 0.0
    %1339 = vmatprep.subr.mxu0 0.0
    %1340 = vmatpush2.msra.mxu0 0.0
    %1341 = vmatprep.subr.mxu0 0.0
    %1342 = vmatpush2.msra.mxu0 0.0
    %1343 = vmatprep.subr.mxu0 0.0
    %1344 = vmatpush2.msra.mxu0 0.0
    %1345 = vmatprep.subr.mxu0 0.0
    %1346 = vmatpush2.msra.mxu0 0.0
    %1347 = vmatprep.subr.mxu0 0.0
    %1348 = vmatpush2.msra.mxu0 0.0
    %1349 = vmatprep.subr.mxu0 0.0
    %1350 = vmatpush2.msra.mxu0 0.0
    %1351 = vmatprep.subr.mxu0 0.0
    %1352 = vmatpush2.msra.mxu0 0.0
    %1353 = vmatprep.subr.mxu0 0.0
    %1354 = vmatpush2.msra.mxu0 0.0
    %1355 = vmatprep.subr.mxu0 0.0
    %1356 = vmatpush2.msra.mxu0 0.0
    %1357 = vmatprep.subr.mxu0 0.0
    %1358 = vmatpush2.msra.mxu0 0.0
    %1359 = vmatprep.subr.mxu0 0.0
    %1360 = vmatpush2.msra.mxu0 0.0
    %1361 = vmatprep.subr.mxu0 0.0
    %1362 = vmatpush2.msra.mxu0 0.0
    %1363 = vmatprep.subr.mxu0 0.0
    %1364 = vmatpush2.msra.mxu0 0.0
    %1365 = vmatprep.mubr.f32.mxu0 0.0
    %1366 = vmatmul.mubr.f32.gmra.mxu0 %v932
    %v1367 = vpop.f32.mrf.mxu0
    %v1368 = vadd.f32 %v1214, %v1367
    %v1369 = vpop.f32.mrf.mxu0
    %v1370 = vadd.f32 %v1216, %v1369
    %1371 = vmatprep.mubr.f32.mxu0 0.0
    %1372 = vmatmul.mubr.f32.gmra.mxu0 %v929
    %v1373 = vpop.f32.mrf.mxu0
    %v1374 = vadd.f32 %v1220, %v1373
    %v1375 = vpop.f32.mrf.mxu0
    %v1376 = vadd.f32 %v1222, %v1375
    %1377 = vdwg.mxu0
    %s1378 = scalar_lea.vmem [#allocation2], 2
    %v1379 = vld [vmem:[%s1378] ss:$2 sm:$0x1f]
    %s1380 = scalar_lea.vmem [#allocation2], 16
    %v1381 = vld [vmem:[%s1380] ss:$2 sm:$0x1f]
    %v1383 = vrot.slane %v1381, 3
    %v1385 = vsel %vm931, %v1379, %v1383
    %s1386 = scalar_lea.vmem %s3, 1024
    %v1387 = vld [vmem:[%s1386] sm:$0xff]
    %v1388 = vld [vmem:[%s1386 + $0x8] sm:$0xff]
    %v1389 = vld [vmem:[%s1386 + $0x10] sm:$0xff]
    %v1390 = vld [vmem:[%s1386 + $0x18] sm:$0xff]
    %v1391 = vld [vmem:[%s1386 + $0x20] sm:$0xff]
    %v1392 = vld [vmem:[%s1386 + $0x28] sm:$0xff]
    %v1393 = vld [vmem:[%s1386 + $0x30] sm:$0xff]
    %v1394 = vld [vmem:[%s1386 + $0x38] sm:$0xff]
    %v1395 = vld [vmem:[%s1386 + $0x40] sm:$0xff]
    %v1396 = vld [vmem:[%s1386 + $0x48] sm:$0xff]
    %v1397 = vld [vmem:[%s1386 + $0x50] sm:$0xff]
    %v1398 = vld [vmem:[%s1386 + $0x58] sm:$0xff]
    %v1399 = vld [vmem:[%s1386 + $0x60] sm:$0xff]
    %v1400 = vld [vmem:[%s1386 + $0x68] sm:$0xff]
    %v1401 = vld [vmem:[%s1386 + $0x70] sm:$0xff]
    %v1402 = vld [vmem:[%s1386 + $0x78] sm:$0xff]
    %v1403 = vld [vmem:[%s1386 + $0x80] sm:$0xff]
    %v1404 = vld [vmem:[%s1386 + $0x88] sm:$0xff]
    %v1405 = vld [vmem:[%s1386 + $0x90] sm:$0xff]
    %v1406 = vld [vmem:[%s1386 + $0x98] sm:$0xff]
    %v1407 = vld [vmem:[%s1386 + $0xa0] sm:$0xff]
    %v1408 = vld [vmem:[%s1386 + $0xa8] sm:$0xff]
    %v1409 = vld [vmem:[%s1386 + $0xb0] sm:$0xff]
    %v1410 = vld [vmem:[%s1386 + $0xb8] sm:$0xff]
    %v1411 = vld [vmem:[%s1386 + $0xc0] sm:$0xff]
    %v1412 = vld [vmem:[%s1386 + $0xc8] sm:$0xff]
    %v1413 = vld [vmem:[%s1386 + $0xd0] sm:$0xff]
    %v1414 = vld [vmem:[%s1386 + $0xd8] sm:$0xff]
    %v1415 = vld [vmem:[%s1386 + $0xe0] sm:$0xff]
    %v1416 = vld [vmem:[%s1386 + $0xe8] sm:$0xff]
    %v1417 = vld [vmem:[%s1386 + $0xf0] sm:$0xff]
    %v1418 = vld [vmem:[%s1386 + $0xf8] sm:$0xff]
    %v1419 = vld [vmem:[%s1386 + $0x100] sm:$0xff]
    %v1420 = vld [vmem:[%s1386 + $0x108] sm:$0xff]
    %v1421 = vld [vmem:[%s1386 + $0x110] sm:$0xff]
    %v1422 = vld [vmem:[%s1386 + $0x118] sm:$0xff]
    %v1423 = vld [vmem:[%s1386 + $0x120] sm:$0xff]
    %v1424 = vld [vmem:[%s1386 + $0x128] sm:$0xff]
    %v1425 = vld [vmem:[%s1386 + $0x130] sm:$0xff]
    %v1426 = vld [vmem:[%s1386 + $0x138] sm:$0xff]
    %v1427 = vld [vmem:[%s1386 + $0x140] sm:$0xff]
    %v1428 = vld [vmem:[%s1386 + $0x148] sm:$0xff]
    %v1429 = vld [vmem:[%s1386 + $0x150] sm:$0xff]
    %v1430 = vld [vmem:[%s1386 + $0x158] sm:$0xff]
    %v1431 = vld [vmem:[%s1386 + $0x160] sm:$0xff]
    %v1432 = vld [vmem:[%s1386 + $0x168] sm:$0xff]
    %v1433 = vld [vmem:[%s1386 + $0x170] sm:$0xff]
    %v1434 = vld [vmem:[%s1386 + $0x178] sm:$0xff]
    %v1435 = vld [vmem:[%s1386 + $0x180] sm:$0xff]
    %v1436 = vld [vmem:[%s1386 + $0x188] sm:$0xff]
    %v1437 = vld [vmem:[%s1386 + $0x190] sm:$0xff]
    %v1438 = vld [vmem:[%s1386 + $0x198] sm:$0xff]
    %v1439 = vld [vmem:[%s1386 + $0x1a0] sm:$0xff]
    %v1440 = vld [vmem:[%s1386 + $0x1a8] sm:$0xff]
    %v1441 = vld [vmem:[%s1386 + $0x1b0] sm:$0xff]
    %v1442 = vld [vmem:[%s1386 + $0x1b8] sm:$0xff]
    %v1443 = vld [vmem:[%s1386 + $0x1c0] sm:$0xff]
    %v1444 = vld [vmem:[%s1386 + $0x1c8] sm:$0xff]
    %v1445 = vld [vmem:[%s1386 + $0x1d0] sm:$0xff]
    %v1446 = vld [vmem:[%s1386 + $0x1d8] sm:$0xff]
    %v1447 = vld [vmem:[%s1386 + $0x1e0] sm:$0xff]
    %v1448 = vld [vmem:[%s1386 + $0x1e8] sm:$0xff]
    %v1449 = vld [vmem:[%s1386 + $0x1f0] sm:$0xff]
    %v1450 = vld [vmem:[%s1386 + $0x1f8] sm:$0xff]
    %1451 = vmatprep.subr.mxu0 %v1448
    %1452 = vmatpush1.msra.mxu0 %v1447
    %1453 = vmatprep.subr.mxu0 %v1444
    %1454 = vmatpush1.msra.mxu0 %v1443
    %1455 = vmatprep.subr.mxu0 %v1440
    %1456 = vmatpush1.msra.mxu0 %v1439
    %1457 = vmatprep.subr.mxu0 %v1436
    %1458 = vmatpush1.msra.mxu0 %v1435
    %1459 = vmatprep.subr.mxu0 %v1432
    %1460 = vmatpush1.msra.mxu0 %v1431
    %1461 = vmatprep.subr.mxu0 %v1428
    %1462 = vmatpush1.msra.mxu0 %v1427
    %1463 = vmatprep.subr.mxu0 %v1424
    %1464 = vmatpush1.msra.mxu0 %v1423
    %1465 = vmatprep.subr.mxu0 %v1420
    %1466 = vmatpush1.msra.mxu0 %v1419
    %1467 = vmatprep.subr.mxu0 %v1416
    %1468 = vmatpush1.msra.mxu0 %v1415
    %1469 = vmatprep.subr.mxu0 %v1412
    %1470 = vmatpush1.msra.mxu0 %v1411
    %1471 = vmatprep.subr.mxu0 %v1408
    %1472 = vmatpush1.msra.mxu0 %v1407
    %1473 = vmatprep.subr.mxu0 %v1404
    %1474 = vmatpush1.msra.mxu0 %v1403
    %1475 = vmatprep.subr.mxu0 %v1400
    %1476 = vmatpush1.msra.mxu0 %v1399
    %1477 = vmatprep.subr.mxu0 %v1396
    %1478 = vmatpush1.msra.mxu0 %v1395
    %1479 = vmatprep.subr.mxu0 %v1392
    %1480 = vmatpush1.msra.mxu0 %v1391
    %1481 = vmatprep.subr.mxu0 %v1388
    %1482 = vmatpush1.msra.mxu0 %v1387
    %1483 = vmatprep.subr.mxu0 0.0
    %1484 = vmatpush2.msra.mxu0 0.0
    %1485 = vmatprep.subr.mxu0 0.0
    %1486 = vmatpush2.msra.mxu0 0.0
    %1487 = vmatprep.subr.mxu0 0.0
    %1488 = vmatpush2.msra.mxu0 0.0
    %1489 = vmatprep.subr.mxu0 0.0
    %1490 = vmatpush2.msra.mxu0 0.0
    %1491 = vmatprep.subr.mxu0 0.0
    %1492 = vmatpush2.msra.mxu0 0.0
    %1493 = vmatprep.subr.mxu0 0.0
    %1494 = vmatpush2.msra.mxu0 0.0
    %1495 = vmatprep.subr.mxu0 0.0
    %1496 = vmatpush2.msra.mxu0 0.0
    %1497 = vmatprep.subr.mxu0 0.0
    %1498 = vmatpush2.msra.mxu0 0.0
    %1499 = vmatprep.subr.mxu0 0.0
    %1500 = vmatpush2.msra.mxu0 0.0
    %1501 = vmatprep.subr.mxu0 0.0
    %1502 = vmatpush2.msra.mxu0 0.0
    %1503 = vmatprep.subr.mxu0 0.0
    %1504 = vmatpush2.msra.mxu0 0.0
    %1505 = vmatprep.subr.mxu0 0.0
    %1506 = vmatpush2.msra.mxu0 0.0
    %1507 = vmatprep.subr.mxu0 0.0
    %1508 = vmatpush2.msra.mxu0 0.0
    %1509 = vmatprep.subr.mxu0 0.0
    %1510 = vmatpush2.msra.mxu0 0.0
    %1511 = vmatprep.subr.mxu0 0.0
    %1512 = vmatpush2.msra.mxu0 0.0
    %1513 = vmatprep.subr.mxu0 0.0
    %1514 = vmatpush2.msra.mxu0 0.0
    %1515 = vmatprep.mubr.f32.mxu0 0.0
    %1516 = vmatmul.mubr.f32.gmra.mxu0 %v1385
    %v1517 = vpop.f32.mrf.mxu0
    %v1518 = vadd.f32 0.0, %v1517
    %v1519 = vpop.f32.mrf.mxu0
    %v1520 = vadd.f32 0.0, %v1519
    %1521 = vmatprep.mubr.f32.mxu0 0.0
    %1522 = vmatmul.mubr.f32.gmra.mxu0 %v1383
    %v1523 = vpop.f32.mrf.mxu0
    %v1524 = vadd.f32 0.0, %v1523
    %v1525 = vpop.f32.mrf.mxu0
    %v1526 = vadd.f32 0.0, %v1525
    %1527 = vdwg.mxu0
    %1528 = vmatprep.subr.mxu0 %v1450
    %1529 = vmatpush1.msra.mxu0 %v1449
    %1530 = vmatprep.subr.mxu0 %v1446
    %1531 = vmatpush1.msra.mxu0 %v1445
    %1532 = vmatprep.subr.mxu0 %v1442
    %1533 = vmatpush1.msra.mxu0 %v1441
    %1534 = vmatprep.subr.mxu0 %v1438
    %1535 = vmatpush1.msra.mxu0 %v1437
    %1536 = vmatprep.subr.mxu0 %v1434
    %1537 = vmatpush1.msra.mxu0 %v1433
    %1538 = vmatprep.subr.mxu0 %v1430
    %1539 = vmatpush1.msra.mxu0 %v1429
    %1540 = vmatprep.subr.mxu0 %v1426
    %1541 = vmatpush1.msra.mxu0 %v1425
    %1542 = vmatprep.subr.mxu0 %v1422
    %1543 = vmatpush1.msra.mxu0 %v1421
    %1544 = vmatprep.subr.mxu0 %v1418
    %1545 = vmatpush1.msra.mxu0 %v1417
    %1546 = vmatprep.subr.mxu0 %v1414
    %1547 = vmatpush1.msra.mxu0 %v1413
    %1548 = vmatprep.subr.mxu0 %v1410
    %1549 = vmatpush1.msra.mxu0 %v1409
    %1550 = vmatprep.subr.mxu0 %v1406
    %1551 = vmatpush1.msra.mxu0 %v1405
    %1552 = vmatprep.subr.mxu0 %v1402
    %1553 = vmatpush1.msra.mxu0 %v1401
    %1554 = vmatprep.subr.mxu0 %v1398
    %1555 = vmatpush1.msra.mxu0 %v1397
    %1556 = vmatprep.subr.mxu0 %v1394
    %1557 = vmatpush1.msra.mxu0 %v1393
    %1558 = vmatprep.subr.mxu0 %v1390
    %1559 = vmatpush1.msra.mxu0 %v1389
    %1560 = vmatprep.subr.mxu0 0.0
    %1561 = vmatpush2.msra.mxu0 0.0
    %1562 = vmatprep.subr.mxu0 0.0
    %1563 = vmatpush2.msra.mxu0 0.0
    %1564 = vmatprep.subr.mxu0 0.0
    %1565 = vmatpush2.msra.mxu0 0.0
    %1566 = vmatprep.subr.mxu0 0.0
    %1567 = vmatpush2.msra.mxu0 0.0
    %1568 = vmatprep.subr.mxu0 0.0
    %1569 = vmatpush2.msra.mxu0 0.0
    %1570 = vmatprep.subr.mxu0 0.0
    %1571 = vmatpush2.msra.mxu0 0.0
    %1572 = vmatprep.subr.mxu0 0.0
    %1573 = vmatpush2.msra.mxu0 0.0
    %1574 = vmatprep.subr.mxu0 0.0
    %1575 = vmatpush2.msra.mxu0 0.0
    %1576 = vmatprep.subr.mxu0 0.0
    %1577 = vmatpush2.msra.mxu0 0.0
    %1578 = vmatprep.subr.mxu0 0.0
    %1579 = vmatpush2.msra.mxu0 0.0
    %1580 = vmatprep.subr.mxu0 0.0
    %1581 = vmatpush2.msra.mxu0 0.0
    %1582 = vmatprep.subr.mxu0 0.0
    %1583 = vmatpush2.msra.mxu0 0.0
    %1584 = vmatprep.subr.mxu0 0.0
    %1585 = vmatpush2.msra.mxu0 0.0
    %1586 = vmatprep.subr.mxu0 0.0
    %1587 = vmatpush2.msra.mxu0 0.0
    %1588 = vmatprep.subr.mxu0 0.0
    %1589 = vmatpush2.msra.mxu0 0.0
    %1590 = vmatprep.subr.mxu0 0.0
    %1591 = vmatpush2.msra.mxu0 0.0
    %1592 = vmatprep.mubr.f32.mxu0 0.0
    %1593 = vmatmul.mubr.f32.gmra.mxu0 %v1385
    %v1594 = vpop.f32.mrf.mxu0
    %v1595 = vadd.f32 0.0, %v1594
    %v1596 = vpop.f32.mrf.mxu0
    %v1597 = vadd.f32 0.0, %v1596
    %1598 = vmatprep.mubr.f32.mxu0 0.0
    %1599 = vmatmul.mubr.f32.gmra.mxu0 %v1383
    %v1600 = vpop.f32.mrf.mxu0
    %v1601 = vadd.f32 0.0, %v1600
    %v1602 = vpop.f32.mrf.mxu0
    %v1603 = vadd.f32 0.0, %v1602
    %1604 = vdwg.mxu0
    %v1605 = vadd.f32 %v1291, %v1518
    %v1606 = vadd.f32 %v1293, %v1520
    %v1607 = vadd.f32 %v1368, %v1595
    %v1608 = vadd.f32 %v1370, %v1597
    %v1609 = vadd.f32 %v1297, %v1524
    %v1610 = vadd.f32 %v1299, %v1526
    %v1611 = vadd.f32 %v1374, %v1601
    %v1612 = vadd.f32 %v1376, %v1603
    %s1613 = scalar_lea.vmem [#allocation2], 3
    %v1614 = vld [vmem:[%s1613] ss:$2 sm:$0x1f]
    %s1615 = scalar_lea.vmem [#allocation2], 17
    %v1616 = vld [vmem:[%s1615] ss:$2 sm:$0x1f]
    %v1618 = vrot.slane %v1616, 3
    %v1620 = vsel %vm931, %v1614, %v1618
    %s1621 = scalar_lea.vmem %s3, 1536
    %v1622 = vld [vmem:[%s1621] sm:$0xff]
    %v1623 = vld [vmem:[%s1621 + $0x8] sm:$0xff]
    %v1624 = vld [vmem:[%s1621 + $0x10] sm:$0xff]
    %v1625 = vld [vmem:[%s1621 + $0x18] sm:$0xff]
    %v1626 = vld [vmem:[%s1621 + $0x20] sm:$0xff]
    %v1627 = vld [vmem:[%s1621 + $0x28] sm:$0xff]
    %v1628 = vld [vmem:[%s1621 + $0x30] sm:$0xff]
    %v1629 = vld [vmem:[%s1621 + $0x38] sm:$0xff]
    %v1630 = vld [vmem:[%s1621 + $0x40] sm:$0xff]
    %v1631 = vld [vmem:[%s1621 + $0x48] sm:$0xff]
    %v1632 = vld [vmem:[%s1621 + $0x50] sm:$0xff]
    %v1633 = vld [vmem:[%s1621 + $0x58] sm:$0xff]
    %v1634 = vld [vmem:[%s1621 + $0x60] sm:$0xff]
    %v1635 = vld [vmem:[%s1621 + $0x68] sm:$0xff]
    %v1636 = vld [vmem:[%s1621 + $0x70] sm:$0xff]
    %v1637 = vld [vmem:[%s1621 + $0x78] sm:$0xff]
    %v1638 = vld [vmem:[%s1621 + $0x80] sm:$0xff]
    %v1639 = vld [vmem:[%s1621 + $0x88] sm:$0xff]
    %v1640 = vld [vmem:[%s1621 + $0x90] sm:$0xff]
    %v1641 = vld [vmem:[%s1621 + $0x98] sm:$0xff]
    %v1642 = vld [vmem:[%s1621 + $0xa0] sm:$0xff]
    %v1643 = vld [vmem:[%s1621 + $0xa8] sm:$0xff]
    %v1644 = vld [vmem:[%s1621 + $0xb0] sm:$0xff]
    %v1645 = vld [vmem:[%s1621 + $0xb8] sm:$0xff]
    %v1646 = vld [vmem:[%s1621 + $0xc0] sm:$0xff]
    %v1647 = vld [vmem:[%s1621 + $0xc8] sm:$0xff]
    %v1648 = vld [vmem:[%s1621 + $0xd0] sm:$0xff]
    %v1649 = vld [vmem:[%s1621 + $0xd8] sm:$0xff]
    %v1650 = vld [vmem:[%s1621 + $0xe0] sm:$0xff]
    %v1651 = vld [vmem:[%s1621 + $0xe8] sm:$0xff]
    %v1652 = vld [vmem:[%s1621 + $0xf0] sm:$0xff]
    %v1653 = vld [vmem:[%s1621 + $0xf8] sm:$0xff]
    %v1654 = vld [vmem:[%s1621 + $0x100] sm:$0xff]
    %v1655 = vld [vmem:[%s1621 + $0x108] sm:$0xff]
    %v1656 = vld [vmem:[%s1621 + $0x110] sm:$0xff]
    %v1657 = vld [vmem:[%s1621 + $0x118] sm:$0xff]
    %v1658 = vld [vmem:[%s1621 + $0x120] sm:$0xff]
    %v1659 = vld [vmem:[%s1621 + $0x128] sm:$0xff]
    %v1660 = vld [vmem:[%s1621 + $0x130] sm:$0xff]
    %v1661 = vld [vmem:[%s1621 + $0x138] sm:$0xff]
    %v1662 = vld [vmem:[%s1621 + $0x140] sm:$0xff]
    %v1663 = vld [vmem:[%s1621 + $0x148] sm:$0xff]
    %v1664 = vld [vmem:[%s1621 + $0x150] sm:$0xff]
    %v1665 = vld [vmem:[%s1621 + $0x158] sm:$0xff]
    %v1666 = vld [vmem:[%s1621 + $0x160] sm:$0xff]
    %v1667 = vld [vmem:[%s1621 + $0x168] sm:$0xff]
    %v1668 = vld [vmem:[%s1621 + $0x170] sm:$0xff]
    %v1669 = vld [vmem:[%s1621 + $0x178] sm:$0xff]
    %v1670 = vld [vmem:[%s1621 + $0x180] sm:$0xff]
    %v1671 = vld [vmem:[%s1621 + $0x188] sm:$0xff]
    %v1672 = vld [vmem:[%s1621 + $0x190] sm:$0xff]
    %v1673 = vld [vmem:[%s1621 + $0x198] sm:$0xff]
    %v1674 = vld [vmem:[%s1621 + $0x1a0] sm:$0xff]
    %v1675 = vld [vmem:[%s1621 + $0x1a8] sm:$0xff]
    %v1676 = vld [vmem:[%s1621 + $0x1b0] sm:$0xff]
    %v1677 = vld [vmem:[%s1621 + $0x1b8] sm:$0xff]
    %v1678 = vld [vmem:[%s1621 + $0x1c0] sm:$0xff]
    %v1679 = vld [vmem:[%s1621 + $0x1c8] sm:$0xff]
    %v1680 = vld [vmem:[%s1621 + $0x1d0] sm:$0xff]
    %v1681 = vld [vmem:[%s1621 + $0x1d8] sm:$0xff]
    %v1682 = vld [vmem:[%s1621 + $0x1e0] sm:$0xff]
    %v1683 = vld [vmem:[%s1621 + $0x1e8] sm:$0xff]
    %v1684 = vld [vmem:[%s1621 + $0x1f0] sm:$0xff]
    %v1685 = vld [vmem:[%s1621 + $0x1f8] sm:$0xff]
    %1686 = vmatprep.subr.mxu0 %v1683
    %1687 = vmatpush1.msra.mxu0 %v1682
    %1688 = vmatprep.subr.mxu0 %v1679
    %1689 = vmatpush1.msra.mxu0 %v1678
    %1690 = vmatprep.subr.mxu0 %v1675
    %1691 = vmatpush1.msra.mxu0 %v1674
    %1692 = vmatprep.subr.mxu0 %v1671
    %1693 = vmatpush1.msra.mxu0 %v1670
    %1694 = vmatprep.subr.mxu0 %v1667
    %1695 = vmatpush1.msra.mxu0 %v1666
    %1696 = vmatprep.subr.mxu0 %v1663
    %1697 = vmatpush1.msra.mxu0 %v1662
    %1698 = vmatprep.subr.mxu0 %v1659
    %1699 = vmatpush1.msra.mxu0 %v1658
    %1700 = vmatprep.subr.mxu0 %v1655
    %1701 = vmatpush1.msra.mxu0 %v1654
    %1702 = vmatprep.subr.mxu0 %v1651
    %1703 = vmatpush1.msra.mxu0 %v1650
    %1704 = vmatprep.subr.mxu0 %v1647
    %1705 = vmatpush1.msra.mxu0 %v1646
    %1706 = vmatprep.subr.mxu0 %v1643
    %1707 = vmatpush1.msra.mxu0 %v1642
    %1708 = vmatprep.subr.mxu0 %v1639
    %1709 = vmatpush1.msra.mxu0 %v1638
    %1710 = vmatprep.subr.mxu0 %v1635
    %1711 = vmatpush1.msra.mxu0 %v1634
    %1712 = vmatprep.subr.mxu0 %v1631
    %1713 = vmatpush1.msra.mxu0 %v1630
    %1714 = vmatprep.subr.mxu0 %v1627
    %1715 = vmatpush1.msra.mxu0 %v1626
    %1716 = vmatprep.subr.mxu0 %v1623
    %1717 = vmatpush1.msra.mxu0 %v1622
    %1718 = vmatprep.subr.mxu0 0.0
    %1719 = vmatpush2.msra.mxu0 0.0
    %1720 = vmatprep.subr.mxu0 0.0
    %1721 = vmatpush2.msra.mxu0 0.0
    %1722 = vmatprep.subr.mxu0 0.0
    %1723 = vmatpush2.msra.mxu0 0.0
    %1724 = vmatprep.subr.mxu0 0.0
    %1725 = vmatpush2.msra.mxu0 0.0
    %1726 = vmatprep.subr.mxu0 0.0
    %1727 = vmatpush2.msra.mxu0 0.0
    %1728 = vmatprep.subr.mxu0 0.0
    %1729 = vmatpush2.msra.mxu0 0.0
    %1730 = vmatprep.subr.mxu0 0.0
    %1731 = vmatpush2.msra.mxu0 0.0
    %1732 = vmatprep.subr.mxu0 0.0
    %1733 = vmatpush2.msra.mxu0 0.0
    %1734 = vmatprep.subr.mxu0 0.0
    %1735 = vmatpush2.msra.mxu0 0.0
    %1736 = vmatprep.subr.mxu0 0.0
    %1737 = vmatpush2.msra.mxu0 0.0
    %1738 = vmatprep.subr.mxu0 0.0
    %1739 = vmatpush2.msra.mxu0 0.0
    %1740 = vmatprep.subr.mxu0 0.0
    %1741 = vmatpush2.msra.mxu0 0.0
    %1742 = vmatprep.subr.mxu0 0.0
    %1743 = vmatpush2.msra.mxu0 0.0
    %1744 = vmatprep.subr.mxu0 0.0
    %1745 = vmatpush2.msra.mxu0 0.0
    %1746 = vmatprep.subr.mxu0 0.0
    %1747 = vmatpush2.msra.mxu0 0.0
    %1748 = vmatprep.subr.mxu0 0.0
    %1749 = vmatpush2.msra.mxu0 0.0
    %1750 = vmatprep.mubr.f32.mxu0 0.0
    %1751 = vmatmul.mubr.f32.gmra.mxu0 %v1620
    %v1752 = vpop.f32.mrf.mxu0
    %v1753 = vadd.f32 0.0, %v1752
    %v1754 = vpop.f32.mrf.mxu0
    %v1755 = vadd.f32 0.0, %v1754
    %1756 = vmatprep.mubr.f32.mxu0 0.0
    %1757 = vmatmul.mubr.f32.gmra.mxu0 %v1618
    %v1758 = vpop.f32.mrf.mxu0
    %v1759 = vadd.f32 0.0, %v1758
    %v1760 = vpop.f32.mrf.mxu0
    %v1761 = vadd.f32 0.0, %v1760
    %1762 = vdwg.mxu0
    %1763 = vmatprep.subr.mxu0 %v1685
    %1764 = vmatpush1.msra.mxu0 %v1684
    %1765 = vmatprep.subr.mxu0 %v1681
    %1766 = vmatpush1.msra.mxu0 %v1680
    %1767 = vmatprep.subr.mxu0 %v1677
    %1768 = vmatpush1.msra.mxu0 %v1676
    %1769 = vmatprep.subr.mxu0 %v1673
    %1770 = vmatpush1.msra.mxu0 %v1672
    %1771 = vmatprep.subr.mxu0 %v1669
    %1772 = vmatpush1.msra.mxu0 %v1668
    %1773 = vmatprep.subr.mxu0 %v1665
    %1774 = vmatpush1.msra.mxu0 %v1664
    %1775 = vmatprep.subr.mxu0 %v1661
    %1776 = vmatpush1.msra.mxu0 %v1660
    %1777 = vmatprep.subr.mxu0 %v1657
    %1778 = vmatpush1.msra.mxu0 %v1656
    %1779 = vmatprep.subr.mxu0 %v1653
    %1780 = vmatpush1.msra.mxu0 %v1652
    %1781 = vmatprep.subr.mxu0 %v1649
    %1782 = vmatpush1.msra.mxu0 %v1648
    %1783 = vmatprep.subr.mxu0 %v1645
    %1784 = vmatpush1.msra.mxu0 %v1644
    %1785 = vmatprep.subr.mxu0 %v1641
    %1786 = vmatpush1.msra.mxu0 %v1640
    %1787 = vmatprep.subr.mxu0 %v1637
    %1788 = vmatpush1.msra.mxu0 %v1636
    %1789 = vmatprep.subr.mxu0 %v1633
    %1790 = vmatpush1.msra.mxu0 %v1632
    %1791 = vmatprep.subr.mxu0 %v1629
    %1792 = vmatpush1.msra.mxu0 %v1628
    %1793 = vmatprep.subr.mxu0 %v1625
    %1794 = vmatpush1.msra.mxu0 %v1624
    %1795 = vmatprep.subr.mxu0 0.0
    %1796 = vmatpush2.msra.mxu0 0.0
    %1797 = vmatprep.subr.mxu0 0.0
    %1798 = vmatpush2.msra.mxu0 0.0
    %1799 = vmatprep.subr.mxu0 0.0
    %1800 = vmatpush2.msra.mxu0 0.0
    %1801 = vmatprep.subr.mxu0 0.0
    %1802 = vmatpush2.msra.mxu0 0.0
    %1803 = vmatprep.subr.mxu0 0.0
    %1804 = vmatpush2.msra.mxu0 0.0
    %1805 = vmatprep.subr.mxu0 0.0
    %1806 = vmatpush2.msra.mxu0 0.0
    %1807 = vmatprep.subr.mxu0 0.0
    %1808 = vmatpush2.msra.mxu0 0.0
    %1809 = vmatprep.subr.mxu0 0.0
    %1810 = vmatpush2.msra.mxu0 0.0
    %1811 = vmatprep.subr.mxu0 0.0
    %1812 = vmatpush2.msra.mxu0 0.0
    %1813 = vmatprep.subr.mxu0 0.0
    %1814 = vmatpush2.msra.mxu0 0.0
    %1815 = vmatprep.subr.mxu0 0.0
    %1816 = vmatpush2.msra.mxu0 0.0
    %1817 = vmatprep.subr.mxu0 0.0
    %1818 = vmatpush2.msra.mxu0 0.0
    %1819 = vmatprep.subr.mxu0 0.0
    %1820 = vmatpush2.msra.mxu0 0.0
    %1821 = vmatprep.subr.mxu0 0.0
    %1822 = vmatpush2.msra.mxu0 0.0
    %1823 = vmatprep.subr.mxu0 0.0
    %1824 = vmatpush2.msra.mxu0 0.0
    %1825 = vmatprep.subr.mxu0 0.0
    %1826 = vmatpush2.msra.mxu0 0.0
    %1827 = vmatprep.mubr.f32.mxu0 0.0
    %1828 = vmatmul.mubr.f32.gmra.mxu0 %v1620
    %v1829 = vpop.f32.mrf.mxu0
    %v1830 = vadd.f32 0.0, %v1829
    %v1831 = vpop.f32.mrf.mxu0
    %v1832 = vadd.f32 0.0, %v1831
    %1833 = vmatprep.mubr.f32.mxu0 0.0
    %1834 = vmatmul.mubr.f32.gmra.mxu0 %v1618
    %v1835 = vpop.f32.mrf.mxu0
    %v1836 = vadd.f32 0.0, %v1835
    %v1837 = vpop.f32.mrf.mxu0
    %v1838 = vadd.f32 0.0, %v1837
    %1839 = vdwg.mxu0
    %v1840 = vadd.f32 %v1605, %v1753
    %v1841 = vadd.f32 %v1606, %v1755
    %v1842 = vadd.f32 %v1607, %v1830
    %v1843 = vadd.f32 %v1608, %v1832
    %v1844 = vadd.f32 %v1609, %v1759
    %v1845 = vadd.f32 %v1610, %v1761
    %v1846 = vadd.f32 %v1611, %v1836
    %v1847 = vadd.f32 %v1612, %v1838
    %s1848 = scalar_lea.vmem [#allocation2], 4
    %v1849 = vld [vmem:[%s1848] ss:$2 sm:$0x1f]
    %s1850 = scalar_lea.vmem [#allocation2], 18
    %v1851 = vld [vmem:[%s1850] ss:$2 sm:$0x1f]
    %v1853 = vrot.slane %v1851, 3
    %v1855 = vsel %vm931, %v1849, %v1853
    %s1856 = scalar_lea.vmem %s3, 2048
    %v1857 = vld [vmem:[%s1856] sm:$0xff]
    %v1858 = vld [vmem:[%s1856 + $0x8] sm:$0xff]
    %v1859 = vld [vmem:[%s1856 + $0x10] sm:$0xff]
    %v1860 = vld [vmem:[%s1856 + $0x18] sm:$0xff]
    %v1861 = vld [vmem:[%s1856 + $0x20] sm:$0xff]
    %v1862 = vld [vmem:[%s1856 + $0x28] sm:$0xff]
    %v1863 = vld [vmem:[%s1856 + $0x30] sm:$0xff]
    %v1864 = vld [vmem:[%s1856 + $0x38] sm:$0xff]
    %v1865 = vld [vmem:[%s1856 + $0x40] sm:$0xff]
    %v1866 = vld [vmem:[%s1856 + $0x48] sm:$0xff]
    %v1867 = vld [vmem:[%s1856 + $0x50] sm:$0xff]
    %v1868 = vld [vmem:[%s1856 + $0x58] sm:$0xff]
    %v1869 = vld [vmem:[%s1856 + $0x60] sm:$0xff]
    %v1870 = vld [vmem:[%s1856 + $0x68] sm:$0xff]
    %v1871 = vld [vmem:[%s1856 + $0x70] sm:$0xff]
    %v1872 = vld [vmem:[%s1856 + $0x78] sm:$0xff]
    %v1873 = vld [vmem:[%s1856 + $0x80] sm:$0xff]
    %v1874 = vld [vmem:[%s1856 + $0x88] sm:$0xff]
    %v1875 = vld [vmem:[%s1856 + $0x90] sm:$0xff]
    %v1876 = vld [vmem:[%s1856 + $0x98] sm:$0xff]
    %v1877 = vld [vmem:[%s1856 + $0xa0] sm:$0xff]
    %v1878 = vld [vmem:[%s1856 + $0xa8] sm:$0xff]
    %v1879 = vld [vmem:[%s1856 + $0xb0] sm:$0xff]
    %v1880 = vld [vmem:[%s1856 + $0xb8] sm:$0xff]
    %v1881 = vld [vmem:[%s1856 + $0xc0] sm:$0xff]
    %v1882 = vld [vmem:[%s1856 + $0xc8] sm:$0xff]
    %v1883 = vld [vmem:[%s1856 + $0xd0] sm:$0xff]
    %v1884 = vld [vmem:[%s1856 + $0xd8] sm:$0xff]
    %v1885 = vld [vmem:[%s1856 + $0xe0] sm:$0xff]
    %v1886 = vld [vmem:[%s1856 + $0xe8] sm:$0xff]
    %v1887 = vld [vmem:[%s1856 + $0xf0] sm:$0xff]
    %v1888 = vld [vmem:[%s1856 + $0xf8] sm:$0xff]
    %v1889 = vld [vmem:[%s1856 + $0x100] sm:$0xff]
    %v1890 = vld [vmem:[%s1856 + $0x108] sm:$0xff]
    %v1891 = vld [vmem:[%s1856 + $0x110] sm:$0xff]
    %v1892 = vld [vmem:[%s1856 + $0x118] sm:$0xff]
    %v1893 = vld [vmem:[%s1856 + $0x120] sm:$0xff]
    %v1894 = vld [vmem:[%s1856 + $0x128] sm:$0xff]
    %v1895 = vld [vmem:[%s1856 + $0x130] sm:$0xff]
    %v1896 = vld [vmem:[%s1856 + $0x138] sm:$0xff]
    %v1897 = vld [vmem:[%s1856 + $0x140] sm:$0xff]
    %v1898 = vld [vmem:[%s1856 + $0x148] sm:$0xff]
    %v1899 = vld [vmem:[%s1856 + $0x150] sm:$0xff]
    %v1900 = vld [vmem:[%s1856 + $0x158] sm:$0xff]
    %v1901 = vld [vmem:[%s1856 + $0x160] sm:$0xff]
    %v1902 = vld [vmem:[%s1856 + $0x168] sm:$0xff]
    %v1903 = vld [vmem:[%s1856 + $0x170] sm:$0xff]
    %v1904 = vld [vmem:[%s1856 + $0x178] sm:$0xff]
    %v1905 = vld [vmem:[%s1856 + $0x180] sm:$0xff]
    %v1906 = vld [vmem:[%s1856 + $0x188] sm:$0xff]
    %v1907 = vld [vmem:[%s1856 + $0x190] sm:$0xff]
    %v1908 = vld [vmem:[%s1856 + $0x198] sm:$0xff]
    %v1909 = vld [vmem:[%s1856 + $0x1a0] sm:$0xff]
    %v1910 = vld [vmem:[%s1856 + $0x1a8] sm:$0xff]
    %v1911 = vld [vmem:[%s1856 + $0x1b0] sm:$0xff]
    %v1912 = vld [vmem:[%s1856 + $0x1b8] sm:$0xff]
    %v1913 = vld [vmem:[%s1856 + $0x1c0] sm:$0xff]
    %v1914 = vld [vmem:[%s1856 + $0x1c8] sm:$0xff]
    %v1915 = vld [vmem:[%s1856 + $0x1d0] sm:$0xff]
    %v1916 = vld [vmem:[%s1856 + $0x1d8] sm:$0xff]
    %v1917 = vld [vmem:[%s1856 + $0x1e0] sm:$0xff]
    %v1918 = vld [vmem:[%s1856 + $0x1e8] sm:$0xff]
    %v1919 = vld [vmem:[%s1856 + $0x1f0] sm:$0xff]
    %v1920 = vld [vmem:[%s1856 + $0x1f8] sm:$0xff]
    %1921 = vmatprep.subr.mxu0 %v1918
    %1922 = vmatpush1.msra.mxu0 %v1917
    %1923 = vmatprep.subr.mxu0 %v1914
    %1924 = vmatpush1.msra.mxu0 %v1913
    %1925 = vmatprep.subr.mxu0 %v1910
    %1926 = vmatpush1.msra.mxu0 %v1909
    %1927 = vmatprep.subr.mxu0 %v1906
    %1928 = vmatpush1.msra.mxu0 %v1905
    %1929 = vmatprep.subr.mxu0 %v1902
    %1930 = vmatpush1.msra.mxu0 %v1901
    %1931 = vmatprep.subr.mxu0 %v1898
    %1932 = vmatpush1.msra.mxu0 %v1897
    %1933 = vmatprep.subr.mxu0 %v1894
    %1934 = vmatpush1.msra.mxu0 %v1893
    %1935 = vmatprep.subr.mxu0 %v1890
    %1936 = vmatpush1.msra.mxu0 %v1889
    %1937 = vmatprep.subr.mxu0 %v1886
    %1938 = vmatpush1.msra.mxu0 %v1885
    %1939 = vmatprep.subr.mxu0 %v1882
    %1940 = vmatpush1.msra.mxu0 %v1881
    %1941 = vmatprep.subr.mxu0 %v1878
    %1942 = vmatpush1.msra.mxu0 %v1877
    %1943 = vmatprep.subr.mxu0 %v1874
    %1944 = vmatpush1.msra.mxu0 %v1873
    %1945 = vmatprep.subr.mxu0 %v1870
    %1946 = vmatpush1.msra.mxu0 %v1869
    %1947 = vmatprep.subr.mxu0 %v1866
    %1948 = vmatpush1.msra.mxu0 %v1865
    %1949 = vmatprep.subr.mxu0 %v1862
    %1950 = vmatpush1.msra.mxu0 %v1861
    %1951 = vmatprep.subr.mxu0 %v1858
    %1952 = vmatpush1.msra.mxu0 %v1857
    %1953 = vmatprep.subr.mxu0 0.0
    %1954 = vmatpush2.msra.mxu0 0.0
    %1955 = vmatprep.subr.mxu0 0.0
    %1956 = vmatpush2.msra.mxu0 0.0
    %1957 = vmatprep.subr.mxu0 0.0
    %1958 = vmatpush2.msra.mxu0 0.0
    %1959 = vmatprep.subr.mxu0 0.0
    %1960 = vmatpush2.msra.mxu0 0.0
    %1961 = vmatprep.subr.mxu0 0.0
    %1962 = vmatpush2.msra.mxu0 0.0
    %1963 = vmatprep.subr.mxu0 0.0
    %1964 = vmatpush2.msra.mxu0 0.0
    %1965 = vmatprep.subr.mxu0 0.0
    %1966 = vmatpush2.msra.mxu0 0.0
    %1967 = vmatprep.subr.mxu0 0.0
    %1968 = vmatpush2.msra.mxu0 0.0
    %1969 = vmatprep.subr.mxu0 0.0
    %1970 = vmatpush2.msra.mxu0 0.0
    %1971 = vmatprep.subr.mxu0 0.0
    %1972 = vmatpush2.msra.mxu0 0.0
    %1973 = vmatprep.subr.mxu0 0.0
    %1974 = vmatpush2.msra.mxu0 0.0
    %1975 = vmatprep.subr.mxu0 0.0
    %1976 = vmatpush2.msra.mxu0 0.0
    %1977 = vmatprep.subr.mxu0 0.0
    %1978 = vmatpush2.msra.mxu0 0.0
    %1979 = vmatprep.subr.mxu0 0.0
    %1980 = vmatpush2.msra.mxu0 0.0
    %1981 = vmatprep.subr.mxu0 0.0
    %1982 = vmatpush2.msra.mxu0 0.0
    %1983 = vmatprep.subr.mxu0 0.0
    %1984 = vmatpush2.msra.mxu0 0.0
    %1985 = vmatprep.mubr.f32.mxu0 0.0
    %1986 = vmatmul.mubr.f32.gmra.mxu0 %v1855
    %v1987 = vpop.f32.mrf.mxu0
    %v1988 = vadd.f32 0.0, %v1987
    %v1989 = vpop.f32.mrf.mxu0
    %v1990 = vadd.f32 0.0, %v1989
    %1991 = vmatprep.mubr.f32.mxu0 0.0
    %1992 = vmatmul.mubr.f32.gmra.mxu0 %v1853
    %v1993 = vpop.f32.mrf.mxu0
    %v1994 = vadd.f32 0.0, %v1993
    %v1995 = vpop.f32.mrf.mxu0
    %v1996 = vadd.f32 0.0, %v1995
    %1997 = vdwg.mxu0
    %1998 = vmatprep.subr.mxu0 %v1920
    %1999 = vmatpush1.msra.mxu0 %v1919
    %2000 = vmatprep.subr.mxu0 %v1916
    %2001 = vmatpush1.msra.mxu0 %v1915
    %2002 = vmatprep.subr.mxu0 %v1912
    %2003 = vmatpush1.msra.mxu0 %v1911
    %2004 = vmatprep.subr.mxu0 %v1908
    %2005 = vmatpush1.msra.mxu0 %v1907
    %2006 = vmatprep.subr.mxu0 %v1904
    %2007 = vmatpush1.msra.mxu0 %v1903
    %2008 = vmatprep.subr.mxu0 %v1900
    %2009 = vmatpush1.msra.mxu0 %v1899
    %2010 = vmatprep.subr.mxu0 %v1896
    %2011 = vmatpush1.msra.mxu0 %v1895
    %2012 = vmatprep.subr.mxu0 %v1892
    %2013 = vmatpush1.msra.mxu0 %v1891
    %2014 = vmatprep.subr.mxu0 %v1888
    %2015 = vmatpush1.msra.mxu0 %v1887
    %2016 = vmatprep.subr.mxu0 %v1884
    %2017 = vmatpush1.msra.mxu0 %v1883
    %2018 = vmatprep.subr.mxu0 %v1880
    %2019 = vmatpush1.msra.mxu0 %v1879
    %2020 = vmatprep.subr.mxu0 %v1876
    %2021 = vmatpush1.msra.mxu0 %v1875
    %2022 = vmatprep.subr.mxu0 %v1872
    %2023 = vmatpush1.msra.mxu0 %v1871
    %2024 = vmatprep.subr.mxu0 %v1868
    %2025 = vmatpush1.msra.mxu0 %v1867
    %2026 = vmatprep.subr.mxu0 %v1864
    %2027 = vmatpush1.msra.mxu0 %v1863
    %2028 = vmatprep.subr.mxu0 %v1860
    %2029 = vmatpush1.msra.mxu0 %v1859
    %2030 = vmatprep.subr.mxu0 0.0
    %2031 = vmatpush2.msra.mxu0 0.0
    %2032 = vmatprep.subr.mxu0 0.0
    %2033 = vmatpush2.msra.mxu0 0.0
    %2034 = vmatprep.subr.mxu0 0.0
    %2035 = vmatpush2.msra.mxu0 0.0
    %2036 = vmatprep.subr.mxu0 0.0
    %2037 = vmatpush2.msra.mxu0 0.0
    %2038 = vmatprep.subr.mxu0 0.0
    %2039 = vmatpush2.msra.mxu0 0.0
    %2040 = vmatprep.subr.mxu0 0.0
    %2041 = vmatpush2.msra.mxu0 0.0
    %2042 = vmatprep.subr.mxu0 0.0
    %2043 = vmatpush2.msra.mxu0 0.0
    %2044 = vmatprep.subr.mxu0 0.0
    %2045 = vmatpush2.msra.mxu0 0.0
    %2046 = vmatprep.subr.mxu0 0.0
    %2047 = vmatpush2.msra.mxu0 0.0
    %2048 = vmatprep.subr.mxu0 0.0
    %2049 = vmatpush2.msra.mxu0 0.0
    %2050 = vmatprep.subr.mxu0 0.0
    %2051 = vmatpush2.msra.mxu0 0.0
    %2052 = vmatprep.subr.mxu0 0.0
    %2053 = vmatpush2.msra.mxu0 0.0
    %2054 = vmatprep.subr.mxu0 0.0
    %2055 = vmatpush2.msra.mxu0 0.0
    %2056 = vmatprep.subr.mxu0 0.0
    %2057 = vmatpush2.msra.mxu0 0.0
    %2058 = vmatprep.subr.mxu0 0.0
    %2059 = vmatpush2.msra.mxu0 0.0
    %2060 = vmatprep.subr.mxu0 0.0
    %2061 = vmatpush2.msra.mxu0 0.0
    %2062 = vmatprep.mubr.f32.mxu0 0.0
    %2063 = vmatmul.mubr.f32.gmra.mxu0 %v1855
    %v2064 = vpop.f32.mrf.mxu0
    %v2065 = vadd.f32 0.0, %v2064
    %v2066 = vpop.f32.mrf.mxu0
    %v2067 = vadd.f32 0.0, %v2066
    %2068 = vmatprep.mubr.f32.mxu0 0.0
    %2069 = vmatmul.mubr.f32.gmra.mxu0 %v1853
    %v2070 = vpop.f32.mrf.mxu0
    %v2071 = vadd.f32 0.0, %v2070
    %v2072 = vpop.f32.mrf.mxu0
    %v2073 = vadd.f32 0.0, %v2072
    %2074 = vdwg.mxu0
    %v2075 = vadd.f32 %v1840, %v1988
    %v2076 = vadd.f32 %v1841, %v1990
    %v2077 = vadd.f32 %v1842, %v2065
    %v2078 = vadd.f32 %v1843, %v2067
    %v2079 = vadd.f32 %v1844, %v1994
    %v2080 = vadd.f32 %v1845, %v1996
    %v2081 = vadd.f32 %v1846, %v2071
    %v2082 = vadd.f32 %v1847, %v2073
    %s2083 = scalar_lea.vmem [#allocation2], 5
    %v2084 = vld [vmem:[%s2083] ss:$2 sm:$0x1f]
    %s2085 = scalar_lea.vmem [#allocation2], 19
    %v2086 = vld [vmem:[%s2085] ss:$2 sm:$0x1f]
    %v2088 = vrot.slane %v2086, 3
    %v2090 = vsel %vm931, %v2084, %v2088
    %s2091 = scalar_lea.vmem %s3, 2560
    %v2092 = vld [vmem:[%s2091] sm:$0xff]
    %v2093 = vld [vmem:[%s2091 + $0x8] sm:$0xff]
    %v2094 = vld [vmem:[%s2091 + $0x10] sm:$0xff]
    %v2095 = vld [vmem:[%s2091 + $0x18] sm:$0xff]
    %v2096 = vld [vmem:[%s2091 + $0x20] sm:$0xff]
    %v2097 = vld [vmem:[%s2091 + $0x28] sm:$0xff]
    %v2098 = vld [vmem:[%s2091 + $0x30] sm:$0xff]
    %v2099 = vld [vmem:[%s2091 + $0x38] sm:$0xff]
    %v2100 = vld [vmem:[%s2091 + $0x40] sm:$0xff]
    %v2101 = vld [vmem:[%s2091 + $0x48] sm:$0xff]
    %v2102 = vld [vmem:[%s2091 + $0x50] sm:$0xff]
    %v2103 = vld [vmem:[%s2091 + $0x58] sm:$0xff]
    %v2104 = vld [vmem:[%s2091 + $0x60] sm:$0xff]
    %v2105 = vld [vmem:[%s2091 + $0x68] sm:$0xff]
    %v2106 = vld [vmem:[%s2091 + $0x70] sm:$0xff]
    %v2107 = vld [vmem:[%s2091 + $0x78] sm:$0xff]
    %v2108 = vld [vmem:[%s2091 + $0x80] sm:$0xff]
    %v2109 = vld [vmem:[%s2091 + $0x88] sm:$0xff]
    %v2110 = vld [vmem:[%s2091 + $0x90] sm:$0xff]
    %v2111 = vld [vmem:[%s2091 + $0x98] sm:$0xff]
    %v2112 = vld [vmem:[%s2091 + $0xa0] sm:$0xff]
    %v2113 = vld [vmem:[%s2091 + $0xa8] sm:$0xff]
    %v2114 = vld [vmem:[%s2091 + $0xb0] sm:$0xff]
    %v2115 = vld [vmem:[%s2091 + $0xb8] sm:$0xff]
    %v2116 = vld [vmem:[%s2091 + $0xc0] sm:$0xff]
    %v2117 = vld [vmem:[%s2091 + $0xc8] sm:$0xff]
    %v2118 = vld [vmem:[%s2091 + $0xd0] sm:$0xff]
    %v2119 = vld [vmem:[%s2091 + $0xd8] sm:$0xff]
    %v2120 = vld [vmem:[%s2091 + $0xe0] sm:$0xff]
    %v2121 = vld [vmem:[%s2091 + $0xe8] sm:$0xff]
    %v2122 = vld [vmem:[%s2091 + $0xf0] sm:$0xff]
    %v2123 = vld [vmem:[%s2091 + $0xf8] sm:$0xff]
    %v2124 = vld [vmem:[%s2091 + $0x100] sm:$0xff]
    %v2125 = vld [vmem:[%s2091 + $0x108] sm:$0xff]
    %v2126 = vld [vmem:[%s2091 + $0x110] sm:$0xff]
    %v2127 = vld [vmem:[%s2091 + $0x118] sm:$0xff]
    %v2128 = vld [vmem:[%s2091 + $0x120] sm:$0xff]
    %v2129 = vld [vmem:[%s2091 + $0x128] sm:$0xff]
    %v2130 = vld [vmem:[%s2091 + $0x130] sm:$0xff]
    %v2131 = vld [vmem:[%s2091 + $0x138] sm:$0xff]
    %v2132 = vld [vmem:[%s2091 + $0x140] sm:$0xff]
    %v2133 = vld [vmem:[%s2091 + $0x148] sm:$0xff]
    %v2134 = vld [vmem:[%s2091 + $0x150] sm:$0xff]
    %v2135 = vld [vmem:[%s2091 + $0x158] sm:$0xff]
    %v2136 = vld [vmem:[%s2091 + $0x160] sm:$0xff]
    %v2137 = vld [vmem:[%s2091 + $0x168] sm:$0xff]
    %v2138 = vld [vmem:[%s2091 + $0x170] sm:$0xff]
    %v2139 = vld [vmem:[%s2091 + $0x178] sm:$0xff]
    %v2140 = vld [vmem:[%s2091 + $0x180] sm:$0xff]
    %v2141 = vld [vmem:[%s2091 + $0x188] sm:$0xff]
    %v2142 = vld [vmem:[%s2091 + $0x190] sm:$0xff]
    %v2143 = vld [vmem:[%s2091 + $0x198] sm:$0xff]
    %v2144 = vld [vmem:[%s2091 + $0x1a0] sm:$0xff]
    %v2145 = vld [vmem:[%s2091 + $0x1a8] sm:$0xff]
    %v2146 = vld [vmem:[%s2091 + $0x1b0] sm:$0xff]
    %v2147 = vld [vmem:[%s2091 + $0x1b8] sm:$0xff]
    %v2148 = vld [vmem:[%s2091 + $0x1c0] sm:$0xff]
    %v2149 = vld [vmem:[%s2091 + $0x1c8] sm:$0xff]
    %v2150 = vld [vmem:[%s2091 + $0x1d0] sm:$0xff]
    %v2151 = vld [vmem:[%s2091 + $0x1d8] sm:$0xff]
    %v2152 = vld [vmem:[%s2091 + $0x1e0] sm:$0xff]
    %v2153 = vld [vmem:[%s2091 + $0x1e8] sm:$0xff]
    %v2154 = vld [vmem:[%s2091 + $0x1f0] sm:$0xff]
    %v2155 = vld [vmem:[%s2091 + $0x1f8] sm:$0xff]
    %2156 = vmatprep.subr.mxu0 %v2153
    %2157 = vmatpush1.msra.mxu0 %v2152
    %2158 = vmatprep.subr.mxu0 %v2149
    %2159 = vmatpush1.msra.mxu0 %v2148
    %2160 = vmatprep.subr.mxu0 %v2145
    %2161 = vmatpush1.msra.mxu0 %v2144
    %2162 = vmatprep.subr.mxu0 %v2141
    %2163 = vmatpush1.msra.mxu0 %v2140
    %2164 = vmatprep.subr.mxu0 %v2137
    %2165 = vmatpush1.msra.mxu0 %v2136
    %2166 = vmatprep.subr.mxu0 %v2133
    %2167 = vmatpush1.msra.mxu0 %v2132
    %2168 = vmatprep.subr.mxu0 %v2129
    %2169 = vmatpush1.msra.mxu0 %v2128
    %2170 = vmatprep.subr.mxu0 %v2125
    %2171 = vmatpush1.msra.mxu0 %v2124
    %2172 = vmatprep.subr.mxu0 %v2121
    %2173 = vmatpush1.msra.mxu0 %v2120
    %2174 = vmatprep.subr.mxu0 %v2117
    %2175 = vmatpush1.msra.mxu0 %v2116
    %2176 = vmatprep.subr.mxu0 %v2113
    %2177 = vmatpush1.msra.mxu0 %v2112
    %2178 = vmatprep.subr.mxu0 %v2109
    %2179 = vmatpush1.msra.mxu0 %v2108
    %2180 = vmatprep.subr.mxu0 %v2105
    %2181 = vmatpush1.msra.mxu0 %v2104
    %2182 = vmatprep.subr.mxu0 %v2101
    %2183 = vmatpush1.msra.mxu0 %v2100
    %2184 = vmatprep.subr.mxu0 %v2097
    %2185 = vmatpush1.msra.mxu0 %v2096
    %2186 = vmatprep.subr.mxu0 %v2093
    %2187 = vmatpush1.msra.mxu0 %v2092
    %2188 = vmatprep.subr.mxu0 0.0
    %2189 = vmatpush2.msra.mxu0 0.0
    %2190 = vmatprep.subr.mxu0 0.0
    %2191 = vmatpush2.msra.mxu0 0.0
    %2192 = vmatprep.subr.mxu0 0.0
    %2193 = vmatpush2.msra.mxu0 0.0
    %2194 = vmatprep.subr.mxu0 0.0
    %2195 = vmatpush2.msra.mxu0 0.0
    %2196 = vmatprep.subr.mxu0 0.0
    %2197 = vmatpush2.msra.mxu0 0.0
    %2198 = vmatprep.subr.mxu0 0.0
    %2199 = vmatpush2.msra.mxu0 0.0
    %2200 = vmatprep.subr.mxu0 0.0
    %2201 = vmatpush2.msra.mxu0 0.0
    %2202 = vmatprep.subr.mxu0 0.0
    %2203 = vmatpush2.msra.mxu0 0.0
    %2204 = vmatprep.subr.mxu0 0.0
    %2205 = vmatpush2.msra.mxu0 0.0
    %2206 = vmatprep.subr.mxu0 0.0
    %2207 = vmatpush2.msra.mxu0 0.0
    %2208 = vmatprep.subr.mxu0 0.0
    %2209 = vmatpush2.msra.mxu0 0.0
    %2210 = vmatprep.subr.mxu0 0.0
    %2211 = vmatpush2.msra.mxu0 0.0
    %2212 = vmatprep.subr.mxu0 0.0
    %2213 = vmatpush2.msra.mxu0 0.0
    %2214 = vmatprep.subr.mxu0 0.0
    %2215 = vmatpush2.msra.mxu0 0.0
    %2216 = vmatprep.subr.mxu0 0.0
    %2217 = vmatpush2.msra.mxu0 0.0
    %2218 = vmatprep.subr.mxu0 0.0
    %2219 = vmatpush2.msra.mxu0 0.0
    %2220 = vmatprep.mubr.f32.mxu0 0.0
    %2221 = vmatmul.mubr.f32.gmra.mxu0 %v2090
    %v2222 = vpop.f32.mrf.mxu0
    %v2223 = vadd.f32 0.0, %v2222
    %v2224 = vpop.f32.mrf.mxu0
    %v2225 = vadd.f32 0.0, %v2224
    %2226 = vmatprep.mubr.f32.mxu0 0.0
    %2227 = vmatmul.mubr.f32.gmra.mxu0 %v2088
    %v2228 = vpop.f32.mrf.mxu0
    %v2229 = vadd.f32 0.0, %v2228
    %v2230 = vpop.f32.mrf.mxu0
    %v2231 = vadd.f32 0.0, %v2230
    %2232 = vdwg.mxu0
    %2233 = vmatprep.subr.mxu0 %v2155
    %2234 = vmatpush1.msra.mxu0 %v2154
    %2235 = vmatprep.subr.mxu0 %v2151
    %2236 = vmatpush1.msra.mxu0 %v2150
    %2237 = vmatprep.subr.mxu0 %v2147
    %2238 = vmatpush1.msra.mxu0 %v2146
    %2239 = vmatprep.subr.mxu0 %v2143
    %2240 = vmatpush1.msra.mxu0 %v2142
    %2241 = vmatprep.subr.mxu0 %v2139
    %2242 = vmatpush1.msra.mxu0 %v2138
    %2243 = vmatprep.subr.mxu0 %v2135
    %2244 = vmatpush1.msra.mxu0 %v2134
    %2245 = vmatprep.subr.mxu0 %v2131
    %2246 = vmatpush1.msra.mxu0 %v2130
    %2247 = vmatprep.subr.mxu0 %v2127
    %2248 = vmatpush1.msra.mxu0 %v2126
    %2249 = vmatprep.subr.mxu0 %v2123
    %2250 = vmatpush1.msra.mxu0 %v2122
    %2251 = vmatprep.subr.mxu0 %v2119
    %2252 = vmatpush1.msra.mxu0 %v2118
    %2253 = vmatprep.subr.mxu0 %v2115
    %2254 = vmatpush1.msra.mxu0 %v2114
    %2255 = vmatprep.subr.mxu0 %v2111
    %2256 = vmatpush1.msra.mxu0 %v2110
    %2257 = vmatprep.subr.mxu0 %v2107
    %2258 = vmatpush1.msra.mxu0 %v2106
    %2259 = vmatprep.subr.mxu0 %v2103
    %2260 = vmatpush1.msra.mxu0 %v2102
    %2261 = vmatprep.subr.mxu0 %v2099
    %2262 = vmatpush1.msra.mxu0 %v2098
    %2263 = vmatprep.subr.mxu0 %v2095
    %2264 = vmatpush1.msra.mxu0 %v2094
    %2265 = vmatprep.subr.mxu0 0.0
    %2266 = vmatpush2.msra.mxu0 0.0
    %2267 = vmatprep.subr.mxu0 0.0
    %2268 = vmatpush2.msra.mxu0 0.0
    %2269 = vmatprep.subr.mxu0 0.0
    %2270 = vmatpush2.msra.mxu0 0.0
    %2271 = vmatprep.subr.mxu0 0.0
    %2272 = vmatpush2.msra.mxu0 0.0
    %2273 = vmatprep.subr.mxu0 0.0
    %2274 = vmatpush2.msra.mxu0 0.0
    %2275 = vmatprep.subr.mxu0 0.0
    %2276 = vmatpush2.msra.mxu0 0.0
    %2277 = vmatprep.subr.mxu0 0.0
    %2278 = vmatpush2.msra.mxu0 0.0
    %2279 = vmatprep.subr.mxu0 0.0
    %2280 = vmatpush2.msra.mxu0 0.0
    %2281 = vmatprep.subr.mxu0 0.0
    %2282 = vmatpush2.msra.mxu0 0.0
    %2283 = vmatprep.subr.mxu0 0.0
    %2284 = vmatpush2.msra.mxu0 0.0
    %2285 = vmatprep.subr.mxu0 0.0
    %2286 = vmatpush2.msra.mxu0 0.0
    %2287 = vmatprep.subr.mxu0 0.0
    %2288 = vmatpush2.msra.mxu0 0.0
    %2289 = vmatprep.subr.mxu0 0.0
    %2290 = vmatpush2.msra.mxu0 0.0
    %2291 = vmatprep.subr.mxu0 0.0
    %2292 = vmatpush2.msra.mxu0 0.0
    %2293 = vmatprep.subr.mxu0 0.0
    %2294 = vmatpush2.msra.mxu0 0.0
    %2295 = vmatprep.subr.mxu0 0.0
    %2296 = vmatpush2.msra.mxu0 0.0
    %2297 = vmatprep.mubr.f32.mxu0 0.0
    %2298 = vmatmul.mubr.f32.gmra.mxu0 %v2090
    %v2299 = vpop.f32.mrf.mxu0
    %v2300 = vadd.f32 0.0, %v2299
    %v2301 = vpop.f32.mrf.mxu0
    %v2302 = vadd.f32 0.0, %v2301
    %2303 = vmatprep.mubr.f32.mxu0 0.0
    %2304 = vmatmul.mubr.f32.gmra.mxu0 %v2088
    %v2305 = vpop.f32.mrf.mxu0
    %v2306 = vadd.f32 0.0, %v2305
    %v2307 = vpop.f32.mrf.mxu0
    %v2308 = vadd.f32 0.0, %v2307
    %2309 = vdwg.mxu0
    %v2310 = vadd.f32 %v2075, %v2223
    %v2311 = vadd.f32 %v2076, %v2225
    %v2312 = vadd.f32 %v2077, %v2300
    %v2313 = vadd.f32 %v2078, %v2302
    %v2314 = vadd.f32 %v2079, %v2229
    %v2315 = vadd.f32 %v2080, %v2231
    %v2316 = vadd.f32 %v2081, %v2306
    %v2317 = vadd.f32 %v2082, %v2308
    %v2318 = vmax.f32 %v2310, %v2311
    %v2319 = vmax.f32 %v2314, %v2315
    %v2320 = vmax.f32 %v2312, %v2313
    %v2321 = vmax.f32 %v2316, %v2317
    %v2322 = vmax.f32 %v2318, %v2320
    %v2323 = vmax.f32 %v2319, %v2321
    %v2324 = vld [vmem:[%s4] sm:$0x1]
    %v2326 = vlaneseq
    %v2327 = vshrl.u32 %v2326, 7
    %v2328 = vsub.s32 0, %v2327
    %v2329 = vrot.slane %v2324, %v2328
    %v2331 = vadd.f32 %v2322, %v2329
    %v2332 = vadd.f32 %v2323, %v2329
    %v2333 = vtanh.pop %v2331
    %v2334 = vtanh.pop %v2332
    %2335 = vst [vmem:[#allocation3] sm:$0xff] %v2333
    %2336 = vst [vmem:[#allocation3 + $0x8] sm:$0x3] %v2334
    %v2337 = vld [vmem:[#allocation3] ss:$5 sm:$0x3]
    %v2338 = vld [vmem:[%s5] sm:$0xff]
    %v2339 = vld [vmem:[%s5 + $0x8] sm:$0xff]
    %v2340 = vld [vmem:[%s5 + $0x10] sm:$0xff]
    %v2341 = vld [vmem:[%s5 + $0x18] sm:$0xff]
    %v2342 = vld [vmem:[%s5 + $0x20] sm:$0xff]
    %v2343 = vld [vmem:[%s5 + $0x28] sm:$0xff]
    %v2344 = vld [vmem:[%s5 + $0x30] sm:$0xff]
    %v2345 = vld [vmem:[%s5 + $0x38] sm:$0xff]
    %v2346 = vld [vmem:[%s5 + $0x40] sm:$0xff]
    %v2347 = vld [vmem:[%s5 + $0x48] sm:$0xff]
    %v2348 = vld [vmem:[%s5 + $0x50] sm:$0xff]
    %v2349 = vld [vmem:[%s5 + $0x58] sm:$0xff]
    %v2350 = vld [vmem:[%s5 + $0x60] sm:$0xff]
    %v2351 = vld [vmem:[%s5 + $0x68] sm:$0xff]
    %v2352 = vld [vmem:[%s5 + $0x70] sm:$0xff]
    %v2353 = vld [vmem:[%s5 + $0x78] sm:$0xff]
    %s2354 = scalar_lea.vmem [#allocation3], 1
    %v2355 = vld [vmem:[%s2354] ss:$5 sm:$0x3]
    %s2356 = scalar_lea.vmem %s5, 128
    %v2357 = vld [vmem:[%s2356] sm:$0xff]
    %v2358 = vld [vmem:[%s2356 + $0x8] sm:$0xff]
    %v2359 = vld [vmem:[%s2356 + $0x10] sm:$0xff]
    %v2360 = vld [vmem:[%s2356 + $0x18] sm:$0xff]
    %v2361 = vld [vmem:[%s2356 + $0x20] sm:$0xff]
    %v2362 = vld [vmem:[%s2356 + $0x28] sm:$0xff]
    %v2363 = vld [vmem:[%s2356 + $0x30] sm:$0xff]
    %v2364 = vld [vmem:[%s2356 + $0x38] sm:$0xff]
    %v2365 = vld [vmem:[%s2356 + $0x40] sm:$0xff]
    %v2366 = vld [vmem:[%s2356 + $0x48] sm:$0xff]
    %v2367 = vld [vmem:[%s2356 + $0x50] sm:$0xff]
    %v2368 = vld [vmem:[%s2356 + $0x58] sm:$0xff]
    %v2369 = vld [vmem:[%s2356 + $0x60] sm:$0xff]
    %v2370 = vld [vmem:[%s2356 + $0x68] sm:$0xff]
    %v2371 = vld [vmem:[%s2356 + $0x70] sm:$0xff]
    %v2372 = vld [vmem:[%s2356 + $0x78] sm:$0xff]
    %2373 = vmatprep.subr.mxu0 0.0
    %2374 = vmatpush1.msra.mxu0 %v2372
    %2375 = vmatprep.subr.mxu0 0.0
    %2376 = vmatpush1.msra.mxu0 %v2371
    %2377 = vmatprep.subr.mxu0 0.0
    %2378 = vmatpush1.msra.mxu0 %v2370
    %2379 = vmatprep.subr.mxu0 0.0
    %2380 = vmatpush1.msra.mxu0 %v2369
    %2381 = vmatprep.subr.mxu0 0.0
    %2382 = vmatpush1.msra.mxu0 %v2368
    %2383 = vmatprep.subr.mxu0 0.0
    %2384 = vmatpush1.msra.mxu0 %v2367
    %2385 = vmatprep.subr.mxu0 0.0
    %2386 = vmatpush1.msra.mxu0 %v2366
    %2387 = vmatprep.subr.mxu0 0.0
    %2388 = vmatpush1.msra.mxu0 %v2365
    %2389 = vmatprep.subr.mxu0 0.0
    %2390 = vmatpush1.msra.mxu0 %v2364
    %2391 = vmatprep.subr.mxu0 0.0
    %2392 = vmatpush1.msra.mxu0 %v2363
    %2393 = vmatprep.subr.mxu0 0.0
    %2394 = vmatpush1.msra.mxu0 %v2362
    %2395 = vmatprep.subr.mxu0 0.0
    %2396 = vmatpush1.msra.mxu0 %v2361
    %2397 = vmatprep.subr.mxu0 0.0
    %2398 = vmatpush1.msra.mxu0 %v2360
    %2399 = vmatprep.subr.mxu0 0.0
    %2400 = vmatpush1.msra.mxu0 %v2359
    %2401 = vmatprep.subr.mxu0 0.0
    %2402 = vmatpush1.msra.mxu0 %v2358
    %2403 = vmatprep.subr.mxu0 0.0
    %2404 = vmatpush1.msra.mxu0 %v2357
    %2405 = vmatprep.subr.mxu0 0.0
    %2406 = vmatpush2.msra.mxu0 0.0
    %2407 = vmatprep.subr.mxu0 0.0
    %2408 = vmatpush2.msra.mxu0 0.0
    %2409 = vmatprep.subr.mxu0 0.0
    %2410 = vmatpush2.msra.mxu0 0.0
    %2411 = vmatprep.subr.mxu0 0.0
    %2412 = vmatpush2.msra.mxu0 0.0
    %2413 = vmatprep.subr.mxu0 0.0
    %2414 = vmatpush2.msra.mxu0 0.0
    %2415 = vmatprep.subr.mxu0 0.0
    %2416 = vmatpush2.msra.mxu0 0.0
    %2417 = vmatprep.subr.mxu0 0.0
    %2418 = vmatpush2.msra.mxu0 0.0
    %2419 = vmatprep.subr.mxu0 0.0
    %2420 = vmatpush2.msra.mxu0 0.0
    %2421 = vmatprep.subr.mxu0 0.0
    %2422 = vmatpush2.msra.mxu0 0.0
    %2423 = vmatprep.subr.mxu0 0.0
    %2424 = vmatpush2.msra.mxu0 0.0
    %2425 = vmatprep.subr.mxu0 0.0
    %2426 = vmatpush2.msra.mxu0 0.0
    %2427 = vmatprep.subr.mxu0 0.0
    %2428 = vmatpush2.msra.mxu0 0.0
    %2429 = vmatprep.subr.mxu0 0.0
    %2430 = vmatpush2.msra.mxu0 0.0
    %2431 = vmatprep.subr.mxu0 0.0
    %2432 = vmatpush2.msra.mxu0 0.0
    %2433 = vmatprep.subr.mxu0 0.0
    %2434 = vmatpush2.msra.mxu0 0.0
    %2435 = vmatprep.subr.mxu0 0.0
    %2436 = vmatpush2.msra.mxu0 0.0
    %2437 = vmatprep.mubr.f32.mxu0 0.0
    %2438 = vmatmul.mubr.f32.gmra.mxu0 %v2355
    %v2439 = vpop.f32.mrf.mxu0
    %v2440 = vadd.f32 0.0, %v2439
    %v2441 = vpop.f32.mrf.mxu0
    %2442 = vdwg.mxu0
    %2443 = vmatprep.subr.mxu0 0.0
    %2444 = vmatpush1.msra.mxu0 %v2353
    %2445 = vmatprep.subr.mxu0 0.0
    %2446 = vmatpush1.msra.mxu0 %v2352
    %2447 = vmatprep.subr.mxu0 0.0
    %2448 = vmatpush1.msra.mxu0 %v2351
    %2449 = vmatprep.subr.mxu0 0.0
    %2450 = vmatpush1.msra.mxu0 %v2350
    %2451 = vmatprep.subr.mxu0 0.0
    %2452 = vmatpush1.msra.mxu0 %v2349
    %2453 = vmatprep.subr.mxu0 0.0
    %2454 = vmatpush1.msra.mxu0 %v2348
    %2455 = vmatprep.subr.mxu0 0.0
    %2456 = vmatpush1.msra.mxu0 %v2347
    %2457 = vmatprep.subr.mxu0 0.0
    %2458 = vmatpush1.msra.mxu0 %v2346
    %2459 = vmatprep.subr.mxu0 0.0
    %2460 = vmatpush1.msra.mxu0 %v2345
    %2461 = vmatprep.subr.mxu0 0.0
    %2462 = vmatpush1.msra.mxu0 %v2344
    %2463 = vmatprep.subr.mxu0 0.0
    %2464 = vmatpush1.msra.mxu0 %v2343
    %2465 = vmatprep.subr.mxu0 0.0
    %2466 = vmatpush1.msra.mxu0 %v2342
    %2467 = vmatprep.subr.mxu0 0.0
    %2468 = vmatpush1.msra.mxu0 %v2341
    %2469 = vmatprep.subr.mxu0 0.0
    %2470 = vmatpush1.msra.mxu0 %v2340
    %2471 = vmatprep.subr.mxu0 0.0
    %2472 = vmatpush1.msra.mxu0 %v2339
    %2473 = vmatprep.subr.mxu0 0.0
    %2474 = vmatpush1.msra.mxu0 %v2338
    %2475 = vmatprep.subr.mxu0 0.0
    %2476 = vmatpush2.msra.mxu0 0.0
    %2477 = vmatprep.subr.mxu0 0.0
    %2478 = vmatpush2.msra.mxu0 0.0
    %2479 = vmatprep.subr.mxu0 0.0
    %2480 = vmatpush2.msra.mxu0 0.0
    %2481 = vmatprep.subr.mxu0 0.0
    %2482 = vmatpush2.msra.mxu0 0.0
    %2483 = vmatprep.subr.mxu0 0.0
    %2484 = vmatpush2.msra.mxu0 0.0
    %2485 = vmatprep.subr.mxu0 0.0
    %2486 = vmatpush2.msra.mxu0 0.0
    %2487 = vmatprep.subr.mxu0 0.0
    %2488 = vmatpush2.msra.mxu0 0.0
    %2489 = vmatprep.subr.mxu0 0.0
    %2490 = vmatpush2.msra.mxu0 0.0
    %2491 = vmatprep.subr.mxu0 0.0
    %2492 = vmatpush2.msra.mxu0 0.0
    %2493 = vmatprep.subr.mxu0 0.0
    %2494 = vmatpush2.msra.mxu0 0.0
    %2495 = vmatprep.subr.mxu0 0.0
    %2496 = vmatpush2.msra.mxu0 0.0
    %2497 = vmatprep.subr.mxu0 0.0
    %2498 = vmatpush2.msra.mxu0 0.0
    %2499 = vmatprep.subr.mxu0 0.0
    %2500 = vmatpush2.msra.mxu0 0.0
    %2501 = vmatprep.subr.mxu0 0.0
    %2502 = vmatpush2.msra.mxu0 0.0
    %2503 = vmatprep.subr.mxu0 0.0
    %2504 = vmatpush2.msra.mxu0 0.0
    %2505 = vmatprep.subr.mxu0 0.0
    %2506 = vmatpush2.msra.mxu0 0.0
    %2507 = vmatprep.mubr.f32.mxu0 0.0
    %2508 = vmatmul.mubr.f32.gmra.mxu0 %v2337
    %v2509 = vpop.f32.mrf.mxu0
    %v2510 = vadd.f32 %v2440, %v2509
    %v2511 = vpop.f32.mrf.mxu0
    %2512 = vdwg.mxu0
    %s2513 = scalar_lea.vmem [#allocation3], 2
    %v2514 = vld [vmem:[%s2513] ss:$5 sm:$0x3]
    %s2515 = scalar_lea.vmem %s5, 256
    %v2516 = vld [vmem:[%s2515] sm:$0xff]
    %v2517 = vld [vmem:[%s2515 + $0x8] sm:$0xff]
    %v2518 = vld [vmem:[%s2515 + $0x10] sm:$0xff]
    %v2519 = vld [vmem:[%s2515 + $0x18] sm:$0xff]
    %v2520 = vld [vmem:[%s2515 + $0x20] sm:$0xff]
    %v2521 = vld [vmem:[%s2515 + $0x28] sm:$0xff]
    %v2522 = vld [vmem:[%s2515 + $0x30] sm:$0xff]
    %v2523 = vld [vmem:[%s2515 + $0x38] sm:$0xff]
    %v2524 = vld [vmem:[%s2515 + $0x40] sm:$0xff]
    %v2525 = vld [vmem:[%s2515 + $0x48] sm:$0xff]
    %v2526 = vld [vmem:[%s2515 + $0x50] sm:$0xff]
    %v2527 = vld [vmem:[%s2515 + $0x58] sm:$0xff]
    %v2528 = vld [vmem:[%s2515 + $0x60] sm:$0xff]
    %v2529 = vld [vmem:[%s2515 + $0x68] sm:$0xff]
    %v2530 = vld [vmem:[%s2515 + $0x70] sm:$0xff]
    %v2531 = vld [vmem:[%s2515 + $0x78] sm:$0xff]
    %2532 = vmatprep.subr.mxu0 0.0
    %2533 = vmatpush1.msra.mxu0 %v2531
    %2534 = vmatprep.subr.mxu0 0.0
    %2535 = vmatpush1.msra.mxu0 %v2530
    %2536 = vmatprep.subr.mxu0 0.0
    %2537 = vmatpush1.msra.mxu0 %v2529
    %2538 = vmatprep.subr.mxu0 0.0
    %2539 = vmatpush1.msra.mxu0 %v2528
    %2540 = vmatprep.subr.mxu0 0.0
    %2541 = vmatpush1.msra.mxu0 %v2527
    %2542 = vmatprep.subr.mxu0 0.0
    %2543 = vmatpush1.msra.mxu0 %v2526
    %2544 = vmatprep.subr.mxu0 0.0
    %2545 = vmatpush1.msra.mxu0 %v2525
    %2546 = vmatprep.subr.mxu0 0.0
    %2547 = vmatpush1.msra.mxu0 %v2524
    %2548 = vmatprep.subr.mxu0 0.0
    %2549 = vmatpush1.msra.mxu0 %v2523
    %2550 = vmatprep.subr.mxu0 0.0
    %2551 = vmatpush1.msra.mxu0 %v2522
    %2552 = vmatprep.subr.mxu0 0.0
    %2553 = vmatpush1.msra.mxu0 %v2521
    %2554 = vmatprep.subr.mxu0 0.0
    %2555 = vmatpush1.msra.mxu0 %v2520
    %2556 = vmatprep.subr.mxu0 0.0
    %2557 = vmatpush1.msra.mxu0 %v2519
    %2558 = vmatprep.subr.mxu0 0.0
    %2559 = vmatpush1.msra.mxu0 %v2518
    %2560 = vmatprep.subr.mxu0 0.0
    %2561 = vmatpush1.msra.mxu0 %v2517
    %2562 = vmatprep.subr.mxu0 0.0
    %2563 = vmatpush1.msra.mxu0 %v2516
    %2564 = vmatprep.subr.mxu0 0.0
    %2565 = vmatpush2.msra.mxu0 0.0
    %2566 = vmatprep.subr.mxu0 0.0
    %2567 = vmatpush2.msra.mxu0 0.0
    %2568 = vmatprep.subr.mxu0 0.0
    %2569 = vmatpush2.msra.mxu0 0.0
    %2570 = vmatprep.subr.mxu0 0.0
    %2571 = vmatpush2.msra.mxu0 0.0
    %2572 = vmatprep.subr.mxu0 0.0
    %2573 = vmatpush2.msra.mxu0 0.0
    %2574 = vmatprep.subr.mxu0 0.0
    %2575 = vmatpush2.msra.mxu0 0.0
    %2576 = vmatprep.subr.mxu0 0.0
    %2577 = vmatpush2.msra.mxu0 0.0
    %2578 = vmatprep.subr.mxu0 0.0
    %2579 = vmatpush2.msra.mxu0 0.0
    %2580 = vmatprep.subr.mxu0 0.0
    %2581 = vmatpush2.msra.mxu0 0.0
    %2582 = vmatprep.subr.mxu0 0.0
    %2583 = vmatpush2.msra.mxu0 0.0
    %2584 = vmatprep.subr.mxu0 0.0
    %2585 = vmatpush2.msra.mxu0 0.0
    %2586 = vmatprep.subr.mxu0 0.0
    %2587 = vmatpush2.msra.mxu0 0.0
    %2588 = vmatprep.subr.mxu0 0.0
    %2589 = vmatpush2.msra.mxu0 0.0
    %2590 = vmatprep.subr.mxu0 0.0
    %2591 = vmatpush2.msra.mxu0 0.0
    %2592 = vmatprep.subr.mxu0 0.0
    %2593 = vmatpush2.msra.mxu0 0.0
    %2594 = vmatprep.subr.mxu0 0.0
    %2595 = vmatpush2.msra.mxu0 0.0
    %2596 = vmatprep.mubr.f32.mxu0 0.0
    %2597 = vmatmul.mubr.f32.gmra.mxu0 %v2514
    %v2598 = vpop.f32.mrf.mxu0
    %v2599 = vadd.f32 0.0, %v2598
    %v2600 = vpop.f32.mrf.mxu0
    %2601 = vdwg.mxu0
    %v2602 = vadd.f32 %v2510, %v2599
    %s2603 = scalar_lea.vmem [#allocation3], 3
    %v2604 = vld [vmem:[%s2603] ss:$5 sm:$0x3]
    %s2605 = scalar_lea.vmem %s5, 384
    %v2606 = vld [vmem:[%s2605] sm:$0xff]
    %v2607 = vld [vmem:[%s2605 + $0x8] sm:$0xff]
    %v2608 = vld [vmem:[%s2605 + $0x10] sm:$0xff]
    %v2609 = vld [vmem:[%s2605 + $0x18] sm:$0xff]
    %v2610 = vld [vmem:[%s2605 + $0x20] sm:$0xff]
    %v2611 = vld [vmem:[%s2605 + $0x28] sm:$0xff]
    %v2612 = vld [vmem:[%s2605 + $0x30] sm:$0xff]
    %v2613 = vld [vmem:[%s2605 + $0x38] sm:$0xff]
    %v2614 = vld [vmem:[%s2605 + $0x40] sm:$0xff]
    %v2615 = vld [vmem:[%s2605 + $0x48] sm:$0xff]
    %v2616 = vld [vmem:[%s2605 + $0x50] sm:$0xff]
    %v2617 = vld [vmem:[%s2605 + $0x58] sm:$0xff]
    %v2618 = vld [vmem:[%s2605 + $0x60] sm:$0xff]
    %v2619 = vld [vmem:[%s2605 + $0x68] sm:$0xff]
    %v2620 = vld [vmem:[%s2605 + $0x70] sm:$0xff]
    %v2621 = vld [vmem:[%s2605 + $0x78] sm:$0xff]
    %2622 = vmatprep.subr.mxu0 0.0
    %2623 = vmatpush1.msra.mxu0 %v2621
    %2624 = vmatprep.subr.mxu0 0.0
    %2625 = vmatpush1.msra.mxu0 %v2620
    %2626 = vmatprep.subr.mxu0 0.0
    %2627 = vmatpush1.msra.mxu0 %v2619
    %2628 = vmatprep.subr.mxu0 0.0
    %2629 = vmatpush1.msra.mxu0 %v2618
    %2630 = vmatprep.subr.mxu0 0.0
    %2631 = vmatpush1.msra.mxu0 %v2617
    %2632 = vmatprep.subr.mxu0 0.0
    %2633 = vmatpush1.msra.mxu0 %v2616
    %2634 = vmatprep.subr.mxu0 0.0
    %2635 = vmatpush1.msra.mxu0 %v2615
    %2636 = vmatprep.subr.mxu0 0.0
    %2637 = vmatpush1.msra.mxu0 %v2614
    %2638 = vmatprep.subr.mxu0 0.0
    %2639 = vmatpush1.msra.mxu0 %v2613
    %2640 = vmatprep.subr.mxu0 0.0
    %2641 = vmatpush1.msra.mxu0 %v2612
    %2642 = vmatprep.subr.mxu0 0.0
    %2643 = vmatpush1.msra.mxu0 %v2611
    %2644 = vmatprep.subr.mxu0 0.0
    %2645 = vmatpush1.msra.mxu0 %v2610
    %2646 = vmatprep.subr.mxu0 0.0
    %2647 = vmatpush1.msra.mxu0 %v2609
    %2648 = vmatprep.subr.mxu0 0.0
    %2649 = vmatpush1.msra.mxu0 %v2608
    %2650 = vmatprep.subr.mxu0 0.0
    %2651 = vmatpush1.msra.mxu0 %v2607
    %2652 = vmatprep.subr.mxu0 0.0
    %2653 = vmatpush1.msra.mxu0 %v2606
    %2654 = vmatprep.subr.mxu0 0.0
    %2655 = vmatpush2.msra.mxu0 0.0
    %2656 = vmatprep.subr.mxu0 0.0
    %2657 = vmatpush2.msra.mxu0 0.0
    %2658 = vmatprep.subr.mxu0 0.0
    %2659 = vmatpush2.msra.mxu0 0.0
    %2660 = vmatprep.subr.mxu0 0.0
    %2661 = vmatpush2.msra.mxu0 0.0
    %2662 = vmatprep.subr.mxu0 0.0
    %2663 = vmatpush2.msra.mxu0 0.0
    %2664 = vmatprep.subr.mxu0 0.0
    %2665 = vmatpush2.msra.mxu0 0.0
    %2666 = vmatprep.subr.mxu0 0.0
    %2667 = vmatpush2.msra.mxu0 0.0
    %2668 = vmatprep.subr.mxu0 0.0
    %2669 = vmatpush2.msra.mxu0 0.0
    %2670 = vmatprep.subr.mxu0 0.0
    %2671 = vmatpush2.msra.mxu0 0.0
    %2672 = vmatprep.subr.mxu0 0.0
    %2673 = vmatpush2.msra.mxu0 0.0
    %2674 = vmatprep.subr.mxu0 0.0
    %2675 = vmatpush2.msra.mxu0 0.0
    %2676 = vmatprep.subr.mxu0 0.0
    %2677 = vmatpush2.msra.mxu0 0.0
    %2678 = vmatprep.subr.mxu0 0.0
    %2679 = vmatpush2.msra.mxu0 0.0
    %2680 = vmatprep.subr.mxu0 0.0
    %2681 = vmatpush2.msra.mxu0 0.0
    %2682 = vmatprep.subr.mxu0 0.0
    %2683 = vmatpush2.msra.mxu0 0.0
    %2684 = vmatprep.subr.mxu0 0.0
    %2685 = vmatpush2.msra.mxu0 0.0
    %2686 = vmatprep.mubr.f32.mxu0 0.0
    %2687 = vmatmul.mubr.f32.gmra.mxu0 %v2604
    %v2688 = vpop.f32.mrf.mxu0
    %v2689 = vadd.f32 0.0, %v2688
    %v2690 = vpop.f32.mrf.mxu0
    %2691 = vdwg.mxu0
    %v2692 = vadd.f32 %v2602, %v2689
    %s2693 = scalar_lea.vmem [#allocation3], 4
    %v2694 = vld [vmem:[%s2693] ss:$5 sm:$0x3]
    %s2695 = scalar_lea.vmem %s5, 512
    %v2696 = vld [vmem:[%s2695] sm:$0xff]
    %v2697 = vld [vmem:[%s2695 + $0x8] sm:$0xff]
    %v2698 = vld [vmem:[%s2695 + $0x10] sm:$0xff]
    %v2699 = vld [vmem:[%s2695 + $0x18] sm:$0xff]
    %v2700 = vld [vmem:[%s2695 + $0x20] sm:$0xff]
    %v2701 = vld [vmem:[%s2695 + $0x28] sm:$0xff]
    %v2702 = vld [vmem:[%s2695 + $0x30] sm:$0xff]
    %v2703 = vld [vmem:[%s2695 + $0x38] sm:$0xff]
    %v2704 = vld [vmem:[%s2695 + $0x40] sm:$0xff]
    %v2705 = vld [vmem:[%s2695 + $0x48] sm:$0xff]
    %v2706 = vld [vmem:[%s2695 + $0x50] sm:$0xff]
    %v2707 = vld [vmem:[%s2695 + $0x58] sm:$0xff]
    %v2708 = vld [vmem:[%s2695 + $0x60] sm:$0xff]
    %v2709 = vld [vmem:[%s2695 + $0x68] sm:$0xff]
    %v2710 = vld [vmem:[%s2695 + $0x70] sm:$0xff]
    %v2711 = vld [vmem:[%s2695 + $0x78] sm:$0xff]
    %2712 = vmatprep.subr.mxu0 0.0
    %2713 = vmatpush1.msra.mxu0 %v2711
    %2714 = vmatprep.subr.mxu0 0.0
    %2715 = vmatpush1.msra.mxu0 %v2710
    %2716 = vmatprep.subr.mxu0 0.0
    %2717 = vmatpush1.msra.mxu0 %v2709
    %2718 = vmatprep.subr.mxu0 0.0
    %2719 = vmatpush1.msra.mxu0 %v2708
    %2720 = vmatprep.subr.mxu0 0.0
    %2721 = vmatpush1.msra.mxu0 %v2707
    %2722 = vmatprep.subr.mxu0 0.0
    %2723 = vmatpush1.msra.mxu0 %v2706
    %2724 = vmatprep.subr.mxu0 0.0
    %2725 = vmatpush1.msra.mxu0 %v2705
    %2726 = vmatprep.subr.mxu0 0.0
    %2727 = vmatpush1.msra.mxu0 %v2704
    %2728 = vmatprep.subr.mxu0 0.0
    %2729 = vmatpush1.msra.mxu0 %v2703
    %2730 = vmatprep.subr.mxu0 0.0
    %2731 = vmatpush1.msra.mxu0 %v2702
    %2732 = vmatprep.subr.mxu0 0.0
    %2733 = vmatpush1.msra.mxu0 %v2701
    %2734 = vmatprep.subr.mxu0 0.0
    %2735 = vmatpush1.msra.mxu0 %v2700
    %2736 = vmatprep.subr.mxu0 0.0
    %2737 = vmatpush1.msra.mxu0 %v2699
    %2738 = vmatprep.subr.mxu0 0.0
    %2739 = vmatpush1.msra.mxu0 %v2698
    %2740 = vmatprep.subr.mxu0 0.0
    %2741 = vmatpush1.msra.mxu0 %v2697
    %2742 = vmatprep.subr.mxu0 0.0
    %2743 = vmatpush1.msra.mxu0 %v2696
    %2744 = vmatprep.subr.mxu0 0.0
    %2745 = vmatpush2.msra.mxu0 0.0
    %2746 = vmatprep.subr.mxu0 0.0
    %2747 = vmatpush2.msra.mxu0 0.0
    %2748 = vmatprep.subr.mxu0 0.0
    %2749 = vmatpush2.msra.mxu0 0.0
    %2750 = vmatprep.subr.mxu0 0.0
    %2751 = vmatpush2.msra.mxu0 0.0
    %2752 = vmatprep.subr.mxu0 0.0
    %2753 = vmatpush2.msra.mxu0 0.0
    %2754 = vmatprep.subr.mxu0 0.0
    %2755 = vmatpush2.msra.mxu0 0.0
    %2756 = vmatprep.subr.mxu0 0.0
    %2757 = vmatpush2.msra.mxu0 0.0
    %2758 = vmatprep.subr.mxu0 0.0
    %2759 = vmatpush2.msra.mxu0 0.0
    %2760 = vmatprep.subr.mxu0 0.0
    %2761 = vmatpush2.msra.mxu0 0.0
    %2762 = vmatprep.subr.mxu0 0.0
    %2763 = vmatpush2.msra.mxu0 0.0
    %2764 = vmatprep.subr.mxu0 0.0
    %2765 = vmatpush2.msra.mxu0 0.0
    %2766 = vmatprep.subr.mxu0 0.0
    %2767 = vmatpush2.msra.mxu0 0.0
    %2768 = vmatprep.subr.mxu0 0.0
    %2769 = vmatpush2.msra.mxu0 0.0
    %2770 = vmatprep.subr.mxu0 0.0
    %2771 = vmatpush2.msra.mxu0 0.0
    %2772 = vmatprep.subr.mxu0 0.0
    %2773 = vmatpush2.msra.mxu0 0.0
    %2774 = vmatprep.subr.mxu0 0.0
    %2775 = vmatpush2.msra.mxu0 0.0
    %2776 = vmatprep.mubr.f32.mxu0 0.0
    %2777 = vmatmul.mubr.f32.gmra.mxu0 %v2694
    %v2778 = vpop.f32.mrf.mxu0
    %v2779 = vadd.f32 0.0, %v2778
    %v2780 = vpop.f32.mrf.mxu0
    %2781 = vdwg.mxu0
    %v2782 = vadd.f32 %v2692, %v2779
    %v2783 = vld [vmem:[%s6] sm:$0x1]
    %v2785 = vlaneseq
    %v2786 = vshrl.u32 %v2785, 7
    %v2787 = vsub.s32 0, %v2786
    %v2788 = vrot.slane %v2783, %v2787
    %v2790 = vadd.f32 %v2782, %v2788
    %v2791 = vtanh.pop %v2790
    %v2792 = vld [vmem:[%s7] sm:$0xff]
    %v2793 = vld [vmem:[%s7 + $0x8] sm:$0xff]
    %v2794 = vld [vmem:[%s7 + $0x10] sm:$0xff]
    %v2795 = vld [vmem:[%s7 + $0x18] sm:$0xff]
    %v2796 = vld [vmem:[%s7 + $0x20] sm:$0xff]
    %v2797 = vld [vmem:[%s7 + $0x28] sm:$0xff]
    %v2798 = vld [vmem:[%s7 + $0x30] sm:$0xff]
    %v2799 = vld [vmem:[%s7 + $0x38] sm:$0xff]
    %v2800 = vld [vmem:[%s7 + $0x40] sm:$0xff]
    %v2801 = vld [vmem:[%s7 + $0x48] sm:$0xff]
    %v2802 = vld [vmem:[%s7 + $0x50] sm:$0xff]
    %v2803 = vld [vmem:[%s7 + $0x58] sm:$0xff]
    %v2804 = vld [vmem:[%s7 + $0x60] sm:$0xff]
    %v2805 = vld [vmem:[%s7 + $0x68] sm:$0xff]
    %v2806 = vld [vmem:[%s7 + $0x70] sm:$0xff]
    %v2807 = vld [vmem:[%s8] sm:$0x1]
    %v2809 = vlaneseq
    %v2810 = vshrl.u32 %v2809, 7
    %v2811 = vsub.s32 0, %v2810
    %v2812 = vrot.slane %v2807, %v2811
    %vm2814 = vcmask 982016
    %v2816 = vsel %vm2814, %v2791, 0
    %2818 = vmatprep.subr.mxu0 0.0
    %2819 = vmatpush1.msra.mxu0 0.0
    %2820 = vmatprep.subr.mxu0 0.0
    %2821 = vmatpush1.msra.mxu0 %v2806
    %2822 = vmatprep.subr.mxu0 0.0
    %2823 = vmatpush1.msra.mxu0 %v2805
    %2824 = vmatprep.subr.mxu0 0.0
    %2825 = vmatpush1.msra.mxu0 %v2804
    %2826 = vmatprep.subr.mxu0 0.0
    %2827 = vmatpush1.msra.mxu0 %v2803
    %2828 = vmatprep.subr.mxu0 0.0
    %2829 = vmatpush1.msra.mxu0 %v2802
    %2830 = vmatprep.subr.mxu0 0.0
    %2831 = vmatpush1.msra.mxu0 %v2801
    %2832 = vmatprep.subr.mxu0 0.0
    %2833 = vmatpush1.msra.mxu0 %v2800
    %2834 = vmatprep.subr.mxu0 0.0
    %2835 = vmatpush1.msra.mxu0 %v2799
    %2836 = vmatprep.subr.mxu0 0.0
    %2837 = vmatpush1.msra.mxu0 %v2798
    %2838 = vmatprep.subr.mxu0 0.0
    %2839 = vmatpush1.msra.mxu0 %v2797
    %2840 = vmatprep.subr.mxu0 0.0
    %2841 = vmatpush1.msra.mxu0 %v2796
    %2842 = vmatprep.subr.mxu0 0.0
    %2843 = vmatpush1.msra.mxu0 %v2795
    %2844 = vmatprep.subr.mxu0 0.0
    %2845 = vmatpush1.msra.mxu0 %v2794
    %2846 = vmatprep.subr.mxu0 0.0
    %2847 = vmatpush1.msra.mxu0 %v2793
    %2848 = vmatprep.subr.mxu0 0.0
    %2849 = vmatpush1.msra.mxu0 %v2792
    %2850 = vmatprep.subr.mxu0 0.0
    %2851 = vmatpush2.msra.mxu0 0.0
    %2852 = vmatprep.subr.mxu0 0.0
    %2853 = vmatpush2.msra.mxu0 0.0
    %2854 = vmatprep.subr.mxu0 0.0
    %2855 = vmatpush2.msra.mxu0 0.0
    %2856 = vmatprep.subr.mxu0 0.0
    %2857 = vmatpush2.msra.mxu0 0.0
    %2858 = vmatprep.subr.mxu0 0.0
    %2859 = vmatpush2.msra.mxu0 0.0
    %2860 = vmatprep.subr.mxu0 0.0
    %2861 = vmatpush2.msra.mxu0 0.0
    %2862 = vmatprep.subr.mxu0 0.0
    %2863 = vmatpush2.msra.mxu0 0.0
    %2864 = vmatprep.subr.mxu0 0.0
    %2865 = vmatpush2.msra.mxu0 0.0
    %2866 = vmatprep.subr.mxu0 0.0
    %2867 = vmatpush2.msra.mxu0 0.0
    %2868 = vmatprep.subr.mxu0 0.0
    %2869 = vmatpush2.msra.mxu0 0.0
    %2870 = vmatprep.subr.mxu0 0.0
    %2871 = vmatpush2.msra.mxu0 0.0
    %2872 = vmatprep.subr.mxu0 0.0
    %2873 = vmatpush2.msra.mxu0 0.0
    %2874 = vmatprep.subr.mxu0 0.0
    %2875 = vmatpush2.msra.mxu0 0.0
    %2876 = vmatprep.subr.mxu0 0.0
    %2877 = vmatpush2.msra.mxu0 0.0
    %2878 = vmatprep.subr.mxu0 0.0
    %2879 = vmatpush2.msra.mxu0 0.0
    %2880 = vmatprep.subr.mxu0 0.0
    %2881 = vmatpush2.msra.mxu0 0.0
    %2882 = vmatprep.mubr.f32.mxu0 0.0
    %2883 = vmatmul.mubr.f32.gmra.mxu0 %v2816
    %v2884 = vpop.f32.mrf.mxu0
    %v2885 = vadd.f32 %v2812, %v2884
    %v2886 = vpop.f32.mrf.mxu0
    %2887 = vdwg.mxu0
    %v2888 = vtanh.pop %v2885
    %v2889 = vld [vmem:[%s9] sm:$0xff]
    %v2890 = vld [vmem:[%s9 + $0x8] sm:$0xff]
    %v2891 = vld [vmem:[%s9 + $0x10] sm:$0xff]
    %v2892 = vld [vmem:[%s9 + $0x18] sm:$0xff]
    %v2893 = vld [vmem:[%s9 + $0x20] sm:$0xff]
    %v2894 = vld [vmem:[%s9 + $0x28] sm:$0xff]
    %v2895 = vld [vmem:[%s9 + $0x30] sm:$0xff]
    %v2896 = vld [vmem:[%s9 + $0x38] sm:$0xff]
    %v2897 = vld [vmem:[%s9 + $0x40] sm:$0xff]
    %v2898 = vld [vmem:[%s9 + $0x48] sm:$0xff]
    %v2899 = vld [vmem:[%s9 + $0x50] sm:$0xf]
    %v2900 = vld [vmem:[%s10] sm:$0x1]
    %v2902 = vlaneseq
    %v2903 = vshrl.u32 %v2902, 7
    %v2904 = vsub.s32 0, %v2903
    %v2905 = vrot.slane %v2900, %v2904
    %vm2907 = vcmask 687104
    %v2909 = vsel %vm2907, %v2888, 0
    %vm2911 = vcmask 1043456
    %v2913 = vsel %vm2911, %v2899, 0
    %2915 = vmatprep.subr.mxu0 0.0
    %2916 = vmatpush1.msra.mxu0 0.0
    %2917 = vmatprep.subr.mxu0 0.0
    %2918 = vmatpush1.msra.mxu0 0.0
    %2919 = vmatprep.subr.mxu0 0.0
    %2920 = vmatpush1.msra.mxu0 0.0
    %2921 = vmatprep.subr.mxu0 0.0
    %2922 = vmatpush1.msra.mxu0 0.0
    %2923 = vmatprep.subr.mxu0 0.0
    %2924 = vmatpush1.msra.mxu0 0.0
    %2925 = vmatprep.subr.mxu0 0.0
    %2926 = vmatpush1.msra.mxu0 %v2913
    %2927 = vmatprep.subr.mxu0 0.0
    %2928 = vmatpush1.msra.mxu0 %v2898
    %2929 = vmatprep.subr.mxu0 0.0
    %2930 = vmatpush1.msra.mxu0 %v2897
    %2931 = vmatprep.subr.mxu0 0.0
    %2932 = vmatpush1.msra.mxu0 %v2896
    %2933 = vmatprep.subr.mxu0 0.0
    %2934 = vmatpush1.msra.mxu0 %v2895
    %2935 = vmatprep.subr.mxu0 0.0
    %2936 = vmatpush1.msra.mxu0 %v2894
    %2937 = vmatprep.subr.mxu0 0.0
    %2938 = vmatpush1.msra.mxu0 %v2893
    %2939 = vmatprep.subr.mxu0 0.0
    %2940 = vmatpush1.msra.mxu0 %v2892
    %2941 = vmatprep.subr.mxu0 0.0
    %2942 = vmatpush1.msra.mxu0 %v2891
    %2943 = vmatprep.subr.mxu0 0.0
    %2944 = vmatpush1.msra.mxu0 %v2890
    %2945 = vmatprep.subr.mxu0 0.0
    %2946 = vmatpush1.msra.mxu0 %v2889
    %2947 = vmatprep.subr.mxu0 0.0
    %2948 = vmatpush2.msra.mxu0 0.0
    %2949 = vmatprep.subr.mxu0 0.0
    %2950 = vmatpush2.msra.mxu0 0.0
    %2951 = vmatprep.subr.mxu0 0.0
    %2952 = vmatpush2.msra.mxu0 0.0
    %2953 = vmatprep.subr.mxu0 0.0
    %2954 = vmatpush2.msra.mxu0 0.0
    %2955 = vmatprep.subr.mxu0 0.0
    %2956 = vmatpush2.msra.mxu0 0.0
    %2957 = vmatprep.subr.mxu0 0.0
    %2958 = vmatpush2.msra.mxu0 0.0
    %2959 = vmatprep.subr.mxu0 0.0
    %2960 = vmatpush2.msra.mxu0 0.0
    %2961 = vmatprep.subr.mxu0 0.0
    %2962 = vmatpush2.msra.mxu0 0.0
    %2963 = vmatprep.subr.mxu0 0.0
    %2964 = vmatpush2.msra.mxu0 0.0
    %2965 = vmatprep.subr.mxu0 0.0
    %2966 = vmatpush2.msra.mxu0 0.0
    %2967 = vmatprep.subr.mxu0 0.0
    %2968 = vmatpush2.msra.mxu0 0.0
    %2969 = vmatprep.subr.mxu0 0.0
    %2970 = vmatpush2.msra.mxu0 0.0
    %2971 = vmatprep.subr.mxu0 0.0
    %2972 = vmatpush2.msra.mxu0 0.0
    %2973 = vmatprep.subr.mxu0 0.0
    %2974 = vmatpush2.msra.mxu0 0.0
    %2975 = vmatprep.subr.mxu0 0.0
    %2976 = vmatpush2.msra.mxu0 0.0
    %2977 = vmatprep.subr.mxu0 0.0
    %2978 = vmatpush2.msra.mxu0 0.0
    %2979 = vmatprep.mubr.f32.mxu0 0.0
    %2980 = vmatmul.mubr.f32.gmra.mxu0 %v2909
    %v2981 = vpop.f32.mrf.mxu0
    %v2982 = vadd.f32 %v2905, %v2981
    %v2983 = vpop.f32.mrf.mxu0
    %2984 = vdwg.mxu0
    %vm2985 = vcmask 74752
    %2986 = vst.msk [vmem:[#allocation4] sm:$0x3] %vm2985, %v2982
    // Predicated region
    $region46: #{lenet5_forward.1} parent=1 // pred_check
      _
    $region47: #{lenet5_forward.1} parent=1 // pred_check_branch
      %2988 = sbr.rel (0) target = $region49
    $region48: #{lenet5_forward.1} parent=1 // pred_region
      %s2990 = ssub.s32 32, 32
      %2991 = vsyncadd [#allocation5], %s2990
      %s2993 = sshll.u32 [#allocation4], 4
      %s2994 = int_to_ptr.vmem [resolvable:$true] %s2993
      %2996 = dma.vmem_to_hbm [thread:$0]  %s2994, 32, %s11, [#allocation5]
    $region49: #{lenet5_forward.1} parent=1 // pred_fallthru
      _
    // Predicated region
    $region50: #{lenet5_forward.1} parent=1 // pred_check
      _
    $region51: #{lenet5_forward.1} parent=1 // pred_check_branch
      %2998 = sbr.rel (0) target = $region53
    $region52: #{lenet5_forward.1} parent=1 // pred_region
      %2999 = dma.done [#allocation5], 32
    $region53: #{lenet5_forward.1} parent=1 // pred_fallthru
      _
    %3000 = vsyncpa [#allocation5], 1

</llo_original>
